<compile_context>
chip_gen: v7x
topology: tpu7x:2x2x1
jax: 0.10.0
libtpu: 0.0.40
codegen_flags: <defaults>
</compile_context>

<pallas_src>
import jax
import jax.numpy as jnp
from jax import lax
from jax.experimental import pallas as pl
from jax.experimental.pallas import tpu as pltpu


# ----------------------------- helpers ------------------------------------ #

def _round_up(x, m):
    return (x + m - 1) // m * m


def _pad2d(a, rows, cols):
    return jnp.pad(a, ((0, rows - a.shape[0]), (0, cols - a.shape[1])))


def _pad_gate_cols(w, H, H_pad, in_dim_pad):
    """(in_dim, 4H) -> (in_dim_pad, 4*H_pad), padding each i/f/g/o block."""
    in_dim = w.shape[0]
    w4 = w.reshape(in_dim, 4, H)
    w4 = jnp.pad(w4, ((0, in_dim_pad - in_dim), (0, 0), (0, H_pad - H)))
    return w4.reshape(in_dim_pad, 4 * H_pad)


def _pad_gate_bias(b, H, H_pad):
    """(1, 4H) -> (1, 4*H_pad)."""
    b4 = b.reshape(4, H)
    b4 = jnp.pad(b4, ((0, 0), (0, H_pad - H)))
    return b4.reshape(1, 4 * H_pad)


def _vmem_limit(bytes_needed):
    # >= 32 MiB (lifts v5e's 16 MiB scoped default), <= 64 MiB (v7x physical).
    return int(min(64 * 1024 * 1024, max(32 * 1024 * 1024, 2 * bytes_needed)))


# --------------------------- Pallas kernels -------------------------------- #

def _make_lstm_chunk_kernel(s_chunk, b_pad, h_pad, seq_real, unroll):
    """Seq-chunked LSTM recurrence kernel (one grid step = one seq chunk).

    Refs:
      x_ref:   (s_chunk*b_pad, E_pad)   bf16  time-major embed rows (t-major)
      wih_ref: (E_pad, 4*h_pad)         bf16
      whh_ref: (h_pad, 4*h_pad)         bf16
      b_ref:   (1, 4*h_pad)             f32   b_ih + b_hh
      h0/c0:   (b_pad, h_pad)           f32   initial state
      hall:    (s_chunk*b_pad, h_pad)   bf16  chunk's hidden states (output)
      h_out/c_out: (b_pad, h_pad)       f32   carry (resident across chunks)
      gates_sc: (s_chunk*b_pad, 4*h_pad) f32  scratch (hoisted input gates)
      hacc_sc:  (s_chunk*b_pad, h_pad)   f32  scratch (chunk hidden states)
    """
    needs_mask = (seq_real % s_chunk) != 0
    Hp = h_pad

    def kernel(x_ref, wih_ref, whh_ref, b_ref, h0_ref, c0_ref,
               hall_ref, h_out_ref, c_out_ref, gates_sc, hacc_sc):
        s = pl.program_id(0)

        @pl.when(s == 0)
        def _init():
            h_out_ref[...] = h0_ref[...]
            c_out_ref[...] = c0_ref[...]

        # Hoisted input projection: one chunk-level MXU GEMM (+bias).
        gates_sc[...] = (
            jnp.dot(x_ref[...], wih_ref[...], preferred_element_type=jnp.float32)
            + b_ref[...])

        def step(t, carry):
            h_prev, c_prev = carry                       # f32 (b_pad, h_pad)
            row0 = pl.multiple_of(t * b_pad, b_pad)      # sublane-aligned
            g = gates_sc[pl.ds(row0, b_pad), :] + jnp.dot(
                h_prev.astype(jnp.bfloat16), whh_ref[...],
                preferred_element_type=jnp.float32)      # f32 (b_pad, 4*h_pad)

            # PyTorch nn.LSTM gate order: i, f, g, o (lane-aligned, width h_pad)
            i_g = jax.nn.sigmoid(g[:, 0 * Hp:1 * Hp])
            f_g = jax.nn.sigmoid(g[:, 1 * Hp:2 * Hp])
            g_g = jnp.tanh(g[:, 2 * Hp:3 * Hp])
            o_g = jax.nn.sigmoid(g[:, 3 * Hp:4 * Hp])

            c_new = f_g * c_prev + i_g * g_g
            h_new = o_g * jnp.tanh(c_new)

            if needs_mask:
                # Padded time steps (seq not a multiple of s_chunk) must not
                # advance the carry; their h_all rows are sliced off later.
                valid = (s * s_chunk + t) < seq_real
                h_new = jnp.where(valid, h_new, h_prev)
                c_new = jnp.where(valid, c_new, c_prev)

            hacc_sc[pl.ds(row0, b_pad), :] = h_new       # aligned f32 store
            return (h_new, c_new)

        h_fin, c_fin = lax.fori_loop(0, s_chunk, step,
                                     (h_out_ref[...], c_out_ref[...]),
                                     unroll=unroll)

        # One unmasked, lane-dense bf16 store of the whole chunk.
        hall_ref[...] = hacc_sc[...].astype(hall_ref.dtype)
        h_out_ref[...] = h_fin
        c_out_ref[...] = c_fin

    return kernel


def _dense_kernel(h_ref, wd_ref, bd_ref, out_ref):
    """Deferred vocab projection tile: (M_TILE, H_pad) @ (H_pad, V_TILE) + b."""
    out_ref[...] = (jnp.dot(h_ref[...], wd_ref[...],
                            preferred_element_type=jnp.float32)
                    + bd_ref[...]).astype(out_ref.dtype)


# ------------------------------ wrapper ------------------------------------ #

def recurrent_network_forward(x_ids, prev_state, params):
    """x_ids: (batch, seq) int32.  prev_state: (h0, c0) each (1, batch, H)."""
    emb_table = params["embedding"]          # (Vocab, E)  f32
    w_ih = params["w_ih"]                    # (E, 4H)     f32 (pre-transposed)
    w_hh = params["w_hh"]                    # (H, 4H)     f32
    b = params["b"]                          # (1, 4H)     f32 (b_ih + b_hh)
    w_d = params["w_d"]                      # (H, V)      f32 (pre-transposed)
    b_d = params["b_d"]                      # (1, V)      f32

    batch, seq = x_ids.shape
    E = emb_table.shape[1]
    H = w_hh.shape[0]
    V = w_d.shape[1]

    # ---- lane/sublane padding + chunking targets ----
    B_pad = _round_up(batch, 8)
    E_pad = _round_up(E, 128)
    H_pad = _round_up(H, 128)

    S_CHUNK = min(seq, 16)
    seq_pad = _round_up(seq, S_CHUNK)
    n_chunks = seq_pad // S_CHUNK
    rows_per_chunk = S_CHUNK * B_pad
    unroll = S_CHUNK if S_CHUNK <= 8 else 4

    # ---- weights: padded (zero padding is semantically inert), bf16 for MXU ----
    emb_p = _pad2d(emb_table, emb_table.shape[0], E_pad).astype(jnp.bfloat16)
    w_ih_p = _pad_gate_cols(w_ih, H, H_pad, E_pad).astype(jnp.bfloat16)
    w_hh_p = _pad_gate_cols(w_hh, H, H_pad, H_pad).astype(jnp.bfloat16)
    b_p = _pad_gate_bias(b, H, H_pad)                       # f32

    # ---- embedding gather: bf16, time-major, flattened to (t*b, E_pad) rows ----
    # TODO(synk): the gather itself stays in XLA (jnp.take); a manual Pallas DMA
    # gather only pays off at much larger vocab/seq.
    embed = jnp.take(emb_p, x_ids.T, axis=0)                # (seq, batch, E_pad) bf16
    embed = jnp.pad(embed, ((0, seq_pad - seq), (0, B_pad - batch), (0, 0)))
    embed2d = embed.reshape(seq_pad * B_pad, E_pad)

    h0 = jnp.pad(prev_state[0][0], ((0, B_pad - batch), (0, H_pad - H)))
    c0 = jnp.pad(prev_state[1][0], ((0, B_pad - batch), (0, H_pad - H)))

    # ---- phase 1: seq-chunked recurrence (pipelined chunks, resident carry) ----
    p1_bytes = (w_ih_p.size * 2 + w_hh_p.size * 2 + b_p.size * 4
                + 2 * rows_per_chunk * E_pad * 2            # embed chunk x2 bufs
                + 2 * rows_per_chunk * H_pad * 2            # h_all chunk x2 bufs
                + 4 * B_pad * H_pad * 4                     # h0,c0,h_out,c_out
                + rows_per_chunk * 4 * H_pad * 4            # gates scratch
                + rows_per_chunk * H_pad * 4)               # h chunk scratch

    h_all, h_n, c_n = pl.pallas_call(
        _make_lstm_chunk_kernel(S_CHUNK, B_pad, H_pad, seq, unroll),
        out_shape=(
            jax.ShapeDtypeStruct((seq_pad * B_pad, H_pad), jnp.bfloat16),
            jax.ShapeDtypeStruct((B_pad, H_pad), jnp.float32),
            jax.ShapeDtypeStruct((B_pad, H_pad), jnp.float32),
        ),
        grid_spec=pltpu.PrefetchScalarGridSpec(
            num_scalar_prefetch=0,
            grid=(n_chunks,),
            in_specs=[
                pl.BlockSpec((rows_per_chunk, E_pad), lambda s: (s, 0)),  # embeds
                pl.BlockSpec((E_pad, 4 * H_pad), lambda s: (0, 0)),       # W_ih
                pl.BlockSpec((H_pad, 4 * H_pad), lambda s: (0, 0)),       # W_hh
                pl.BlockSpec((1, 4 * H_pad), lambda s: (0, 0)),           # bias
                pl.BlockSpec((B_pad, H_pad), lambda s: (0, 0)),           # h0
                pl.BlockSpec((B_pad, H_pad), lambda s: (0, 0)),           # c0
            ],
            out_specs=[
                pl.BlockSpec((rows_per_chunk, H_pad), lambda s: (s, 0)),  # h_all
                pl.BlockSpec((B_pad, H_pad), lambda s: (0, 0)),           # h_n (resident)
                pl.BlockSpec((B_pad, H_pad), lambda s: (0, 0)),           # c_n (resident)
            ],
            scratch_shapes=[
                pltpu.VMEM((rows_per_chunk, 4 * H_pad), jnp.float32),     # gates_x chunk
                pltpu.VMEM((rows_per_chunk, H_pad), jnp.float32),         # h chunk acc
            ]),
        compiler_params=pltpu.CompilerParams(
            dimension_semantics=("arbitrary",),
            vmem_limit_bytes=_vmem_limit(p1_bytes)),
    )(embed2d, w_ih_p, w_hh_p, b_p, h0, c0)

    # ---- reorder the (small) hidden slab to batch-major BEFORE projecting ----
    h_bm = (h_all.reshape(seq_pad, B_pad, H_pad)[:seq, :batch]
            .transpose(1, 0, 2)                             # (batch, seq, H_pad) bf16
            .reshape(batch * seq, H_pad))

    M = batch * seq
    M_TILE = min(512, _round_up(M, 8))
    M_pad = _round_up(M, M_TILE)
    V_TILE = min(512, _round_up(V, 128))
    V_pad = _round_up(V, V_TILE)                            # padded UP to the tile
    n_m = M_pad // M_TILE
    n_v = V_pad // V_TILE

    h_bm = jnp.pad(h_bm, ((0, M_pad - M), (0, 0)))
    w_d_p = _pad2d(w_d, H_pad, V_pad).astype(jnp.bfloat16)
    b_d_p = _pad2d(b_d, 1, V_pad)                           # f32

    p2_bytes = (2 * M_TILE * H_pad * 2 + 2 * H_pad * V_TILE * 2
                + 2 * V_TILE * 4 + 2 * M_TILE * V_TILE * 4)

    # ---- phase 2: lane-dense vocab projection tiled over (M, V), both parallel ----
    logits_flat = pl.pallas_call(
        _dense_kernel,
        out_shape=jax.ShapeDtypeStruct((M_pad, V_pad), jnp.float32),
        grid=(n_m, n_v),
        in_specs=[
            pl.BlockSpec((M_TILE, H_pad), lambda i, j: (i, 0)),   # activations tile
            pl.BlockSpec((H_pad, V_TILE), lambda i, j: (0, j)),   # W_d tile
            pl.BlockSpec((1, V_TILE), lambda i, j: (0, j)),       # b_d tile
        ],
        out_specs=pl.BlockSpec((M_TILE, V_TILE), lambda i, j: (i, j)),
        compiler_params=pltpu.CompilerParams(
            dimension_semantics=("parallel", "parallel"),
            vmem_limit_bytes=_vmem_limit(p2_bytes)),
    )(h_bm, w_d_p, b_d_p)

    # ---- unpad: rows are already batch-major, so no logits transpose needed ----
    logits = logits_flat[:M].reshape(batch, seq, V_pad)[:, :, :V]

    h_n = h_n[:batch, :H][None, ...]                         # (1, batch, H)
    c_n = c_n[:batch, :H][None, ...]
    return logits, (h_n, c_n)


# --------------------------- params / demo ---------------------------------- #

def init_params(key, n_vocab, embedding_size, lstm_size):
    ks = jax.random.split(key, 7)
    scale_l = 1.0 / jnp.sqrt(lstm_size)
    emb = jax.random.normal(ks[0], (n_vocab, embedding_size), jnp.float32)
    # PyTorch stores weight_ih as (4H, E); we pre-transpose to (E, 4H). Gate order: i, f, g, o.
    w_ih = jax.random.uniform(ks[1], (embedding_size, 4 * lstm_size), jnp.float32,
                              -scale_l, scale_l)
    w_hh = jax.random.uniform(ks[2], (lstm_size, 4 * lstm_size), jnp.float32,
                              -scale_l, scale_l)
    b_ih = jax.random.uniform(ks[3], (4 * lstm_size,), jnp.float32, -scale_l, scale_l)
    b_hh = jax.random.uniform(ks[4], (4 * lstm_size,), jnp.float32, -scale_l, scale_l)
    w_d = jax.random.uniform(ks[5], (lstm_size, n_vocab), jnp.float32, -scale_l, scale_l)
    b_d = jax.random.uniform(ks[6], (n_vocab,), jnp.float32, -scale_l, scale_l)
    return {
        "embedding": emb,
        "w_ih": w_ih,
        "w_hh": w_hh,
        "b": (b_ih + b_hh)[None, :],
        "w_d": w_d,
        "b_d": b_d[None, :],
    }


if __name__ == "__main__":
    n_vocab, seq_size, embedding_size, lstm_size = 64, 8, 32, 32
    batch = 2

    key = jax.random.PRNGKey(0)
    pkey, xkey = jax.random.split(key)
    params = init_params(pkey, n_vocab, embedding_size, lstm_size)

    x = jax.random.randint(xkey, (batch, seq_size), 0, n_vocab, dtype=jnp.int32)
    # zero_state(batch_size)
    prev_state = (jnp.zeros((1, batch, lstm_size), jnp.float32),
                  jnp.zeros((1, batch, lstm_size), jnp.float32))

    fwd = jax.jit(recurrent_network_forward)
    logits, (h_n, c_n) = fwd(x, prev_state, params)
    jax.block_until_ready(logits)
    jax.block_until_ready(h_n)
    jax.block_until_ready(c_n)

    assert logits.shape == (batch, seq_size, n_vocab)
    assert h_n.shape == (1, batch, lstm_size) and c_n.shape == (1, batch, lstm_size)
    print("KERNEL_OK")
</pallas_src>

<mosaic_0001>
module attributes {stable_mosaic.version = 11 : i64} {
  func.func @kernel(%arg0: i32, %arg1: memref<64x128xbf16, #tpu.memory_space<vmem>>, %arg2: memref<128x512xbf16, #tpu.memory_space<vmem>>, %arg3: memref<128x512xbf16, #tpu.memory_space<vmem>>, %arg4: memref<1x512xf32, #tpu.memory_space<vmem>>, %arg5: memref<8x128xf32, #tpu.memory_space<vmem>>, %arg6: memref<8x128xf32, #tpu.memory_space<vmem>>, %arg7: memref<64x128xbf16, #tpu.memory_space<vmem>>, %arg8: memref<8x128xf32, #tpu.memory_space<vmem>>, %arg9: memref<8x128xf32, #tpu.memory_space<vmem>>, %arg10: memref<64x512xf32, #tpu.memory_space<vmem>>, %arg11: memref<64x128xf32, #tpu.memory_space<vmem>>) attributes {dimension_semantics = [#tpu.dimension_semantics<arbitrary>], iteration_bounds = array<i64: 1>, scalar_prefetch = 0 : i64, scratch_operands = 2 : i64, tpu.core_type = #tpu.core_type<tc>, window_params = [{transform_indices = @transform_0, window_bounds = array<i64: 64, 128>}, {pipeline_mode = #tpu.pipeline_mode<synchronous>, transform_indices = @transform_1, window_bounds = array<i64: 128, 512>}, {pipeline_mode = #tpu.pipeline_mode<synchronous>, transform_indices = @transform_2, window_bounds = array<i64: 128, 512>}, {pipeline_mode = #tpu.pipeline_mode<synchronous>, transform_indices = @transform_3, window_bounds = array<i64: 1, 512>}, {pipeline_mode = #tpu.pipeline_mode<synchronous>, transform_indices = @transform_4, window_bounds = array<i64: 8, 128>}, {pipeline_mode = #tpu.pipeline_mode<synchronous>, transform_indices = @transform_5, window_bounds = array<i64: 8, 128>}, {transform_indices = @transform_6, window_bounds = array<i64: 64, 128>}, {pipeline_mode = #tpu.pipeline_mode<synchronous>, transform_indices = @transform_7, window_bounds = array<i64: 8, 128>}, {pipeline_mode = #tpu.pipeline_mode<synchronous>, transform_indices = @transform_8, window_bounds = array<i64: 8, 128>}]} {
    %c0_i32 = arith.constant 0 : i32
    %0 = arith.cmpi eq, %arg0, %c0_i32 : i32
    %1 = arith.extui %0 : i1 to i32
    %c0_i32_0 = arith.constant 0 : i32
    %2 = arith.cmpi ne, %1, %c0_i32_0 : i32
    scf.if %2 {
      %c0_93 = arith.constant 0 : index
      %c0_94 = arith.constant 0 : index
      %297 = vector.load %arg5[%c0_93, %c0_94] : memref<8x128xf32, #tpu.memory_space<vmem>>, vector<8x128xf32>
      %c0_95 = arith.constant 0 : index
      %c0_96 = arith.constant 0 : index
      %298 = vector.load %arg8[%c0_95, %c0_96] : memref<8x128xf32, #tpu.memory_space<vmem>>, vector<8x128xf32>
      tpu.vector_store %arg8[%c0_95, %c0_96], %297 {strides = array<i32>} : memref<8x128xf32, #tpu.memory_space<vmem>>, vector<8x128xf32>,
      %c0_97 = arith.constant 0 : index
      %c0_98 = arith.constant 0 : index
      %299 = vector.load %arg6[%c0_97, %c0_98] : memref<8x128xf32, #tpu.memory_space<vmem>>, vector<8x128xf32>
      %c0_99 = arith.constant 0 : index
      %c0_100 = arith.constant 0 : index
      %300 = vector.load %arg9[%c0_99, %c0_100] : memref<8x128xf32, #tpu.memory_space<vmem>>, vector<8x128xf32>
      tpu.vector_store %arg9[%c0_99, %c0_100], %299 {strides = array<i32>} : memref<8x128xf32, #tpu.memory_space<vmem>>, vector<8x128xf32>,
    } else {
    }
    %c0 = arith.constant 0 : index
    %c0_1 = arith.constant 0 : index
    %3 = vector.load %arg1[%c0, %c0_1] : memref<64x128xbf16, #tpu.memory_space<vmem>>, vector<64x128xbf16>
    %c0_2 = arith.constant 0 : index
    %c0_3 = arith.constant 0 : index
    %4 = vector.load %arg2[%c0_2, %c0_3] : memref<128x512xbf16, #tpu.memory_space<vmem>>, vector<128x512xbf16>
    %cst = arith.constant dense<0.000000e+00> : vector<64x512xf32>
    %5 = tpu.matmul %3, %4, %cst {dimension_numbers = #tpu.dot_dimension_numbers<[1], [0], [0], [1], [0, 0, 1, 1], [], []>} : vector<64x128xbf16>, vector<128x512xbf16>, vector<64x512xf32> -> vector<64x512xf32>
    %c0_4 = arith.constant 0 : index
    %c0_5 = arith.constant 0 : index
    %6 = vector.load %arg4[%c0_4, %c0_5] : memref<1x512xf32, #tpu.memory_space<vmem>>, vector<1x512xf32>
    %7 = vector.broadcast %6 : vector<1x512xf32> to vector<64x512xf32>
    %8 = arith.addf %5, %7 : vector<64x512xf32>
    %c0_6 = arith.constant 0 : index
    %c0_7 = arith.constant 0 : index
    %9 = vector.load %arg10[%c0_6, %c0_7] : memref<64x512xf32, #tpu.memory_space<vmem>>, vector<64x512xf32>
    tpu.vector_store %arg10[%c0_6, %c0_7], %8 {strides = array<i32>} : memref<64x512xf32, #tpu.memory_space<vmem>>, vector<64x512xf32>,
    %c0_8 = arith.constant 0 : index
    %c0_9 = arith.constant 0 : index
    %10 = vector.load %arg8[%c0_8, %c0_9] : memref<8x128xf32, #tpu.memory_space<vmem>>, vector<8x128xf32>
    %c0_10 = arith.constant 0 : index
    %c0_11 = arith.constant 0 : index
    %11 = vector.load %arg9[%c0_10, %c0_11] : memref<8x128xf32, #tpu.memory_space<vmem>>, vector<8x128xf32>
    %c0_i32_12 = arith.constant 0 : i32
    %c8_i32 = arith.constant 8 : i32
    %12 = arith.muli %c0_i32_12, %c8_i32 : i32
    %13 = tpu.assume_multiple %12, 8 : i32
    %14 = arith.index_cast %13 : i32 to index
    %c0_13 = arith.constant 0 : index
    %15 = vector.load %arg10[%14, %c0_13] : memref<64x512xf32, #tpu.memory_space<vmem>>, vector<8x512xf32>
    %16 = arith.truncf %10 : vector<8x128xf32> to vector<8x128xbf16>
    %c0_14 = arith.constant 0 : index
    %c0_15 = arith.constant 0 : index
    %17 = vector.load %arg3[%c0_14, %c0_15] : memref<128x512xbf16, #tpu.memory_space<vmem>>, vector<128x512xbf16>
    %cst_16 = arith.constant dense<0.000000e+00> : vector<8x512xf32>
    %18 = tpu.matmul %16, %17, %cst_16 {dimension_numbers = #tpu.dot_dimension_numbers<[1], [0], [0], [1], [0, 0, 1, 1], [], []>} : vector<8x128xbf16>, vector<128x512xbf16>, vector<8x512xf32> -> vector<8x512xf32>
    %19 = arith.addf %15, %18 : vector<8x512xf32>
    %20 = vector.extract_strided_slice %19 {offsets = [0, 0], sizes = [8, 128], strides = [1, 1]} : vector<8x512xf32> to vector<8x128xf32>
    %21 = arith.negf %20 : vector<8x128xf32>
    %22 = math.exp %21 : vector<8x128xf32>
    %cst_17 = arith.constant 1.000000e+00 : f32
    %23 = vector.broadcast %cst_17 : f32 to vector<8x128xf32>
    %24 = arith.addf %23, %22 : vector<8x128xf32>
    %25 = arith.divf %23, %24 : vector<8x128xf32>
    %26 = vector.extract_strided_slice %19 {offsets = [0, 128], sizes = [8, 128], strides = [1, 1]} : vector<8x512xf32> to vector<8x128xf32>
    %27 = arith.negf %26 : vector<8x128xf32>
    %28 = math.exp %27 : vector<8x128xf32>
    %cst_18 = arith.constant 1.000000e+00 : f32
    %29 = vector.broadcast %cst_18 : f32 to vector<8x128xf32>
    %30 = arith.addf %29, %28 : vector<8x128xf32>
    %31 = arith.divf %29, %30 : vector<8x128xf32>
    %32 = vector.extract_strided_slice %19 {offsets = [0, 256], sizes = [8, 128], strides = [1, 1]} : vector<8x512xf32> to vector<8x128xf32>
    %33 = math.tanh %32 : vector<8x128xf32>
    %34 = vector.extract_strided_slice %19 {offsets = [0, 384], sizes = [8, 128], strides = [1, 1]} : vector<8x512xf32> to vector<8x128xf32>
    %35 = arith.negf %34 : vector<8x128xf32>
    %36 = math.exp %35 : vector<8x128xf32>
    %cst_19 = arith.constant 1.000000e+00 : f32
    %37 = vector.broadcast %cst_19 : f32 to vector<8x128xf32>
    %38 = arith.addf %37, %36 : vector<8x128xf32>
    %39 = arith.divf %37, %38 : vector<8x128xf32>
    %40 = arith.mulf %31, %11 : vector<8x128xf32>
    %41 = arith.mulf %25, %33 : vector<8x128xf32>
    %42 = arith.addf %40, %41 : vector<8x128xf32>
    %43 = math.tanh %42 : vector<8x128xf32>
    %44 = arith.mulf %39, %43 : vector<8x128xf32>
    %45 = arith.index_cast %13 : i32 to index
    %c0_20 = arith.constant 0 : index
    %46 = vector.load %arg11[%45, %c0_20] : memref<64x128xf32, #tpu.memory_space<vmem>>, vector<8x128xf32>
    tpu.vector_store %arg11[%45, %c0_20], %44 {strides = array<i32>} : memref<64x128xf32, #tpu.memory_space<vmem>>, vector<8x128xf32>,
    %c1_i32 = arith.constant 1 : i32
    %c8_i32_21 = arith.constant 8 : i32
    %47 = arith.muli %c1_i32, %c8_i32_21 : i32
    %48 = tpu.assume_multiple %47, 8 : i32
    %49 = arith.index_cast %48 : i32 to index
    %c0_22 = arith.constant 0 : index
    %50 = vector.load %arg10[%49, %c0_22] : memref<64x512xf32, #tpu.memory_space<vmem>>, vector<8x512xf32>
    %51 = arith.truncf %44 : vector<8x128xf32> to vector<8x128xbf16>
    %c0_23 = arith.constant 0 : index
    %c0_24 = arith.constant 0 : index
    %52 = vector.load %arg3[%c0_23, %c0_24] : memref<128x512xbf16, #tpu.memory_space<vmem>>, vector<128x512xbf16>
    %cst_25 = arith.constant dense<0.000000e+00> : vector<8x512xf32>
    %53 = tpu.matmul %51, %52, %cst_25 {dimension_numbers = #tpu.dot_dimension_numbers<[1], [0], [0], [1], [0, 0, 1, 1], [], []>} : vector<8x128xbf16>, vector<128x512xbf16>, vector<8x512xf32> -> vector<8x512xf32>
    %54 = arith.addf %50, %53 : vector<8x512xf32>
    %55 = vector.extract_strided_slice %54 {offsets = [0, 0], sizes = [8, 128], strides = [1, 1]} : vector<8x512xf32> to vector<8x128xf32>
    %56 = arith.negf %55 : vector<8x128xf32>
    %57 = math.exp %56 : vector<8x128xf32>
    %cst_26 = arith.constant 1.000000e+00 : f32
    %58 = vector.broadcast %cst_26 : f32 to vector<8x128xf32>
    %59 = arith.addf %58, %57 : vector<8x128xf32>
    %60 = arith.divf %58, %59 : vector<8x128xf32>
    %61 = vector.extract_strided_slice %54 {offsets = [0, 128], sizes = [8, 128], strides = [1, 1]} : vector<8x512xf32> to vector<8x128xf32>
    %62 = arith.negf %61 : vector<8x128xf32>
    %63 = math.exp %62 : vector<8x128xf32>
    %cst_27 = arith.constant 1.000000e+00 : f32
    %64 = vector.broadcast %cst_27 : f32 to vector<8x128xf32>
    %65 = arith.addf %64, %63 : vector<8x128xf32>
    %66 = arith.divf %64, %65 : vector<8x128xf32>
    %67 = vector.extract_strided_slice %54 {offsets = [0, 256], sizes = [8, 128], strides = [1, 1]} : vector<8x512xf32> to vector<8x128xf32>
    %68 = math.tanh %67 : vector<8x128xf32>
    %69 = vector.extract_strided_slice %54 {offsets = [0, 384], sizes = [8, 128], strides = [1, 1]} : vector<8x512xf32> to vector<8x128xf32>
    %70 = arith.negf %69 : vector<8x128xf32>
    %71 = math.exp %70 : vector<8x128xf32>
    %cst_28 = arith.constant 1.000000e+00 : f32
    %72 = vector.broadcast %cst_28 : f32 to vector<8x128xf32>
    %73 = arith.addf %72, %71 : vector<8x128xf32>
    %74 = arith.divf %72, %73 : vector<8x128xf32>
    %75 = arith.mulf %66, %42 : vector<8x128xf32>
    %76 = arith.mulf %60, %68 : vector<8x128xf32>
    %77 = arith.addf %75, %76 : vector<8x128xf32>
    %78 = math.tanh %77 : vector<8x128xf32>
    %79 = arith.mulf %74, %78 : vector<8x128xf32>
    %80 = arith.index_cast %48 : i32 to index
    %c0_29 = arith.constant 0 : index
    %81 = vector.load %arg11[%80, %c0_29] : memref<64x128xf32, #tpu.memory_space<vmem>>, vector<8x128xf32>
    tpu.vector_store %arg11[%80, %c0_29], %79 {strides = array<i32>} : memref<64x128xf32, #tpu.memory_space<vmem>>, vector<8x128xf32>,
    %c2_i32 = arith.constant 2 : i32
    %c8_i32_30 = arith.constant 8 : i32
    %82 = arith.muli %c2_i32, %c8_i32_30 : i32
    %83 = tpu.assume_multiple %82, 8 : i32
    %84 = arith.index_cast %83 : i32 to index
    %c0_31 = arith.constant 0 : index
    %85 = vector.load %arg10[%84, %c0_31] : memref<64x512xf32, #tpu.memory_space<vmem>>, vector<8x512xf32>
    %86 = arith.truncf %79 : vector<8x128xf32> to vector<8x128xbf16>
    %c0_32 = arith.constant 0 : index
    %c0_33 = arith.constant 0 : index
    %87 = vector.load %arg3[%c0_32, %c0_33] : memref<128x512xbf16, #tpu.memory_space<vmem>>, vector<128x512xbf16>
    %cst_34 = arith.constant dense<0.000000e+00> : vector<8x512xf32>
    %88 = tpu.matmul %86, %87, %cst_34 {dimension_numbers = #tpu.dot_dimension_numbers<[1], [0], [0], [1], [0, 0, 1, 1], [], []>} : vector<8x128xbf16>, vector<128x512xbf16>, vector<8x512xf32> -> vector<8x512xf32>
    %89 = arith.addf %85, %88 : vector<8x512xf32>
    %90 = vector.extract_strided_slice %89 {offsets = [0, 0], sizes = [8, 128], strides = [1, 1]} : vector<8x512xf32> to vector<8x128xf32>
    %91 = arith.negf %90 : vector<8x128xf32>
    %92 = math.exp %91 : vector<8x128xf32>
    %cst_35 = arith.constant 1.000000e+00 : f32
    %93 = vector.broadcast %cst_35 : f32 to vector<8x128xf32>
    %94 = arith.addf %93, %92 : vector<8x128xf32>
    %95 = arith.divf %93, %94 : vector<8x128xf32>
    %96 = vector.extract_strided_slice %89 {offsets = [0, 128], sizes = [8, 128], strides = [1, 1]} : vector<8x512xf32> to vector<8x128xf32>
    %97 = arith.negf %96 : vector<8x128xf32>
    %98 = math.exp %97 : vector<8x128xf32>
    %cst_36 = arith.constant 1.000000e+00 : f32
    %99 = vector.broadcast %cst_36 : f32 to vector<8x128xf32>
    %100 = arith.addf %99, %98 : vector<8x128xf32>
    %101 = arith.divf %99, %100 : vector<8x128xf32>
    %102 = vector.extract_strided_slice %89 {offsets = [0, 256], sizes = [8, 128], strides = [1, 1]} : vector<8x512xf32> to vector<8x128xf32>
    %103 = math.tanh %102 : vector<8x128xf32>
    %104 = vector.extract_strided_slice %89 {offsets = [0, 384], sizes = [8, 128], strides = [1, 1]} : vector<8x512xf32> to vector<8x128xf32>
    %105 = arith.negf %104 : vector<8x128xf32>
    %106 = math.exp %105 : vector<8x128xf32>
    %cst_37 = arith.constant 1.000000e+00 : f32
    %107 = vector.broadcast %cst_37 : f32 to vector<8x128xf32>
    %108 = arith.addf %107, %106 : vector<8x128xf32>
    %109 = arith.divf %107, %108 : vector<8x128xf32>
    %110 = arith.mulf %101, %77 : vector<8x128xf32>
    %111 = arith.mulf %95, %103 : vector<8x128xf32>
    %112 = arith.addf %110, %111 : vector<8x128xf32>
    %113 = math.tanh %112 : vector<8x128xf32>
    %114 = arith.mulf %109, %113 : vector<8x128xf32>
    %115 = arith.index_cast %83 : i32 to index
    %c0_38 = arith.constant 0 : index
    %116 = vector.load %arg11[%115, %c0_38] : memref<64x128xf32, #tpu.memory_space<vmem>>, vector<8x128xf32>
    tpu.vector_store %arg11[%115, %c0_38], %114 {strides = array<i32>} : memref<64x128xf32, #tpu.memory_space<vmem>>, vector<8x128xf32>,
    %c3_i32 = arith.constant 3 : i32
    %c8_i32_39 = arith.constant 8 : i32
    %117 = arith.muli %c3_i32, %c8_i32_39 : i32
    %118 = tpu.assume_multiple %117, 8 : i32
    %119 = arith.index_cast %118 : i32 to index
    %c0_40 = arith.constant 0 : index
    %120 = vector.load %arg10[%119, %c0_40] : memref<64x512xf32, #tpu.memory_space<vmem>>, vector<8x512xf32>
    %121 = arith.truncf %114 : vector<8x128xf32> to vector<8x128xbf16>
    %c0_41 = arith.constant 0 : index
    %c0_42 = arith.constant 0 : index
    %122 = vector.load %arg3[%c0_41, %c0_42] : memref<128x512xbf16, #tpu.memory_space<vmem>>, vector<128x512xbf16>
    %cst_43 = arith.constant dense<0.000000e+00> : vector<8x512xf32>
    %123 = tpu.matmul %121, %122, %cst_43 {dimension_numbers = #tpu.dot_dimension_numbers<[1], [0], [0], [1], [0, 0, 1, 1], [], []>} : vector<8x128xbf16>, vector<128x512xbf16>, vector<8x512xf32> -> vector<8x512xf32>
    %124 = arith.addf %120, %123 : vector<8x512xf32>
    %125 = vector.extract_strided_slice %124 {offsets = [0, 0], sizes = [8, 128], strides = [1, 1]} : vector<8x512xf32> to vector<8x128xf32>
    %126 = arith.negf %125 : vector<8x128xf32>
    %127 = math.exp %126 : vector<8x128xf32>
    %cst_44 = arith.constant 1.000000e+00 : f32
    %128 = vector.broadcast %cst_44 : f32 to vector<8x128xf32>
    %129 = arith.addf %128, %127 : vector<8x128xf32>
    %130 = arith.divf %128, %129 : vector<8x128xf32>
    %131 = vector.extract_strided_slice %124 {offsets = [0, 128], sizes = [8, 128], strides = [1, 1]} : vector<8x512xf32> to vector<8x128xf32>
    %132 = arith.negf %131 : vector<8x128xf32>
    %133 = math.exp %132 : vector<8x128xf32>
    %cst_45 = arith.constant 1.000000e+00 : f32
    %134 = vector.broadcast %cst_45 : f32 to vector<8x128xf32>
    %135 = arith.addf %134, %133 : vector<8x128xf32>
    %136 = arith.divf %134, %135 : vector<8x128xf32>
    %137 = vector.extract_strided_slice %124 {offsets = [0, 256], sizes = [8, 128], strides = [1, 1]} : vector<8x512xf32> to vector<8x128xf32>
    %138 = math.tanh %137 : vector<8x128xf32>
    %139 = vector.extract_strided_slice %124 {offsets = [0, 384], sizes = [8, 128], strides = [1, 1]} : vector<8x512xf32> to vector<8x128xf32>
    %140 = arith.negf %139 : vector<8x128xf32>
    %141 = math.exp %140 : vector<8x128xf32>
    %cst_46 = arith.constant 1.000000e+00 : f32
    %142 = vector.broadcast %cst_46 : f32 to vector<8x128xf32>
    %143 = arith.addf %142, %141 : vector<8x128xf32>
    %144 = arith.divf %142, %143 : vector<8x128xf32>
    %145 = arith.mulf %136, %112 : vector<8x128xf32>
    %146 = arith.mulf %130, %138 : vector<8x128xf32>
    %147 = arith.addf %145, %146 : vector<8x128xf32>
    %148 = math.tanh %147 : vector<8x128xf32>
    %149 = arith.mulf %144, %148 : vector<8x128xf32>
    %150 = arith.index_cast %118 : i32 to index
    %c0_47 = arith.constant 0 : index
    %151 = vector.load %arg11[%150, %c0_47] : memref<64x128xf32, #tpu.memory_space<vmem>>, vector<8x128xf32>
    tpu.vector_store %arg11[%150, %c0_47], %149 {strides = array<i32>} : memref<64x128xf32, #tpu.memory_space<vmem>>, vector<8x128xf32>,
    %c4_i32 = arith.constant 4 : i32
    %c8_i32_48 = arith.constant 8 : i32
    %152 = arith.muli %c4_i32, %c8_i32_48 : i32
    %153 = tpu.assume_multiple %152, 8 : i32
    %154 = arith.index_cast %153 : i32 to index
    %c0_49 = arith.constant 0 : index
    %155 = vector.load %arg10[%154, %c0_49] : memref<64x512xf32, #tpu.memory_space<vmem>>, vector<8x512xf32>
    %156 = arith.truncf %149 : vector<8x128xf32> to vector<8x128xbf16>
    %c0_50 = arith.constant 0 : index
    %c0_51 = arith.constant 0 : index
    %157 = vector.load %arg3[%c0_50, %c0_51] : memref<128x512xbf16, #tpu.memory_space<vmem>>, vector<128x512xbf16>
    %cst_52 = arith.constant dense<0.000000e+00> : vector<8x512xf32>
    %158 = tpu.matmul %156, %157, %cst_52 {dimension_numbers = #tpu.dot_dimension_numbers<[1], [0], [0], [1], [0, 0, 1, 1], [], []>} : vector<8x128xbf16>, vector<128x512xbf16>, vector<8x512xf32> -> vector<8x512xf32>
    %159 = arith.addf %155, %158 : vector<8x512xf32>
    %160 = vector.extract_strided_slice %159 {offsets = [0, 0], sizes = [8, 128], strides = [1, 1]} : vector<8x512xf32> to vector<8x128xf32>
    %161 = arith.negf %160 : vector<8x128xf32>
    %162 = math.exp %161 : vector<8x128xf32>
    %cst_53 = arith.constant 1.000000e+00 : f32
    %163 = vector.broadcast %cst_53 : f32 to vector<8x128xf32>
    %164 = arith.addf %163, %162 : vector<8x128xf32>
    %165 = arith.divf %163, %164 : vector<8x128xf32>
    %166 = vector.extract_strided_slice %159 {offsets = [0, 128], sizes = [8, 128], strides = [1, 1]} : vector<8x512xf32> to vector<8x128xf32>
    %167 = arith.negf %166 : vector<8x128xf32>
    %168 = math.exp %167 : vector<8x128xf32>
    %cst_54 = arith.constant 1.000000e+00 : f32
    %169 = vector.broadcast %cst_54 : f32 to vector<8x128xf32>
    %170 = arith.addf %169, %168 : vector<8x128xf32>
    %171 = arith.divf %169, %170 : vector<8x128xf32>
    %172 = vector.extract_strided_slice %159 {offsets = [0, 256], sizes = [8, 128], strides = [1, 1]} : vector<8x512xf32> to vector<8x128xf32>
    %173 = math.tanh %172 : vector<8x128xf32>
    %174 = vector.extract_strided_slice %159 {offsets = [0, 384], sizes = [8, 128], strides = [1, 1]} : vector<8x512xf32> to vector<8x128xf32>
    %175 = arith.negf %174 : vector<8x128xf32>
    %176 = math.exp %175 : vector<8x128xf32>
    %cst_55 = arith.constant 1.000000e+00 : f32
    %177 = vector.broadcast %cst_55 : f32 to vector<8x128xf32>
    %178 = arith.addf %177, %176 : vector<8x128xf32>
    %179 = arith.divf %177, %178 : vector<8x128xf32>
    %180 = arith.mulf %171, %147 : vector<8x128xf32>
    %181 = arith.mulf %165, %173 : vector<8x128xf32>
    %182 = arith.addf %180, %181 : vector<8x128xf32>
    %183 = math.tanh %182 : vector<8x128xf32>
    %184 = arith.mulf %179, %183 : vector<8x128xf32>
    %185 = arith.index_cast %153 : i32 to index
    %c0_56 = arith.constant 0 : index
    %186 = vector.load %arg11[%185, %c0_56] : memref<64x128xf32, #tpu.memory_space<vmem>>, vector<8x128xf32>
    tpu.vector_store %arg11[%185, %c0_56], %184 {strides = array<i32>} : memref<64x128xf32, #tpu.memory_space<vmem>>, vector<8x128xf32>,
    %c5_i32 = arith.constant 5 : i32
    %c8_i32_57 = arith.constant 8 : i32
    %187 = arith.muli %c5_i32, %c8_i32_57 : i32
    %188 = tpu.assume_multiple %187, 8 : i32
    %189 = arith.index_cast %188 : i32 to index
    %c0_58 = arith.constant 0 : index
    %190 = vector.load %arg10[%189, %c0_58] : memref<64x512xf32, #tpu.memory_space<vmem>>, vector<8x512xf32>
    %191 = arith.truncf %184 : vector<8x128xf32> to vector<8x128xbf16>
    %c0_59 = arith.constant 0 : index
    %c0_60 = arith.constant 0 : index
    %192 = vector.load %arg3[%c0_59, %c0_60] : memref<128x512xbf16, #tpu.memory_space<vmem>>, vector<128x512xbf16>
    %cst_61 = arith.constant dense<0.000000e+00> : vector<8x512xf32>
    %193 = tpu.matmul %191, %192, %cst_61 {dimension_numbers = #tpu.dot_dimension_numbers<[1], [0], [0], [1], [0, 0, 1, 1], [], []>} : vector<8x128xbf16>, vector<128x512xbf16>, vector<8x512xf32> -> vector<8x512xf32>
    %194 = arith.addf %190, %193 : vector<8x512xf32>
    %195 = vector.extract_strided_slice %194 {offsets = [0, 0], sizes = [8, 128], strides = [1, 1]} : vector<8x512xf32> to vector<8x128xf32>
    %196 = arith.negf %195 : vector<8x128xf32>
    %197 = math.exp %196 : vector<8x128xf32>
    %cst_62 = arith.constant 1.000000e+00 : f32
    %198 = vector.broadcast %cst_62 : f32 to vector<8x128xf32>
    %199 = arith.addf %198, %197 : vector<8x128xf32>
    %200 = arith.divf %198, %199 : vector<8x128xf32>
    %201 = vector.extract_strided_slice %194 {offsets = [0, 128], sizes = [8, 128], strides = [1, 1]} : vector<8x512xf32> to vector<8x128xf32>
    %202 = arith.negf %201 : vector<8x128xf32>
    %203 = math.exp %202 : vector<8x128xf32>
    %cst_63 = arith.constant 1.000000e+00 : f32
    %204 = vector.broadcast %cst_63 : f32 to vector<8x128xf32>
    %205 = arith.addf %204, %203 : vector<8x128xf32>
    %206 = arith.divf %204, %205 : vector<8x128xf32>
    %207 = vector.extract_strided_slice %194 {offsets = [0, 256], sizes = [8, 128], strides = [1, 1]} : vector<8x512xf32> to vector<8x128xf32>
    %208 = math.tanh %207 : vector<8x128xf32>
    %209 = vector.extract_strided_slice %194 {offsets = [0, 384], sizes = [8, 128], strides = [1, 1]} : vector<8x512xf32> to vector<8x128xf32>
    %210 = arith.negf %209 : vector<8x128xf32>
    %211 = math.exp %210 : vector<8x128xf32>
    %cst_64 = arith.constant 1.000000e+00 : f32
    %212 = vector.broadcast %cst_64 : f32 to vector<8x128xf32>
    %213 = arith.addf %212, %211 : vector<8x128xf32>
    %214 = arith.divf %212, %213 : vector<8x128xf32>
    %215 = arith.mulf %206, %182 : vector<8x128xf32>
    %216 = arith.mulf %200, %208 : vector<8x128xf32>
    %217 = arith.addf %215, %216 : vector<8x128xf32>
    %218 = math.tanh %217 : vector<8x128xf32>
    %219 = arith.mulf %214, %218 : vector<8x128xf32>
    %220 = arith.index_cast %188 : i32 to index
    %c0_65 = arith.constant 0 : index
    %221 = vector.load %arg11[%220, %c0_65] : memref<64x128xf32, #tpu.memory_space<vmem>>, vector<8x128xf32>
    tpu.vector_store %arg11[%220, %c0_65], %219 {strides = array<i32>} : memref<64x128xf32, #tpu.memory_space<vmem>>, vector<8x128xf32>,
    %c6_i32 = arith.constant 6 : i32
    %c8_i32_66 = arith.constant 8 : i32
    %222 = arith.muli %c6_i32, %c8_i32_66 : i32
    %223 = tpu.assume_multiple %222, 8 : i32
    %224 = arith.index_cast %223 : i32 to index
    %c0_67 = arith.constant 0 : index
    %225 = vector.load %arg10[%224, %c0_67] : memref<64x512xf32, #tpu.memory_space<vmem>>, vector<8x512xf32>
    %226 = arith.truncf %219 : vector<8x128xf32> to vector<8x128xbf16>
    %c0_68 = arith.constant 0 : index
    %c0_69 = arith.constant 0 : index
    %227 = vector.load %arg3[%c0_68, %c0_69] : memref<128x512xbf16, #tpu.memory_space<vmem>>, vector<128x512xbf16>
    %cst_70 = arith.constant dense<0.000000e+00> : vector<8x512xf32>
    %228 = tpu.matmul %226, %227, %cst_70 {dimension_numbers = #tpu.dot_dimension_numbers<[1], [0], [0], [1], [0, 0, 1, 1], [], []>} : vector<8x128xbf16>, vector<128x512xbf16>, vector<8x512xf32> -> vector<8x512xf32>
    %229 = arith.addf %225, %228 : vector<8x512xf32>
    %230 = vector.extract_strided_slice %229 {offsets = [0, 0], sizes = [8, 128], strides = [1, 1]} : vector<8x512xf32> to vector<8x128xf32>
    %231 = arith.negf %230 : vector<8x128xf32>
    %232 = math.exp %231 : vector<8x128xf32>
    %cst_71 = arith.constant 1.000000e+00 : f32
    %233 = vector.broadcast %cst_71 : f32 to vector<8x128xf32>
    %234 = arith.addf %233, %232 : vector<8x128xf32>
    %235 = arith.divf %233, %234 : vector<8x128xf32>
    %236 = vector.extract_strided_slice %229 {offsets = [0, 128], sizes = [8, 128], strides = [1, 1]} : vector<8x512xf32> to vector<8x128xf32>
    %237 = arith.negf %236 : vector<8x128xf32>
    %238 = math.exp %237 : vector<8x128xf32>
    %cst_72 = arith.constant 1.000000e+00 : f32
    %239 = vector.broadcast %cst_72 : f32 to vector<8x128xf32>
    %240 = arith.addf %239, %238 : vector<8x128xf32>
    %241 = arith.divf %239, %240 : vector<8x128xf32>
    %242 = vector.extract_strided_slice %229 {offsets = [0, 256], sizes = [8, 128], strides = [1, 1]} : vector<8x512xf32> to vector<8x128xf32>
    %243 = math.tanh %242 : vector<8x128xf32>
    %244 = vector.extract_strided_slice %229 {offsets = [0, 384], sizes = [8, 128], strides = [1, 1]} : vector<8x512xf32> to vector<8x128xf32>
    %245 = arith.negf %244 : vector<8x128xf32>
    %246 = math.exp %245 : vector<8x128xf32>
    %cst_73 = arith.constant 1.000000e+00 : f32
    %247 = vector.broadcast %cst_73 : f32 to vector<8x128xf32>
    %248 = arith.addf %247, %246 : vector<8x128xf32>
    %249 = arith.divf %247, %248 : vector<8x128xf32>
    %250 = arith.mulf %241, %217 : vector<8x128xf32>
    %251 = arith.mulf %235, %243 : vector<8x128xf32>
    %252 = arith.addf %250, %251 : vector<8x128xf32>
    %253 = math.tanh %252 : vector<8x128xf32>
    %254 = arith.mulf %249, %253 : vector<8x128xf32>
    %255 = arith.index_cast %223 : i32 to index
    %c0_74 = arith.constant 0 : index
    %256 = vector.load %arg11[%255, %c0_74] : memref<64x128xf32, #tpu.memory_space<vmem>>, vector<8x128xf32>
    tpu.vector_store %arg11[%255, %c0_74], %254 {strides = array<i32>} : memref<64x128xf32, #tpu.memory_space<vmem>>, vector<8x128xf32>,
    %c7_i32 = arith.constant 7 : i32
    %c8_i32_75 = arith.constant 8 : i32
    %257 = arith.muli %c7_i32, %c8_i32_75 : i32
    %258 = tpu.assume_multiple %257, 8 : i32
    %259 = arith.index_cast %258 : i32 to index
    %c0_76 = arith.constant 0 : index
    %260 = vector.load %arg10[%259, %c0_76] : memref<64x512xf32, #tpu.memory_space<vmem>>, vector<8x512xf32>
    %261 = arith.truncf %254 : vector<8x128xf32> to vector<8x128xbf16>
    %c0_77 = arith.constant 0 : index
    %c0_78 = arith.constant 0 : index
    %262 = vector.load %arg3[%c0_77, %c0_78] : memref<128x512xbf16, #tpu.memory_space<vmem>>, vector<128x512xbf16>
    %cst_79 = arith.constant dense<0.000000e+00> : vector<8x512xf32>
    %263 = tpu.matmul %261, %262, %cst_79 {dimension_numbers = #tpu.dot_dimension_numbers<[1], [0], [0], [1], [0, 0, 1, 1], [], []>} : vector<8x128xbf16>, vector<128x512xbf16>, vector<8x512xf32> -> vector<8x512xf32>
    %264 = arith.addf %260, %263 : vector<8x512xf32>
    %265 = vector.extract_strided_slice %264 {offsets = [0, 0], sizes = [8, 128], strides = [1, 1]} : vector<8x512xf32> to vector<8x128xf32>
    %266 = arith.negf %265 : vector<8x128xf32>
    %267 = math.exp %266 : vector<8x128xf32>
    %cst_80 = arith.constant 1.000000e+00 : f32
    %268 = vector.broadcast %cst_80 : f32 to vector<8x128xf32>
    %269 = arith.addf %268, %267 : vector<8x128xf32>
    %270 = arith.divf %268, %269 : vector<8x128xf32>
    %271 = vector.extract_strided_slice %264 {offsets = [0, 128], sizes = [8, 128], strides = [1, 1]} : vector<8x512xf32> to vector<8x128xf32>
    %272 = arith.negf %271 : vector<8x128xf32>
    %273 = math.exp %272 : vector<8x128xf32>
    %cst_81 = arith.constant 1.000000e+00 : f32
    %274 = vector.broadcast %cst_81 : f32 to vector<8x128xf32>
    %275 = arith.addf %274, %273 : vector<8x128xf32>
    %276 = arith.divf %274, %275 : vector<8x128xf32>
    %277 = vector.extract_strided_slice %264 {offsets = [0, 256], sizes = [8, 128], strides = [1, 1]} : vector<8x512xf32> to vector<8x128xf32>
    %278 = math.tanh %277 : vector<8x128xf32>
    %279 = vector.extract_strided_slice %264 {offsets = [0, 384], sizes = [8, 128], strides = [1, 1]} : vector<8x512xf32> to vector<8x128xf32>
    %280 = arith.negf %279 : vector<8x128xf32>
    %281 = math.exp %280 : vector<8x128xf32>
    %cst_82 = arith.constant 1.000000e+00 : f32
    %282 = vector.broadcast %cst_82 : f32 to vector<8x128xf32>
    %283 = arith.addf %282, %281 : vector<8x128xf32>
    %284 = arith.divf %282, %283 : vector<8x128xf32>
    %285 = arith.mulf %276, %252 : vector<8x128xf32>
    %286 = arith.mulf %270, %278 : vector<8x128xf32>
    %287 = arith.addf %285, %286 : vector<8x128xf32>
    %288 = math.tanh %287 : vector<8x128xf32>
    %289 = arith.mulf %284, %288 : vector<8x128xf32>
    %290 = arith.index_cast %258 : i32 to index
    %c0_83 = arith.constant 0 : index
    %291 = vector.load %arg11[%290, %c0_83] : memref<64x128xf32, #tpu.memory_space<vmem>>, vector<8x128xf32>
    tpu.vector_store %arg11[%290, %c0_83], %289 {strides = array<i32>} : memref<64x128xf32, #tpu.memory_space<vmem>>, vector<8x128xf32>,
    %c8_i32_84 = arith.constant 8 : i32
    %c0_85 = arith.constant 0 : index
    %c0_86 = arith.constant 0 : index
    %292 = vector.load %arg11[%c0_85, %c0_86] : memref<64x128xf32, #tpu.memory_space<vmem>>, vector<64x128xf32>
    %293 = arith.truncf %292 : vector<64x128xf32> to vector<64x128xbf16>
    %c0_87 = arith.constant 0 : index
    %c0_88 = arith.constant 0 : index
    %294 = vector.load %arg7[%c0_87, %c0_88] : memref<64x128xbf16, #tpu.memory_space<vmem>>, vector<64x128xbf16>
    tpu.vector_store %arg7[%c0_87, %c0_88], %293 {strides = array<i32>} : memref<64x128xbf16, #tpu.memory_space<vmem>>, vector<64x128xbf16>,
    %c0_89 = arith.constant 0 : index
    %c0_90 = arith.constant 0 : index
    %295 = vector.load %arg8[%c0_89, %c0_90] : memref<8x128xf32, #tpu.memory_space<vmem>>, vector<8x128xf32>
    tpu.vector_store %arg8[%c0_89, %c0_90], %289 {strides = array<i32>} : memref<8x128xf32, #tpu.memory_space<vmem>>, vector<8x128xf32>,
    %c0_91 = arith.constant 0 : index
    %c0_92 = arith.constant 0 : index
    %296 = vector.load %arg9[%c0_91, %c0_92] : memref<8x128xf32, #tpu.memory_space<vmem>>, vector<8x128xf32>
    tpu.vector_store %arg9[%c0_91, %c0_92], %287 {strides = array<i32>} : memref<8x128xf32, #tpu.memory_space<vmem>>, vector<8x128xf32>,
    return
  }
  func.func @transform_0(%arg0: i32) -> (i32, i32) {
    %c0_i32 = arith.constant 0 : i32
    %c0_i32_0 = arith.constant 0 : i32
    return %arg0, %c0_i32 : i32, i32
  }
  func.func @transform_1(%arg0: i32) -> (i32, i32) {
    %c0_i32 = arith.constant 0 : i32
    %c0_i32_0 = arith.constant 0 : i32
    %c0_i32_1 = arith.constant 0 : i32
    return %c0_i32, %c0_i32_0 : i32, i32
  }
  func.func @transform_2(%arg0: i32) -> (i32, i32) {
    %c0_i32 = arith.constant 0 : i32
    %c0_i32_0 = arith.constant 0 : i32
    %c0_i32_1 = arith.constant 0 : i32
    return %c0_i32, %c0_i32_0 : i32, i32
  }
  func.func @transform_3(%arg0: i32) -> (i32, i32) {
    %c0_i32 = arith.constant 0 : i32
    %c0_i32_0 = arith.constant 0 : i32
    %c0_i32_1 = arith.constant 0 : i32
    return %c0_i32, %c0_i32_0 : i32, i32
  }
  func.func @transform_4(%arg0: i32) -> (i32, i32) {
    %c0_i32 = arith.constant 0 : i32
    %c0_i32_0 = arith.constant 0 : i32
    %c0_i32_1 = arith.constant 0 : i32
    return %c0_i32, %c0_i32_0 : i32, i32
  }
  func.func @transform_5(%arg0: i32) -> (i32, i32) {
    %c0_i32 = arith.constant 0 : i32
    %c0_i32_0 = arith.constant 0 : i32
    %c0_i32_1 = arith.constant 0 : i32
    return %c0_i32, %c0_i32_0 : i32, i32
  }
  func.func @transform_6(%arg0: i32) -> (i32, i32) {
    %c0_i32 = arith.constant 0 : i32
    %c0_i32_0 = arith.constant 0 : i32
    return %arg0, %c0_i32 : i32, i32
  }
  func.func @transform_7(%arg0: i32) -> (i32, i32) {
    %c0_i32 = arith.constant 0 : i32
    %c0_i32_0 = arith.constant 0 : i32
    %c0_i32_1 = arith.constant 0 : i32
    return %c0_i32, %c0_i32_0 : i32, i32
  }
  func.func @transform_8(%arg0: i32) -> (i32, i32) {
    %c0_i32 = arith.constant 0 : i32
    %c0_i32_0 = arith.constant 0 : i32
    %c0_i32_1 = arith.constant 0 : i32
    return %c0_i32, %c0_i32_0 : i32, i32
  }
}

module attributes {stable_mosaic.version = 11 : i64} {
  func.func @_dense_kernel(%arg0: i32, %arg1: i32, %arg2: memref<16x128xbf16, #tpu.memory_space<vmem>>, %arg3: memref<128x128xbf16, #tpu.memory_space<vmem>>, %arg4: memref<1x128xf32, #tpu.memory_space<vmem>>, %arg5: memref<16x128xf32, #tpu.memory_space<vmem>>) attributes {dimension_semantics = [#tpu.dimension_semantics<parallel>, #tpu.dimension_semantics<parallel>], iteration_bounds = array<i64: 1, 1>, scalar_prefetch = 0 : i64, scratch_operands = 0 : i64, tpu.core_type = #tpu.core_type<tc>, window_params = [{transform_indices = @transform_0, window_bounds = array<i64: 16, 128>}, {transform_indices = @transform_1, window_bounds = array<i64: 128, 128>}, {transform_indices = @transform_2, window_bounds = array<i64: 1, 128>}, {transform_indices = @transform_3, window_bounds = array<i64: 16, 128>}]} {
    %c0 = arith.constant 0 : index
    %c0_0 = arith.constant 0 : index
    %0 = vector.load %arg2[%c0, %c0_0] : memref<16x128xbf16, #tpu.memory_space<vmem>>, vector<16x128xbf16>
    %c0_1 = arith.constant 0 : index
    %c0_2 = arith.constant 0 : index
    %1 = vector.load %arg3[%c0_1, %c0_2] : memref<128x128xbf16, #tpu.memory_space<vmem>>, vector<128x128xbf16>
    %cst = arith.constant dense<0.000000e+00> : vector<16x128xf32>
    %2 = tpu.matmul %0, %1, %cst {dimension_numbers = #tpu.dot_dimension_numbers<[1], [0], [0], [1], [0, 0, 1, 1], [], []>} : vector<16x128xbf16>, vector<128x128xbf16>, vector<16x128xf32> -> vector<16x128xf32>
    %c0_3 = arith.constant 0 : index
    %c0_4 = arith.constant 0 : index
    %3 = vector.load %arg4[%c0_3, %c0_4] : memref<1x128xf32, #tpu.memory_space<vmem>>, vector<1x128xf32>
    %4 = vector.broadcast %3 : vector<1x128xf32> to vector<16x128xf32>
    %5 = arith.addf %2, %4 : vector<16x128xf32>
    %c0_5 = arith.constant 0 : index
    %c0_6 = arith.constant 0 : index
    %6 = vector.load %arg5[%c0_5, %c0_6] : memref<16x128xf32, #tpu.memory_space<vmem>>, vector<16x128xf32>
    tpu.vector_store %arg5[%c0_5, %c0_6], %5 {strides = array<i32>} : memref<16x128xf32, #tpu.memory_space<vmem>>, vector<16x128xf32>,
    return
  }
  func.func @transform_0(%arg0: i32, %arg1: i32) -> (i32, i32) {
    %c0_i32 = arith.constant 0 : i32
    %c0_i32_0 = arith.constant 0 : i32
    return %arg0, %c0_i32 : i32, i32
  }
  func.func @transform_1(%arg0: i32, %arg1: i32) -> (i32, i32) {
    %c0_i32 = arith.constant 0 : i32
    %c0_i32_0 = arith.constant 0 : i32
    return %c0_i32, %arg1 : i32, i32
  }
  func.func @transform_2(%arg0: i32, %arg1: i32) -> (i32, i32) {
    %c0_i32 = arith.constant 0 : i32
    %c0_i32_0 = arith.constant 0 : i32
    return %c0_i32, %arg1 : i32, i32
  }
  func.func @transform_3(%arg0: i32, %arg1: i32) -> (i32, i32) {
    %c0_i32 = arith.constant 0 : i32
    return %arg0, %arg1 : i32, i32
  }
}

</mosaic_0001>

<llo_original>
// kernel: recurrent_network_forward.3
$region0: #{recurrent_network_forward.3}
  #allocation0 [shape = 'u32[]', space=smem, size = 0x4, offset = 0x4, fixed_abs, tag = 'smem constant byte address 0x4 - core index']
  #allocation1 [shape = 'u32[144,128]{1,0:T(1,128)}', space=vmem, size = 0x12000, scoped, tag = 'internal scratch']
  %s0 = inlined_call_operand.vmem [shape: bf16[16,128], index: 0, kind: input, shape index: {}]
  %s1 = inlined_call_operand.vmem [shape: bf16[128,128], index: 1, kind: input, shape index: {}]
  %s2 = inlined_call_operand.vmem [shape: f32[1,128], index: 2, kind: input, shape index: {}]
  %s3 = inlined_call_operand.hbm [shape: f32[16,128], index: 3, kind: output, shape index: {}]
  %s4 = sld [smem:[#allocation0]]
  $region22: #{recurrent_network_forward.3} parent=0
    _
  %s6 = ssub.s32 1, %s4
  %s7 = scalar_select 0, %s6, %s4
  $region1: #{recurrent_network_forward.3} parent=0
    #allocation2 [shape = 'u8[8192]{0}', space=vmem, size = 0x2000, scoped, tag = 'output window, operand 0, single buffered']
    #allocation3 [shape = 's32[1]{0}', space=sflag, size = 0x4, scoped, tag = 'scoped memory for recurrent_network_forward.3']
    %8 = vsyncpa [#allocation3], 0
    // Predicated region
    $region2: #{recurrent_network_forward.3} parent=1 // pred_check
      _
    $region3: #{recurrent_network_forward.3} parent=1 // pred_check_branch
      %10 = sbr.rel (0) target = $region5
    $region4: #{recurrent_network_forward.3} parent=1 // pred_region
      _
    $region5: #{recurrent_network_forward.3} parent=1 // pred_fallthru
      _
    // Predicated region
    $region6: #{recurrent_network_forward.3} parent=1 // pred_check
      _
    $region7: #{recurrent_network_forward.3} parent=1 // pred_check_branch
      %12 = sbr.rel (0) target = $region9
    $region8: #{recurrent_network_forward.3} parent=1 // pred_region
      _
    $region9: #{recurrent_network_forward.3} parent=1 // pred_fallthru
      _
    // Predicated region
    $region10: #{recurrent_network_forward.3} parent=1 // pred_check
      _
    $region11: #{recurrent_network_forward.3} parent=1 // pred_check_branch
      %14 = sbr.rel (0) target = $region13
    $region12: #{recurrent_network_forward.3} parent=1 // pred_region
      _
    $region13: #{recurrent_network_forward.3} parent=1 // pred_fallthru
      _
    %v16 = vld [vmem:[%s0] sm:$0xf]
    %v17 = vld [vmem:[%s0 + $0x4] sm:$0xf]
    %v18 = vld [vmem:[%s1] sm:$0xf]
    %v19 = vld [vmem:[%s1 + $0x4] sm:$0xf]
    %v20 = vld [vmem:[%s1 + $0x8] sm:$0xf]
    %v21 = vld [vmem:[%s1 + $0xc] sm:$0xf]
    %v22 = vld [vmem:[%s1 + $0x10] sm:$0xf]
    %v23 = vld [vmem:[%s1 + $0x14] sm:$0xf]
    %v24 = vld [vmem:[%s1 + $0x18] sm:$0xf]
    %v25 = vld [vmem:[%s1 + $0x1c] sm:$0xf]
    %v26 = vld [vmem:[%s1 + $0x20] sm:$0xf]
    %v27 = vld [vmem:[%s1 + $0x24] sm:$0xf]
    %v28 = vld [vmem:[%s1 + $0x28] sm:$0xf]
    %v29 = vld [vmem:[%s1 + $0x2c] sm:$0xf]
    %v30 = vld [vmem:[%s1 + $0x30] sm:$0xf]
    %v31 = vld [vmem:[%s1 + $0x34] sm:$0xf]
    %v32 = vld [vmem:[%s1 + $0x38] sm:$0xf]
    %v33 = vld [vmem:[%s1 + $0x3c] sm:$0xf]
    %v34 = vld [vmem:[%s2] sm:$0x1]
    %v36 = vlaneseq
    %v37 = vshrl.u32 %v36, 7
    %v38 = vsub.s32 0, %v37
    %v39 = vrot.slane %v34, %v38
    %v43 = vunpack.c.l.b16 %v16
    %v44 = vunpack.c.l.b16 %v17
    %v45 = vpack.c.b16 %v44, %v43
    %v63 = vunpack.c.l.b16 %v18
    %v64 = vunpack.c.l.b16 %v19
    %v65 = vunpack.c.l.b16 %v20
    %v66 = vunpack.c.l.b16 %v21
    %v67 = vunpack.c.l.b16 %v22
    %v68 = vunpack.c.l.b16 %v23
    %v69 = vunpack.c.l.b16 %v24
    %v70 = vunpack.c.l.b16 %v25
    %v71 = vunpack.c.l.b16 %v26
    %v72 = vunpack.c.l.b16 %v27
    %v73 = vunpack.c.l.b16 %v28
    %v74 = vunpack.c.l.b16 %v29
    %v75 = vunpack.c.l.b16 %v30
    %v76 = vunpack.c.l.b16 %v31
    %v77 = vunpack.c.l.b16 %v32
    %v78 = vunpack.c.l.b16 %v33
    %v79 = vpack.c.b16 %v64, %v63
    %v80 = vpack.c.b16 %v66, %v65
    %v81 = vpack.c.b16 %v68, %v67
    %v82 = vpack.c.b16 %v70, %v69
    %v83 = vpack.c.b16 %v72, %v71
    %v84 = vpack.c.b16 %v74, %v73
    %v85 = vpack.c.b16 %v76, %v75
    %v86 = vpack.c.b16 %v78, %v77
    %95 = vmatprep.subr.bf16.mxu0 0
    %96 = vmatpush1.bf16.msra.mxu0 %v79
    %97 = vmatprep.subr.bf16.mxu0 0
    %98 = vmatpush1.bf16.msra.mxu0 %v80
    %99 = vmatprep.subr.bf16.mxu0 0
    %100 = vmatpush1.bf16.msra.mxu0 %v81
    %101 = vmatprep.subr.bf16.mxu0 0
    %102 = vmatpush1.bf16.msra.mxu0 %v82
    %103 = vmatprep.subr.bf16.mxu0 0
    %104 = vmatpush1.bf16.msra.mxu0 %v83
    %105 = vmatprep.subr.bf16.mxu0 0
    %106 = vmatpush1.bf16.msra.mxu0 %v84
    %107 = vmatprep.subr.bf16.mxu0 0
    %108 = vmatpush1.bf16.msra.mxu0 %v85
    %109 = vmatprep.subr.bf16.mxu0 0
    %110 = vmatpush1.bf16.msra.mxu0 %v86
    %111 = vmatprep.subr.bf16.mxu0 0
    %112 = vmatpush1.bf16.msra.mxu0 0
    %113 = vmatprep.subr.bf16.mxu0 0
    %114 = vmatpush1.bf16.msra.mxu0 0
    %115 = vmatprep.subr.bf16.mxu0 0
    %116 = vmatpush1.bf16.msra.mxu0 0
    %117 = vmatprep.subr.bf16.mxu0 0
    %118 = vmatpush1.bf16.msra.mxu0 0
    %119 = vmatprep.subr.bf16.mxu0 0
    %120 = vmatpush1.bf16.msra.mxu0 0
    %121 = vmatprep.subr.bf16.mxu0 0
    %122 = vmatpush1.bf16.msra.mxu0 0
    %123 = vmatprep.subr.bf16.mxu0 0
    %124 = vmatpush1.bf16.msra.mxu0 0
    %125 = vmatprep.subr.bf16.mxu0 0
    %126 = vmatpush1.bf16.msra.mxu0 0
    %127 = vmatprep.mubr.bf16.mxu0 0
    %128 = vmatmul.mubr.bf16.gmra.mrb[0].mxu0 %v45
    %v129 = vpop.f32.mrb[0].mxu0
    %v130 = vadd.f32 %v39, %v129
    %v131 = vpop.f32.mrb[0].mxu0
    %v132 = vpop.f32.mrb[0].mxu0
    %v133 = vadd.f32 %v39, %v132
    %v134 = vpop.f32.mrb[0].mxu0
    %135 = vdwg.mxu0
    %136 = vst [vmem:[#allocation2] sm:$0xff] %v130
    %137 = vst [vmem:[#allocation2 + $0x8] sm:$0xff] %v133
    // Predicated region
    $region14: #{recurrent_network_forward.3} parent=1 // pred_check
      _
    $region15: #{recurrent_network_forward.3} parent=1 // pred_check_branch
      %139 = sbr.rel (0) target = $region17
    $region16: #{recurrent_network_forward.3} parent=1 // pred_region
      %s141 = ssub.s32 256, 256
      %142 = vsyncadd [#allocation3], %s141
      %s143 = sshll.u32 [#allocation2], 4
      %s144 = int_to_ptr.vmem [resolvable:$true] %s143
      %149 = dma.vmem_to_hbm [thread:$0]  %s144, 256, %s3, [#allocation3], 128, 128, 8
    $region17: #{recurrent_network_forward.3} parent=1 // pred_fallthru
      _
    // Predicated region
    $region18: #{recurrent_network_forward.3} parent=1 // pred_check
      _
    $region19: #{recurrent_network_forward.3} parent=1 // pred_check_branch
      %151 = sbr.rel (0) target = $region21
    $region20: #{recurrent_network_forward.3} parent=1 // pred_region
      %152 = dma.done [#allocation3], 256
    $region21: #{recurrent_network_forward.3} parent=1 // pred_fallthru
      _
    %153 = vsyncpa [#allocation3], 1

// kernel: recurrent_network_forward.2
$region0: #{recurrent_network_forward.2}
  #allocation0 [shape = 'u32[]', space=smem, size = 0x4, offset = 0x4, fixed_abs, tag = 'smem constant byte address 0x4 - core index']
  #allocation1 [shape = 'u32[144,128]{1,0:T(1,128)}', space=vmem, size = 0x12000, scoped, tag = 'internal scratch']
  #allocation2 [shape = 'f32[64,512]{1,0:T(8,128)}', space=vmem, size = 0x20000, scoped, tag = 'scratch operand']
  #allocation3 [shape = 'f32[64,128]{1,0:T(8,128)}', space=vmem, size = 0x8000, scoped, tag = 'scratch operand']
  %s0 = inlined_call_operand.vmem [shape: bf16[64,128], index: 0, kind: input, shape index: {}]
  %s1 = inlined_call_operand.vmem [shape: bf16[128,512], index: 1, kind: input, shape index: {}]
  %s2 = inlined_call_operand.vmem [shape: bf16[128,512], index: 2, kind: input, shape index: {}]
  %s3 = inlined_call_operand.vmem [shape: f32[1,512], index: 3, kind: input, shape index: {}]
  %s4 = inlined_call_operand.vmem [shape: f32[8,128], index: 4, kind: input, shape index: {}]
  %s5 = inlined_call_operand.vmem [shape: f32[8,128], index: 5, kind: input, shape index: {}]
  %s6 = inlined_call_operand.vmem [shape: bf16[64,128], index: 6, kind: output, shape index: {0}]
  %s7 = inlined_call_operand.vmem [shape: f32[8,128], index: 7, kind: output, shape index: {1}]
  %s8 = inlined_call_operand.vmem [shape: f32[8,128], index: 8, kind: output, shape index: {2}]
  %9 = xla_tuple %s6, %s7, %s8
  %s10 = sld [smem:[#allocation0]]
  $region54: #{recurrent_network_forward.2} parent=0
    _
  %s12 = ssub.s32 1, %s10
  %s13 = scalar_select 0, %s12, %s10
  // Predicated region
  $region2: #{recurrent_network_forward.2} parent=0 // pred_check
    _
  $region3: #{recurrent_network_forward.2} parent=0 // pred_check_branch
    %15 = sbr.rel (0) target = $region5
  $region4: #{recurrent_network_forward.2} parent=0 // pred_region
    _
  $region5: #{recurrent_network_forward.2} parent=0 // pred_fallthru
    _
  // Predicated region
  $region6: #{recurrent_network_forward.2} parent=0 // pred_check
    _
  $region7: #{recurrent_network_forward.2} parent=0 // pred_check_branch
    %17 = sbr.rel (0) target = $region9
  $region8: #{recurrent_network_forward.2} parent=0 // pred_region
    _
  $region9: #{recurrent_network_forward.2} parent=0 // pred_fallthru
    _
  // Predicated region
  $region10: #{recurrent_network_forward.2} parent=0 // pred_check
    _
  $region11: #{recurrent_network_forward.2} parent=0 // pred_check_branch
    %19 = sbr.rel (0) target = $region13
  $region12: #{recurrent_network_forward.2} parent=0 // pred_region
    _
  $region13: #{recurrent_network_forward.2} parent=0 // pred_fallthru
    _
  // Predicated region
  $region14: #{recurrent_network_forward.2} parent=0 // pred_check
    _
  $region15: #{recurrent_network_forward.2} parent=0 // pred_check_branch
    %21 = sbr.rel (0) target = $region17
  $region16: #{recurrent_network_forward.2} parent=0 // pred_region
    _
  $region17: #{recurrent_network_forward.2} parent=0 // pred_fallthru
    _
  // Predicated region
  $region18: #{recurrent_network_forward.2} parent=0 // pred_check
    _
  $region19: #{recurrent_network_forward.2} parent=0 // pred_check_branch
    %23 = sbr.rel (0) target = $region21
  $region20: #{recurrent_network_forward.2} parent=0 // pred_region
    _
  $region21: #{recurrent_network_forward.2} parent=0 // pred_fallthru
    _
  // Predicated region
  $region22: #{recurrent_network_forward.2} parent=0 // pred_check
    _
  $region23: #{recurrent_network_forward.2} parent=0 // pred_check_branch
    %25 = sbr.rel (0) target = $region25
  $region24: #{recurrent_network_forward.2} parent=0 // pred_region
    _
  $region25: #{recurrent_network_forward.2} parent=0 // pred_fallthru
    _
  %p27 = scmp.eq.s32.totalorder 0, 0
  // Predicated region
  $region26: #{recurrent_network_forward.2} parent=0 // pred_check
    %p28 = pneg %p27
  $region27: #{recurrent_network_forward.2} parent=0 // pred_check_branch
    %30 = sbr.rel (%p28) target = $region29
  $region28: #{recurrent_network_forward.2} parent=0 // pred_region
    %v31 = vld [vmem:[%s4] sm:$0xff]
    %32 = vst [vmem:[%s7] sm:$0xff] %v31
    %v33 = vld [vmem:[%s5] sm:$0xff]
    %34 = vst [vmem:[%s8] sm:$0xff] %v33
  $region29: #{recurrent_network_forward.2} parent=0 // pred_fallthru
    _
  %v35 = vld [vmem:[%s0] sm:$0xf]
  %v36 = vld [vmem:[%s0 + $0x4] sm:$0xf]
  %v37 = vld [vmem:[%s0 + $0x8] sm:$0xf]
  %v38 = vld [vmem:[%s0 + $0xc] sm:$0xf]
  %v39 = vld [vmem:[%s0 + $0x10] sm:$0xf]
  %v40 = vld [vmem:[%s0 + $0x14] sm:$0xf]
  %v41 = vld [vmem:[%s0 + $0x18] sm:$0xf]
  %v42 = vld [vmem:[%s0 + $0x1c] sm:$0xf]
  %v43 = vld [vmem:[%s1] sm:$0xff]
  %v44 = vld [vmem:[%s1 + $0x8] sm:$0xff]
  %v45 = vld [vmem:[%s1 + $0x10] sm:$0xff]
  %v46 = vld [vmem:[%s1 + $0x18] sm:$0xff]
  %v47 = vld [vmem:[%s1 + $0x20] sm:$0xff]
  %v48 = vld [vmem:[%s1 + $0x28] sm:$0xff]
  %v49 = vld [vmem:[%s1 + $0x30] sm:$0xff]
  %v50 = vld [vmem:[%s1 + $0x38] sm:$0xff]
  %v51 = vld [vmem:[%s1 + $0x40] sm:$0xff]
  %v52 = vld [vmem:[%s1 + $0x48] sm:$0xff]
  %v53 = vld [vmem:[%s1 + $0x50] sm:$0xff]
  %v54 = vld [vmem:[%s1 + $0x58] sm:$0xff]
  %v55 = vld [vmem:[%s1 + $0x60] sm:$0xff]
  %v56 = vld [vmem:[%s1 + $0x68] sm:$0xff]
  %v57 = vld [vmem:[%s1 + $0x70] sm:$0xff]
  %v58 = vld [vmem:[%s1 + $0x78] sm:$0xff]
  %v59 = vld [vmem:[%s1 + $0x80] sm:$0xff]
  %v60 = vld [vmem:[%s1 + $0x88] sm:$0xff]
  %v61 = vld [vmem:[%s1 + $0x90] sm:$0xff]
  %v62 = vld [vmem:[%s1 + $0x98] sm:$0xff]
  %v63 = vld [vmem:[%s1 + $0xa0] sm:$0xff]
  %v64 = vld [vmem:[%s1 + $0xa8] sm:$0xff]
  %v65 = vld [vmem:[%s1 + $0xb0] sm:$0xff]
  %v66 = vld [vmem:[%s1 + $0xb8] sm:$0xff]
  %v67 = vld [vmem:[%s1 + $0xc0] sm:$0xff]
  %v68 = vld [vmem:[%s1 + $0xc8] sm:$0xff]
  %v69 = vld [vmem:[%s1 + $0xd0] sm:$0xff]
  %v70 = vld [vmem:[%s1 + $0xd8] sm:$0xff]
  %v71 = vld [vmem:[%s1 + $0xe0] sm:$0xff]
  %v72 = vld [vmem:[%s1 + $0xe8] sm:$0xff]
  %v73 = vld [vmem:[%s1 + $0xf0] sm:$0xff]
  %v74 = vld [vmem:[%s1 + $0xf8] sm:$0xff]
  %v75 = vld [vmem:[%s3] sm:$0xf]
  %v77 = vlaneseq
  %v78 = vshrl.u32 %v77, 7
  %v79 = vsub.s32 0, %v78
  %v80 = vrot.slane %v75, %v79
  %v81 = vlaneseq
  %v82 = vshrl.u32 %v81, 7
  %v83 = vsub.s32 1, %v82
  %v84 = vrot.slane %v75, %v83
  %v85 = vlaneseq
  %v86 = vshrl.u32 %v85, 7
  %v87 = vsub.s32 2, %v86
  %v88 = vrot.slane %v75, %v87
  %v89 = vlaneseq
  %v90 = vshrl.u32 %v89, 7
  %v91 = vsub.s32 3, %v90
  %v92 = vrot.slane %v75, %v91
  %v105 = vunpack.c.l.b16 %v35
  %v106 = vunpack.c.l.b16 %v36
  %v107 = vunpack.c.l.b16 %v37
  %v108 = vunpack.c.l.b16 %v38
  %v109 = vunpack.c.l.b16 %v39
  %v110 = vunpack.c.l.b16 %v40
  %v111 = vunpack.c.l.b16 %v41
  %v112 = vunpack.c.l.b16 %v42
  %v113 = vpack.c.b16 %v106, %v105
  %v114 = vpack.c.b16 %v108, %v107
  %v115 = vpack.c.b16 %v110, %v109
  %v116 = vpack.c.b16 %v112, %v111
  %v153 = vunpack.c.l.b16 %v43
  %v154 = vunpack.c.h.b16 %v43
  %v155 = vunpack.c.l.b16 %v44
  %v156 = vunpack.c.h.b16 %v44
  %v157 = vunpack.c.l.b16 %v45
  %v158 = vunpack.c.h.b16 %v45
  %v159 = vunpack.c.l.b16 %v46
  %v160 = vunpack.c.h.b16 %v46
  %v161 = vunpack.c.l.b16 %v47
  %v162 = vunpack.c.h.b16 %v47
  %v163 = vunpack.c.l.b16 %v48
  %v164 = vunpack.c.h.b16 %v48
  %v165 = vunpack.c.l.b16 %v49
  %v166 = vunpack.c.h.b16 %v49
  %v167 = vunpack.c.l.b16 %v50
  %v168 = vunpack.c.h.b16 %v50
  %v169 = vunpack.c.l.b16 %v51
  %v170 = vunpack.c.h.b16 %v51
  %v171 = vunpack.c.l.b16 %v52
  %v172 = vunpack.c.h.b16 %v52
  %v173 = vunpack.c.l.b16 %v53
  %v174 = vunpack.c.h.b16 %v53
  %v175 = vunpack.c.l.b16 %v54
  %v176 = vunpack.c.h.b16 %v54
  %v177 = vunpack.c.l.b16 %v55
  %v178 = vunpack.c.h.b16 %v55
  %v179 = vunpack.c.l.b16 %v56
  %v180 = vunpack.c.h.b16 %v56
  %v181 = vunpack.c.l.b16 %v57
  %v182 = vunpack.c.h.b16 %v57
  %v183 = vunpack.c.l.b16 %v58
  %v184 = vunpack.c.h.b16 %v58
  %v185 = vunpack.c.l.b16 %v59
  %v186 = vunpack.c.h.b16 %v59
  %v187 = vunpack.c.l.b16 %v60
  %v188 = vunpack.c.h.b16 %v60
  %v189 = vunpack.c.l.b16 %v61
  %v190 = vunpack.c.h.b16 %v61
  %v191 = vunpack.c.l.b16 %v62
  %v192 = vunpack.c.h.b16 %v62
  %v193 = vunpack.c.l.b16 %v63
  %v194 = vunpack.c.h.b16 %v63
  %v195 = vunpack.c.l.b16 %v64
  %v196 = vunpack.c.h.b16 %v64
  %v197 = vunpack.c.l.b16 %v65
  %v198 = vunpack.c.h.b16 %v65
  %v199 = vunpack.c.l.b16 %v66
  %v200 = vunpack.c.h.b16 %v66
  %v201 = vunpack.c.l.b16 %v67
  %v202 = vunpack.c.h.b16 %v67
  %v203 = vunpack.c.l.b16 %v68
  %v204 = vunpack.c.h.b16 %v68
  %v205 = vunpack.c.l.b16 %v69
  %v206 = vunpack.c.h.b16 %v69
  %v207 = vunpack.c.l.b16 %v70
  %v208 = vunpack.c.h.b16 %v70
  %v209 = vunpack.c.l.b16 %v71
  %v210 = vunpack.c.h.b16 %v71
  %v211 = vunpack.c.l.b16 %v72
  %v212 = vunpack.c.h.b16 %v72
  %v213 = vunpack.c.l.b16 %v73
  %v214 = vunpack.c.h.b16 %v73
  %v215 = vunpack.c.l.b16 %v74
  %v216 = vunpack.c.h.b16 %v74
  %v217 = vpack.c.b16 %v157, %v153
  %v218 = vpack.c.b16 %v158, %v154
  %v219 = vpack.c.b16 %v159, %v155
  %v220 = vpack.c.b16 %v160, %v156
  %v221 = vpack.c.b16 %v165, %v161
  %v222 = vpack.c.b16 %v166, %v162
  %v223 = vpack.c.b16 %v167, %v163
  %v224 = vpack.c.b16 %v168, %v164
  %v225 = vpack.c.b16 %v173, %v169
  %v226 = vpack.c.b16 %v174, %v170
  %v227 = vpack.c.b16 %v175, %v171
  %v228 = vpack.c.b16 %v176, %v172
  %v229 = vpack.c.b16 %v181, %v177
  %v230 = vpack.c.b16 %v182, %v178
  %v231 = vpack.c.b16 %v183, %v179
  %v232 = vpack.c.b16 %v184, %v180
  %v233 = vpack.c.b16 %v189, %v185
  %v234 = vpack.c.b16 %v190, %v186
  %v235 = vpack.c.b16 %v191, %v187
  %v236 = vpack.c.b16 %v192, %v188
  %v237 = vpack.c.b16 %v197, %v193
  %v238 = vpack.c.b16 %v198, %v194
  %v239 = vpack.c.b16 %v199, %v195
  %v240 = vpack.c.b16 %v200, %v196
  %v241 = vpack.c.b16 %v205, %v201
  %v242 = vpack.c.b16 %v206, %v202
  %v243 = vpack.c.b16 %v207, %v203
  %v244 = vpack.c.b16 %v208, %v204
  %v245 = vpack.c.b16 %v213, %v209
  %v246 = vpack.c.b16 %v214, %v210
  %v247 = vpack.c.b16 %v215, %v211
  %v248 = vpack.c.b16 %v216, %v212
  %281 = vmatprep.subr.bf16.mxu0 %v218
  %282 = vmatpush1.bf16.msra.mxu0 %v217
  %283 = vmatprep.subr.bf16.mxu0 %v222
  %284 = vmatpush1.bf16.msra.mxu0 %v221
  %285 = vmatprep.subr.bf16.mxu0 %v226
  %286 = vmatpush1.bf16.msra.mxu0 %v225
  %287 = vmatprep.subr.bf16.mxu0 %v230
  %288 = vmatpush1.bf16.msra.mxu0 %v229
  %289 = vmatprep.subr.bf16.mxu0 %v234
  %290 = vmatpush1.bf16.msra.mxu0 %v233
  %291 = vmatprep.subr.bf16.mxu0 %v238
  %292 = vmatpush1.bf16.msra.mxu0 %v237
  %293 = vmatprep.subr.bf16.mxu0 %v242
  %294 = vmatpush1.bf16.msra.mxu0 %v241
  %295 = vmatprep.subr.bf16.mxu0 %v246
  %296 = vmatpush1.bf16.msra.mxu0 %v245
  %297 = vmatprep.subr.bf16.mxu0 0
  %298 = vmatpush1.bf16.msra.mxu0 0
  %299 = vmatprep.subr.bf16.mxu0 0
  %300 = vmatpush1.bf16.msra.mxu0 0
  %301 = vmatprep.subr.bf16.mxu0 0
  %302 = vmatpush1.bf16.msra.mxu0 0
  %303 = vmatprep.subr.bf16.mxu0 0
  %304 = vmatpush1.bf16.msra.mxu0 0
  %305 = vmatprep.subr.bf16.mxu0 0
  %306 = vmatpush1.bf16.msra.mxu0 0
  %307 = vmatprep.subr.bf16.mxu0 0
  %308 = vmatpush1.bf16.msra.mxu0 0
  %309 = vmatprep.subr.bf16.mxu0 0
  %310 = vmatpush1.bf16.msra.mxu0 0
  %311 = vmatprep.subr.bf16.mxu0 0
  %312 = vmatpush1.bf16.msra.mxu0 0
  %313 = vmatprep.mubr.bf16.mxu0 0
  %314 = vmatmul.mubr.bf16.gmra.mrb[0].mxu0 %v113
  %v315 = vpop.f32.mrb[0].mxu0
  %v316 = vadd.f32 %v80, %v315
  %v317 = vpop.f32.mrb[0].mxu0
  %v318 = vadd.f32 %v84, %v317
  %v319 = vpop.f32.mrb[0].mxu0
  %v320 = vadd.f32 %v80, %v319
  %v321 = vpop.f32.mrb[0].mxu0
  %v322 = vadd.f32 %v84, %v321
  %323 = vmatprep.mubr.bf16.mxu0 0
  %324 = vmatmul.mubr.bf16.gmra.mrb[0].mxu0 %v114
  %v325 = vpop.f32.mrb[0].mxu0
  %v326 = vadd.f32 %v80, %v325
  %v327 = vpop.f32.mrb[0].mxu0
  %v328 = vadd.f32 %v84, %v327
  %v329 = vpop.f32.mrb[0].mxu0
  %v330 = vadd.f32 %v80, %v329
  %v331 = vpop.f32.mrb[0].mxu0
  %v332 = vadd.f32 %v84, %v331
  %333 = vmatprep.mubr.bf16.mxu0 0
  %334 = vmatmul.mubr.bf16.gmra.mrb[0].mxu0 %v115
  %v335 = vpop.f32.mrb[0].mxu0
  %v336 = vadd.f32 %v80, %v335
  %v337 = vpop.f32.mrb[0].mxu0
  %v338 = vadd.f32 %v84, %v337
  %v339 = vpop.f32.mrb[0].mxu0
  %v340 = vadd.f32 %v80, %v339
  %v341 = vpop.f32.mrb[0].mxu0
  %v342 = vadd.f32 %v84, %v341
  %343 = vmatprep.mubr.bf16.mxu0 0
  %344 = vmatmul.mubr.bf16.gmra.mrb[0].mxu0 %v116
  %v345 = vpop.f32.mrb[0].mxu0
  %v346 = vadd.f32 %v80, %v345
  %v347 = vpop.f32.mrb[0].mxu0
  %v348 = vadd.f32 %v84, %v347
  %v349 = vpop.f32.mrb[0].mxu0
  %v350 = vadd.f32 %v80, %v349
  %v351 = vpop.f32.mrb[0].mxu0
  %v352 = vadd.f32 %v84, %v351
  %353 = vdwg.mxu0
  %354 = vmatprep.subr.bf16.mxu0 %v220
  %355 = vmatpush1.bf16.msra.mxu0 %v219
  %356 = vmatprep.subr.bf16.mxu0 %v224
  %357 = vmatpush1.bf16.msra.mxu0 %v223
  %358 = vmatprep.subr.bf16.mxu0 %v228
  %359 = vmatpush1.bf16.msra.mxu0 %v227
  %360 = vmatprep.subr.bf16.mxu0 %v232
  %361 = vmatpush1.bf16.msra.mxu0 %v231
  %362 = vmatprep.subr.bf16.mxu0 %v236
  %363 = vmatpush1.bf16.msra.mxu0 %v235
  %364 = vmatprep.subr.bf16.mxu0 %v240
  %365 = vmatpush1.bf16.msra.mxu0 %v239
  %366 = vmatprep.subr.bf16.mxu0 %v244
  %367 = vmatpush1.bf16.msra.mxu0 %v243
  %368 = vmatprep.subr.bf16.mxu0 %v248
  %369 = vmatpush1.bf16.msra.mxu0 %v247
  %370 = vmatprep.subr.bf16.mxu0 0
  %371 = vmatpush1.bf16.msra.mxu0 0
  %372 = vmatprep.subr.bf16.mxu0 0
  %373 = vmatpush1.bf16.msra.mxu0 0
  %374 = vmatprep.subr.bf16.mxu0 0
  %375 = vmatpush1.bf16.msra.mxu0 0
  %376 = vmatprep.subr.bf16.mxu0 0
  %377 = vmatpush1.bf16.msra.mxu0 0
  %378 = vmatprep.subr.bf16.mxu0 0
  %379 = vmatpush1.bf16.msra.mxu0 0
  %380 = vmatprep.subr.bf16.mxu0 0
  %381 = vmatpush1.bf16.msra.mxu0 0
  %382 = vmatprep.subr.bf16.mxu0 0
  %383 = vmatpush1.bf16.msra.mxu0 0
  %384 = vmatprep.subr.bf16.mxu0 0
  %385 = vmatpush1.bf16.msra.mxu0 0
  %386 = vmatprep.mubr.bf16.mxu0 0
  %387 = vmatmul.mubr.bf16.gmra.mrb[0].mxu0 %v113
  %v388 = vpop.f32.mrb[0].mxu0
  %v389 = vadd.f32 %v88, %v388
  %v390 = vpop.f32.mrb[0].mxu0
  %v391 = vadd.f32 %v92, %v390
  %v392 = vpop.f32.mrb[0].mxu0
  %v393 = vadd.f32 %v88, %v392
  %v394 = vpop.f32.mrb[0].mxu0
  %v395 = vadd.f32 %v92, %v394
  %396 = vmatprep.mubr.bf16.mxu0 0
  %397 = vmatmul.mubr.bf16.gmra.mrb[0].mxu0 %v114
  %v398 = vpop.f32.mrb[0].mxu0
  %v399 = vadd.f32 %v88, %v398
  %v400 = vpop.f32.mrb[0].mxu0
  %v401 = vadd.f32 %v92, %v400
  %v402 = vpop.f32.mrb[0].mxu0
  %v403 = vadd.f32 %v88, %v402
  %v404 = vpop.f32.mrb[0].mxu0
  %v405 = vadd.f32 %v92, %v404
  %406 = vmatprep.mubr.bf16.mxu0 0
  %407 = vmatmul.mubr.bf16.gmra.mrb[0].mxu0 %v115
  %v408 = vpop.f32.mrb[0].mxu0
  %v409 = vadd.f32 %v88, %v408
  %v410 = vpop.f32.mrb[0].mxu0
  %v411 = vadd.f32 %v92, %v410
  %v412 = vpop.f32.mrb[0].mxu0
  %v413 = vadd.f32 %v88, %v412
  %v414 = vpop.f32.mrb[0].mxu0
  %v415 = vadd.f32 %v92, %v414
  %416 = vmatprep.mubr.bf16.mxu0 0
  %417 = vmatmul.mubr.bf16.gmra.mrb[0].mxu0 %v116
  %v418 = vpop.f32.mrb[0].mxu0
  %v419 = vadd.f32 %v88, %v418
  %v420 = vpop.f32.mrb[0].mxu0
  %v421 = vadd.f32 %v92, %v420
  %v422 = vpop.f32.mrb[0].mxu0
  %v423 = vadd.f32 %v88, %v422
  %v424 = vpop.f32.mrb[0].mxu0
  %v425 = vadd.f32 %v92, %v424
  %426 = vdwg.mxu0
  %427 = vst [vmem:[#allocation2] sm:$0xff] %v316
  %428 = vst [vmem:[#allocation2 + $0x8] sm:$0xff] %v318
  %429 = vst [vmem:[#allocation2 + $0x10] sm:$0xff] %v389
  %430 = vst [vmem:[#allocation2 + $0x18] sm:$0xff] %v391
  %431 = vst [vmem:[#allocation2 + $0x20] sm:$0xff] %v320
  %432 = vst [vmem:[#allocation2 + $0x28] sm:$0xff] %v322
  %433 = vst [vmem:[#allocation2 + $0x30] sm:$0xff] %v393
  %434 = vst [vmem:[#allocation2 + $0x38] sm:$0xff] %v395
  %435 = vst [vmem:[#allocation2 + $0x40] sm:$0xff] %v326
  %436 = vst [vmem:[#allocation2 + $0x48] sm:$0xff] %v328
  %437 = vst [vmem:[#allocation2 + $0x50] sm:$0xff] %v399
  %438 = vst [vmem:[#allocation2 + $0x58] sm:$0xff] %v401
  %439 = vst [vmem:[#allocation2 + $0x60] sm:$0xff] %v330
  %440 = vst [vmem:[#allocation2 + $0x68] sm:$0xff] %v332
  %441 = vst [vmem:[#allocation2 + $0x70] sm:$0xff] %v403
  %442 = vst [vmem:[#allocation2 + $0x78] sm:$0xff] %v405
  %443 = vst [vmem:[#allocation2 + $0x80] sm:$0xff] %v336
  %444 = vst [vmem:[#allocation2 + $0x88] sm:$0xff] %v338
  %445 = vst [vmem:[#allocation2 + $0x90] sm:$0xff] %v409
  %446 = vst [vmem:[#allocation2 + $0x98] sm:$0xff] %v411
  %447 = vst [vmem:[#allocation2 + $0xa0] sm:$0xff] %v340
  %448 = vst [vmem:[#allocation2 + $0xa8] sm:$0xff] %v342
  %449 = vst [vmem:[#allocation2 + $0xb0] sm:$0xff] %v413
  %450 = vst [vmem:[#allocation2 + $0xb8] sm:$0xff] %v415
  %451 = vst [vmem:[#allocation2 + $0xc0] sm:$0xff] %v346
  %452 = vst [vmem:[#allocation2 + $0xc8] sm:$0xff] %v348
  %453 = vst [vmem:[#allocation2 + $0xd0] sm:$0xff] %v419
  %454 = vst [vmem:[#allocation2 + $0xd8] sm:$0xff] %v421
  %455 = vst [vmem:[#allocation2 + $0xe0] sm:$0xff] %v350
  %456 = vst [vmem:[#allocation2 + $0xe8] sm:$0xff] %v352
  %457 = vst [vmem:[#allocation2 + $0xf0] sm:$0xff] %v423
  %458 = vst [vmem:[#allocation2 + $0xf8] sm:$0xff] %v425
  %v459 = vld [vmem:[%s7] sm:$0xff]
  %v460 = vld [vmem:[%s8] sm:$0xff]
  %s461 = smul.u32 0, 4
  %s462 = smul.addr %s461, 8
  %s463 = scalar_lea.vmem [#allocation2], %s462
  %v464 = vld [vmem:[%s463] sm:$0xff]
  %v465 = vld [vmem:[%s463 + $0x8] sm:$0xff]
  %v466 = vld [vmem:[%s463 + $0x10] sm:$0xff]
  %v467 = vld [vmem:[%s463 + $0x18] sm:$0xff]
  %v468 = vpack.c.bf16 %v459, %v459
  %v469 = vld [vmem:[%s2] sm:$0xff]
  %v470 = vld [vmem:[%s2 + $0x8] sm:$0xff]
  %v471 = vld [vmem:[%s2 + $0x10] sm:$0xff]
  %v472 = vld [vmem:[%s2 + $0x18] sm:$0xff]
  %v473 = vld [vmem:[%s2 + $0x20] sm:$0xff]
  %v474 = vld [vmem:[%s2 + $0x28] sm:$0xff]
  %v475 = vld [vmem:[%s2 + $0x30] sm:$0xff]
  %v476 = vld [vmem:[%s2 + $0x38] sm:$0xff]
  %v477 = vld [vmem:[%s2 + $0x40] sm:$0xff]
  %v478 = vld [vmem:[%s2 + $0x48] sm:$0xff]
  %v479 = vld [vmem:[%s2 + $0x50] sm:$0xff]
  %v480 = vld [vmem:[%s2 + $0x58] sm:$0xff]
  %v481 = vld [vmem:[%s2 + $0x60] sm:$0xff]
  %v482 = vld [vmem:[%s2 + $0x68] sm:$0xff]
  %v483 = vld [vmem:[%s2 + $0x70] sm:$0xff]
  %v484 = vld [vmem:[%s2 + $0x78] sm:$0xff]
  %v485 = vld [vmem:[%s2 + $0x80] sm:$0xff]
  %v486 = vld [vmem:[%s2 + $0x88] sm:$0xff]
  %v487 = vld [vmem:[%s2 + $0x90] sm:$0xff]
  %v488 = vld [vmem:[%s2 + $0x98] sm:$0xff]
  %v489 = vld [vmem:[%s2 + $0xa0] sm:$0xff]
  %v490 = vld [vmem:[%s2 + $0xa8] sm:$0xff]
  %v491 = vld [vmem:[%s2 + $0xb0] sm:$0xff]
  %v492 = vld [vmem:[%s2 + $0xb8] sm:$0xff]
  %v493 = vld [vmem:[%s2 + $0xc0] sm:$0xff]
  %v494 = vld [vmem:[%s2 + $0xc8] sm:$0xff]
  %v495 = vld [vmem:[%s2 + $0xd0] sm:$0xff]
  %v496 = vld [vmem:[%s2 + $0xd8] sm:$0xff]
  %v497 = vld [vmem:[%s2 + $0xe0] sm:$0xff]
  %v498 = vld [vmem:[%s2 + $0xe8] sm:$0xff]
  %v499 = vld [vmem:[%s2 + $0xf0] sm:$0xff]
  %v500 = vld [vmem:[%s2 + $0xf8] sm:$0xff]
  %v533 = vunpack.c.l.b16 %v469
  %v534 = vunpack.c.h.b16 %v469
  %v535 = vunpack.c.l.b16 %v470
  %v536 = vunpack.c.h.b16 %v470
  %v537 = vunpack.c.l.b16 %v471
  %v538 = vunpack.c.h.b16 %v471
  %v539 = vunpack.c.l.b16 %v472
  %v540 = vunpack.c.h.b16 %v472
  %v541 = vunpack.c.l.b16 %v473
  %v542 = vunpack.c.h.b16 %v473
  %v543 = vunpack.c.l.b16 %v474
  %v544 = vunpack.c.h.b16 %v474
  %v545 = vunpack.c.l.b16 %v475
  %v546 = vunpack.c.h.b16 %v475
  %v547 = vunpack.c.l.b16 %v476
  %v548 = vunpack.c.h.b16 %v476
  %v549 = vunpack.c.l.b16 %v477
  %v550 = vunpack.c.h.b16 %v477
  %v551 = vunpack.c.l.b16 %v478
  %v552 = vunpack.c.h.b16 %v478
  %v553 = vunpack.c.l.b16 %v479
  %v554 = vunpack.c.h.b16 %v479
  %v555 = vunpack.c.l.b16 %v480
  %v556 = vunpack.c.h.b16 %v480
  %v557 = vunpack.c.l.b16 %v481
  %v558 = vunpack.c.h.b16 %v481
  %v559 = vunpack.c.l.b16 %v482
  %v560 = vunpack.c.h.b16 %v482
  %v561 = vunpack.c.l.b16 %v483
  %v562 = vunpack.c.h.b16 %v483
  %v563 = vunpack.c.l.b16 %v484
  %v564 = vunpack.c.h.b16 %v484
  %v565 = vunpack.c.l.b16 %v485
  %v566 = vunpack.c.h.b16 %v485
  %v567 = vunpack.c.l.b16 %v486
  %v568 = vunpack.c.h.b16 %v486
  %v569 = vunpack.c.l.b16 %v487
  %v570 = vunpack.c.h.b16 %v487
  %v571 = vunpack.c.l.b16 %v488
  %v572 = vunpack.c.h.b16 %v488
  %v573 = vunpack.c.l.b16 %v489
  %v574 = vunpack.c.h.b16 %v489
  %v575 = vunpack.c.l.b16 %v490
  %v576 = vunpack.c.h.b16 %v490
  %v577 = vunpack.c.l.b16 %v491
  %v578 = vunpack.c.h.b16 %v491
  %v579 = vunpack.c.l.b16 %v492
  %v580 = vunpack.c.h.b16 %v492
  %v581 = vunpack.c.l.b16 %v493
  %v582 = vunpack.c.h.b16 %v493
  %v583 = vunpack.c.l.b16 %v494
  %v584 = vunpack.c.h.b16 %v494
  %v585 = vunpack.c.l.b16 %v495
  %v586 = vunpack.c.h.b16 %v495
  %v587 = vunpack.c.l.b16 %v496
  %v588 = vunpack.c.h.b16 %v496
  %v589 = vunpack.c.l.b16 %v497
  %v590 = vunpack.c.h.b16 %v497
  %v591 = vunpack.c.l.b16 %v498
  %v592 = vunpack.c.h.b16 %v498
  %v593 = vunpack.c.l.b16 %v499
  %v594 = vunpack.c.h.b16 %v499
  %v595 = vunpack.c.l.b16 %v500
  %v596 = vunpack.c.h.b16 %v500
  %v597 = vpack.c.b16 %v537, %v533
  %v598 = vpack.c.b16 %v538, %v534
  %v599 = vpack.c.b16 %v539, %v535
  %v600 = vpack.c.b16 %v540, %v536
  %v601 = vpack.c.b16 %v545, %v541
  %v602 = vpack.c.b16 %v546, %v542
  %v603 = vpack.c.b16 %v547, %v543
  %v604 = vpack.c.b16 %v548, %v544
  %v605 = vpack.c.b16 %v553, %v549
  %v606 = vpack.c.b16 %v554, %v550
  %v607 = vpack.c.b16 %v555, %v551
  %v608 = vpack.c.b16 %v556, %v552
  %v609 = vpack.c.b16 %v561, %v557
  %v610 = vpack.c.b16 %v562, %v558
  %v611 = vpack.c.b16 %v563, %v559
  %v612 = vpack.c.b16 %v564, %v560
  %v613 = vpack.c.b16 %v569, %v565
  %v614 = vpack.c.b16 %v570, %v566
  %v615 = vpack.c.b16 %v571, %v567
  %v616 = vpack.c.b16 %v572, %v568
  %v617 = vpack.c.b16 %v577, %v573
  %v618 = vpack.c.b16 %v578, %v574
  %v619 = vpack.c.b16 %v579, %v575
  %v620 = vpack.c.b16 %v580, %v576
  %v621 = vpack.c.b16 %v585, %v581
  %v622 = vpack.c.b16 %v586, %v582
  %v623 = vpack.c.b16 %v587, %v583
  %v624 = vpack.c.b16 %v588, %v584
  %v625 = vpack.c.b16 %v593, %v589
  %v626 = vpack.c.b16 %v594, %v590
  %v627 = vpack.c.b16 %v595, %v591
  %v628 = vpack.c.b16 %v596, %v592
  %661 = vmatprep.subr.bf16.mxu0 %v598
  %662 = vmatpush1.bf16.msra.mxu0 %v597
  %663 = vmatprep.subr.bf16.mxu0 %v602
  %664 = vmatpush1.bf16.msra.mxu0 %v601
  %665 = vmatprep.subr.bf16.mxu0 %v606
  %666 = vmatpush1.bf16.msra.mxu0 %v605
  %667 = vmatprep.subr.bf16.mxu0 %v610
  %668 = vmatpush1.bf16.msra.mxu0 %v609
  %669 = vmatprep.subr.bf16.mxu0 %v614
  %670 = vmatpush1.bf16.msra.mxu0 %v613
  %671 = vmatprep.subr.bf16.mxu0 %v618
  %672 = vmatpush1.bf16.msra.mxu0 %v617
  %673 = vmatprep.subr.bf16.mxu0 %v622
  %674 = vmatpush1.bf16.msra.mxu0 %v621
  %675 = vmatprep.subr.bf16.mxu0 %v626
  %676 = vmatpush1.bf16.msra.mxu0 %v625
  %677 = vmatprep.subr.bf16.mxu0 0
  %678 = vmatpush1.bf16.msra.mxu0 0
  %679 = vmatprep.subr.bf16.mxu0 0
  %680 = vmatpush1.bf16.msra.mxu0 0
  %681 = vmatprep.subr.bf16.mxu0 0
  %682 = vmatpush1.bf16.msra.mxu0 0
  %683 = vmatprep.subr.bf16.mxu0 0
  %684 = vmatpush1.bf16.msra.mxu0 0
  %685 = vmatprep.subr.bf16.mxu0 0
  %686 = vmatpush1.bf16.msra.mxu0 0
  %687 = vmatprep.subr.bf16.mxu0 0
  %688 = vmatpush1.bf16.msra.mxu0 0
  %689 = vmatprep.subr.bf16.mxu0 0
  %690 = vmatpush1.bf16.msra.mxu0 0
  %691 = vmatprep.subr.bf16.mxu0 0
  %692 = vmatpush1.bf16.msra.mxu0 0
  %693 = vmatprep.mubr.bf16.mxu0 0
  %694 = vmatmul.mubr.bf16.gmra.mrb[0].mxu0 %v468
  %v695 = vpop.f32.mrb[0].mxu0
  %v696 = vadd.f32 0.0, %v695
  %v697 = vpop.f32.mrb[0].mxu0
  %v698 = vadd.f32 0.0, %v697
  %v699 = vpop.f32.mrb[0].mxu0
  %v700 = vpop.f32.mrb[0].mxu0
  %701 = vdwg.mxu0
  %702 = vmatprep.subr.bf16.mxu0 %v600
  %703 = vmatpush1.bf16.msra.mxu0 %v599
  %704 = vmatprep.subr.bf16.mxu0 %v604
  %705 = vmatpush1.bf16.msra.mxu0 %v603
  %706 = vmatprep.subr.bf16.mxu0 %v608
  %707 = vmatpush1.bf16.msra.mxu0 %v607
  %708 = vmatprep.subr.bf16.mxu0 %v612
  %709 = vmatpush1.bf16.msra.mxu0 %v611
  %710 = vmatprep.subr.bf16.mxu0 %v616
  %711 = vmatpush1.bf16.msra.mxu0 %v615
  %712 = vmatprep.subr.bf16.mxu0 %v620
  %713 = vmatpush1.bf16.msra.mxu0 %v619
  %714 = vmatprep.subr.bf16.mxu0 %v624
  %715 = vmatpush1.bf16.msra.mxu0 %v623
  %716 = vmatprep.subr.bf16.mxu0 %v628
  %717 = vmatpush1.bf16.msra.mxu0 %v627
  %718 = vmatprep.subr.bf16.mxu0 0
  %719 = vmatpush1.bf16.msra.mxu0 0
  %720 = vmatprep.subr.bf16.mxu0 0
  %721 = vmatpush1.bf16.msra.mxu0 0
  %722 = vmatprep.subr.bf16.mxu0 0
  %723 = vmatpush1.bf16.msra.mxu0 0
  %724 = vmatprep.subr.bf16.mxu0 0
  %725 = vmatpush1.bf16.msra.mxu0 0
  %726 = vmatprep.subr.bf16.mxu0 0
  %727 = vmatpush1.bf16.msra.mxu0 0
  %728 = vmatprep.subr.bf16.mxu0 0
  %729 = vmatpush1.bf16.msra.mxu0 0
  %730 = vmatprep.subr.bf16.mxu0 0
  %731 = vmatpush1.bf16.msra.mxu0 0
  %732 = vmatprep.subr.bf16.mxu0 0
  %733 = vmatpush1.bf16.msra.mxu0 0
  %734 = vmatprep.mubr.bf16.mxu0 0
  %735 = vmatmul.mubr.bf16.gmra.mrb[0].mxu0 %v468
  %v736 = vpop.f32.mrb[0].mxu0
  %v737 = vadd.f32 0.0, %v736
  %v738 = vpop.f32.mrb[0].mxu0
  %v739 = vadd.f32 0.0, %v738
  %v740 = vpop.f32.mrb[0].mxu0
  %v741 = vpop.f32.mrb[0].mxu0
  %742 = vdwg.mxu0
  %v743 = vadd.f32 %v464, %v696
  %v744 = vadd.f32 %v465, %v698
  %v745 = vadd.f32 %v466, %v737
  %v746 = vadd.f32 %v467, %v739
  %v747 = vxor.u32 %v743, 2147483648
  %v748 = vmul.f32 %v747, 1.442695
  %v749 = vpow.pop %v748
  %v750 = vadd.f32 %v749, 1.0
  %v751 = vrcp.pop %v750
  %v752 = vmul.f32 1.0, %v751
  %v753 = vxor.u32 %v744, 2147483648
  %v754 = vmul.f32 %v753, 1.442695
  %v755 = vpow.pop %v754
  %v756 = vadd.f32 %v755, 1.0
  %v757 = vrcp.pop %v756
  %v758 = vmul.f32 1.0, %v757
  %v759 = vtanh.pop %v745
  %v760 = vxor.u32 %v746, 2147483648
  %v761 = vmul.f32 %v760, 1.442695
  %v762 = vpow.pop %v761
  %v763 = vadd.f32 %v762, 1.0
  %v764 = vrcp.pop %v763
  %v765 = vmul.f32 1.0, %v764
  %v766 = vmul.f32 %v758, %v460
  %v767 = vmul.f32 %v752, %v759
  %v768 = vadd.f32 %v766, %v767
  %v769 = vtanh.pop %v768
  %v770 = vmul.f32 %v765, %v769
  %771 = vst [vmem:[#allocation3] sm:$0xff] %v770
  %s772 = smul.u32 1, 4
  %s773 = smul.addr %s772, 8
  %s774 = scalar_lea.vmem [#allocation2], %s773
  %v775 = vld [vmem:[%s774] sm:$0xff]
  %v776 = vld [vmem:[%s774 + $0x8] sm:$0xff]
  %v777 = vld [vmem:[%s774 + $0x10] sm:$0xff]
  %v778 = vld [vmem:[%s774 + $0x18] sm:$0xff]
  %v779 = vpack.c.bf16 %v770, %v770
  %v780 = vld [vmem:[%s2] sm:$0xff]
  %v781 = vld [vmem:[%s2 + $0x8] sm:$0xff]
  %v782 = vld [vmem:[%s2 + $0x10] sm:$0xff]
  %v783 = vld [vmem:[%s2 + $0x18] sm:$0xff]
  %v784 = vld [vmem:[%s2 + $0x20] sm:$0xff]
  %v785 = vld [vmem:[%s2 + $0x28] sm:$0xff]
  %v786 = vld [vmem:[%s2 + $0x30] sm:$0xff]
  %v787 = vld [vmem:[%s2 + $0x38] sm:$0xff]
  %v788 = vld [vmem:[%s2 + $0x40] sm:$0xff]
  %v789 = vld [vmem:[%s2 + $0x48] sm:$0xff]
  %v790 = vld [vmem:[%s2 + $0x50] sm:$0xff]
  %v791 = vld [vmem:[%s2 + $0x58] sm:$0xff]
  %v792 = vld [vmem:[%s2 + $0x60] sm:$0xff]
  %v793 = vld [vmem:[%s2 + $0x68] sm:$0xff]
  %v794 = vld [vmem:[%s2 + $0x70] sm:$0xff]
  %v795 = vld [vmem:[%s2 + $0x78] sm:$0xff]
  %v796 = vld [vmem:[%s2 + $0x80] sm:$0xff]
  %v797 = vld [vmem:[%s2 + $0x88] sm:$0xff]
  %v798 = vld [vmem:[%s2 + $0x90] sm:$0xff]
  %v799 = vld [vmem:[%s2 + $0x98] sm:$0xff]
  %v800 = vld [vmem:[%s2 + $0xa0] sm:$0xff]
  %v801 = vld [vmem:[%s2 + $0xa8] sm:$0xff]
  %v802 = vld [vmem:[%s2 + $0xb0] sm:$0xff]
  %v803 = vld [vmem:[%s2 + $0xb8] sm:$0xff]
  %v804 = vld [vmem:[%s2 + $0xc0] sm:$0xff]
  %v805 = vld [vmem:[%s2 + $0xc8] sm:$0xff]
  %v806 = vld [vmem:[%s2 + $0xd0] sm:$0xff]
  %v807 = vld [vmem:[%s2 + $0xd8] sm:$0xff]
  %v808 = vld [vmem:[%s2 + $0xe0] sm:$0xff]
  %v809 = vld [vmem:[%s2 + $0xe8] sm:$0xff]
  %v810 = vld [vmem:[%s2 + $0xf0] sm:$0xff]
  %v811 = vld [vmem:[%s2 + $0xf8] sm:$0xff]
  %v844 = vunpack.c.l.b16 %v780
  %v845 = vunpack.c.h.b16 %v780
  %v846 = vunpack.c.l.b16 %v781
  %v847 = vunpack.c.h.b16 %v781
  %v848 = vunpack.c.l.b16 %v782
  %v849 = vunpack.c.h.b16 %v782
  %v850 = vunpack.c.l.b16 %v783
  %v851 = vunpack.c.h.b16 %v783
  %v852 = vunpack.c.l.b16 %v784
  %v853 = vunpack.c.h.b16 %v784
  %v854 = vunpack.c.l.b16 %v785
  %v855 = vunpack.c.h.b16 %v785
  %v856 = vunpack.c.l.b16 %v786
  %v857 = vunpack.c.h.b16 %v786
  %v858 = vunpack.c.l.b16 %v787
  %v859 = vunpack.c.h.b16 %v787
  %v860 = vunpack.c.l.b16 %v788
  %v861 = vunpack.c.h.b16 %v788
  %v862 = vunpack.c.l.b16 %v789
  %v863 = vunpack.c.h.b16 %v789
  %v864 = vunpack.c.l.b16 %v790
  %v865 = vunpack.c.h.b16 %v790
  %v866 = vunpack.c.l.b16 %v791
  %v867 = vunpack.c.h.b16 %v791
  %v868 = vunpack.c.l.b16 %v792
  %v869 = vunpack.c.h.b16 %v792
  %v870 = vunpack.c.l.b16 %v793
  %v871 = vunpack.c.h.b16 %v793
  %v872 = vunpack.c.l.b16 %v794
  %v873 = vunpack.c.h.b16 %v794
  %v874 = vunpack.c.l.b16 %v795
  %v875 = vunpack.c.h.b16 %v795
  %v876 = vunpack.c.l.b16 %v796
  %v877 = vunpack.c.h.b16 %v796
  %v878 = vunpack.c.l.b16 %v797
  %v879 = vunpack.c.h.b16 %v797
  %v880 = vunpack.c.l.b16 %v798
  %v881 = vunpack.c.h.b16 %v798
  %v882 = vunpack.c.l.b16 %v799
  %v883 = vunpack.c.h.b16 %v799
  %v884 = vunpack.c.l.b16 %v800
  %v885 = vunpack.c.h.b16 %v800
  %v886 = vunpack.c.l.b16 %v801
  %v887 = vunpack.c.h.b16 %v801
  %v888 = vunpack.c.l.b16 %v802
  %v889 = vunpack.c.h.b16 %v802
  %v890 = vunpack.c.l.b16 %v803
  %v891 = vunpack.c.h.b16 %v803
  %v892 = vunpack.c.l.b16 %v804
  %v893 = vunpack.c.h.b16 %v804
  %v894 = vunpack.c.l.b16 %v805
  %v895 = vunpack.c.h.b16 %v805
  %v896 = vunpack.c.l.b16 %v806
  %v897 = vunpack.c.h.b16 %v806
  %v898 = vunpack.c.l.b16 %v807
  %v899 = vunpack.c.h.b16 %v807
  %v900 = vunpack.c.l.b16 %v808
  %v901 = vunpack.c.h.b16 %v808
  %v902 = vunpack.c.l.b16 %v809
  %v903 = vunpack.c.h.b16 %v809
  %v904 = vunpack.c.l.b16 %v810
  %v905 = vunpack.c.h.b16 %v810
  %v906 = vunpack.c.l.b16 %v811
  %v907 = vunpack.c.h.b16 %v811
  %v908 = vpack.c.b16 %v848, %v844
  %v909 = vpack.c.b16 %v849, %v845
  %v910 = vpack.c.b16 %v850, %v846
  %v911 = vpack.c.b16 %v851, %v847
  %v912 = vpack.c.b16 %v856, %v852
  %v913 = vpack.c.b16 %v857, %v853
  %v914 = vpack.c.b16 %v858, %v854
  %v915 = vpack.c.b16 %v859, %v855
  %v916 = vpack.c.b16 %v864, %v860
  %v917 = vpack.c.b16 %v865, %v861
  %v918 = vpack.c.b16 %v866, %v862
  %v919 = vpack.c.b16 %v867, %v863
  %v920 = vpack.c.b16 %v872, %v868
  %v921 = vpack.c.b16 %v873, %v869
  %v922 = vpack.c.b16 %v874, %v870
  %v923 = vpack.c.b16 %v875, %v871
  %v924 = vpack.c.b16 %v880, %v876
  %v925 = vpack.c.b16 %v881, %v877
  %v926 = vpack.c.b16 %v882, %v878
  %v927 = vpack.c.b16 %v883, %v879
  %v928 = vpack.c.b16 %v888, %v884
  %v929 = vpack.c.b16 %v889, %v885
  %v930 = vpack.c.b16 %v890, %v886
  %v931 = vpack.c.b16 %v891, %v887
  %v932 = vpack.c.b16 %v896, %v892
  %v933 = vpack.c.b16 %v897, %v893
  %v934 = vpack.c.b16 %v898, %v894
  %v935 = vpack.c.b16 %v899, %v895
  %v936 = vpack.c.b16 %v904, %v900
  %v937 = vpack.c.b16 %v905, %v901
  %v938 = vpack.c.b16 %v906, %v902
  %v939 = vpack.c.b16 %v907, %v903
  %972 = vmatprep.subr.bf16.mxu0 %v909
  %973 = vmatpush1.bf16.msra.mxu0 %v908
  %974 = vmatprep.subr.bf16.mxu0 %v913
  %975 = vmatpush1.bf16.msra.mxu0 %v912
  %976 = vmatprep.subr.bf16.mxu0 %v917
  %977 = vmatpush1.bf16.msra.mxu0 %v916
  %978 = vmatprep.subr.bf16.mxu0 %v921
  %979 = vmatpush1.bf16.msra.mxu0 %v920
  %980 = vmatprep.subr.bf16.mxu0 %v925
  %981 = vmatpush1.bf16.msra.mxu0 %v924
  %982 = vmatprep.subr.bf16.mxu0 %v929
  %983 = vmatpush1.bf16.msra.mxu0 %v928
  %984 = vmatprep.subr.bf16.mxu0 %v933
  %985 = vmatpush1.bf16.msra.mxu0 %v932
  %986 = vmatprep.subr.bf16.mxu0 %v937
  %987 = vmatpush1.bf16.msra.mxu0 %v936
  %988 = vmatprep.subr.bf16.mxu0 0
  %989 = vmatpush1.bf16.msra.mxu0 0
  %990 = vmatprep.subr.bf16.mxu0 0
  %991 = vmatpush1.bf16.msra.mxu0 0
  %992 = vmatprep.subr.bf16.mxu0 0
  %993 = vmatpush1.bf16.msra.mxu0 0
  %994 = vmatprep.subr.bf16.mxu0 0
  %995 = vmatpush1.bf16.msra.mxu0 0
  %996 = vmatprep.subr.bf16.mxu0 0
  %997 = vmatpush1.bf16.msra.mxu0 0
  %998 = vmatprep.subr.bf16.mxu0 0
  %999 = vmatpush1.bf16.msra.mxu0 0
  %1000 = vmatprep.subr.bf16.mxu0 0
  %1001 = vmatpush1.bf16.msra.mxu0 0
  %1002 = vmatprep.subr.bf16.mxu0 0
  %1003 = vmatpush1.bf16.msra.mxu0 0
  %1004 = vmatprep.mubr.bf16.mxu0 0
  %1005 = vmatmul.mubr.bf16.gmra.mrb[0].mxu0 %v779
  %v1006 = vpop.f32.mrb[0].mxu0
  %v1007 = vadd.f32 0.0, %v1006
  %v1008 = vpop.f32.mrb[0].mxu0
  %v1009 = vadd.f32 0.0, %v1008
  %v1010 = vpop.f32.mrb[0].mxu0
  %v1011 = vpop.f32.mrb[0].mxu0
  %1012 = vdwg.mxu0
  %1013 = vmatprep.subr.bf16.mxu0 %v911
  %1014 = vmatpush1.bf16.msra.mxu0 %v910
  %1015 = vmatprep.subr.bf16.mxu0 %v915
  %1016 = vmatpush1.bf16.msra.mxu0 %v914
  %1017 = vmatprep.subr.bf16.mxu0 %v919
  %1018 = vmatpush1.bf16.msra.mxu0 %v918
  %1019 = vmatprep.subr.bf16.mxu0 %v923
  %1020 = vmatpush1.bf16.msra.mxu0 %v922
  %1021 = vmatprep.subr.bf16.mxu0 %v927
  %1022 = vmatpush1.bf16.msra.mxu0 %v926
  %1023 = vmatprep.subr.bf16.mxu0 %v931
  %1024 = vmatpush1.bf16.msra.mxu0 %v930
  %1025 = vmatprep.subr.bf16.mxu0 %v935
  %1026 = vmatpush1.bf16.msra.mxu0 %v934
  %1027 = vmatprep.subr.bf16.mxu0 %v939
  %1028 = vmatpush1.bf16.msra.mxu0 %v938
  %1029 = vmatprep.subr.bf16.mxu0 0
  %1030 = vmatpush1.bf16.msra.mxu0 0
  %1031 = vmatprep.subr.bf16.mxu0 0
  %1032 = vmatpush1.bf16.msra.mxu0 0
  %1033 = vmatprep.subr.bf16.mxu0 0
  %1034 = vmatpush1.bf16.msra.mxu0 0
  %1035 = vmatprep.subr.bf16.mxu0 0
  %1036 = vmatpush1.bf16.msra.mxu0 0
  %1037 = vmatprep.subr.bf16.mxu0 0
  %1038 = vmatpush1.bf16.msra.mxu0 0
  %1039 = vmatprep.subr.bf16.mxu0 0
  %1040 = vmatpush1.bf16.msra.mxu0 0
  %1041 = vmatprep.subr.bf16.mxu0 0
  %1042 = vmatpush1.bf16.msra.mxu0 0
  %1043 = vmatprep.subr.bf16.mxu0 0
  %1044 = vmatpush1.bf16.msra.mxu0 0
  %1045 = vmatprep.mubr.bf16.mxu0 0
  %1046 = vmatmul.mubr.bf16.gmra.mrb[0].mxu0 %v779
  %v1047 = vpop.f32.mrb[0].mxu0
  %v1048 = vadd.f32 0.0, %v1047
  %v1049 = vpop.f32.mrb[0].mxu0
  %v1050 = vadd.f32 0.0, %v1049
  %v1051 = vpop.f32.mrb[0].mxu0
  %v1052 = vpop.f32.mrb[0].mxu0
  %1053 = vdwg.mxu0
  %v1054 = vadd.f32 %v775, %v1007
  %v1055 = vadd.f32 %v776, %v1009
  %v1056 = vadd.f32 %v777, %v1048
  %v1057 = vadd.f32 %v778, %v1050
  %v1058 = vxor.u32 %v1054, 2147483648
  %v1059 = vmul.f32 %v1058, 1.442695
  %v1060 = vpow.pop %v1059
  %v1061 = vadd.f32 %v1060, 1.0
  %v1062 = vrcp.pop %v1061
  %v1063 = vmul.f32 1.0, %v1062
  %v1064 = vxor.u32 %v1055, 2147483648
  %v1065 = vmul.f32 %v1064, 1.442695
  %v1066 = vpow.pop %v1065
  %v1067 = vadd.f32 %v1066, 1.0
  %v1068 = vrcp.pop %v1067
  %v1069 = vmul.f32 1.0, %v1068
  %v1070 = vtanh.pop %v1056
  %v1071 = vxor.u32 %v1057, 2147483648
  %v1072 = vmul.f32 %v1071, 1.442695
  %v1073 = vpow.pop %v1072
  %v1074 = vadd.f32 %v1073, 1.0
  %v1075 = vrcp.pop %v1074
  %v1076 = vmul.f32 1.0, %v1075
  %v1077 = vmul.f32 %v1069, %v768
  %v1078 = vmul.f32 %v1063, %v1070
  %v1079 = vadd.f32 %v1077, %v1078
  %v1080 = vtanh.pop %v1079
  %v1081 = vmul.f32 %v1076, %v1080
  %s1082 = scalar_lea.vmem [#allocation3], 8
  %1083 = vst [vmem:[%s1082] sm:$0xff] %v1081
  %s1084 = smul.u32 2, 4
  %s1085 = smul.addr %s1084, 8
  %s1086 = scalar_lea.vmem [#allocation2], %s1085
  %v1087 = vld [vmem:[%s1086] sm:$0xff]
  %v1088 = vld [vmem:[%s1086 + $0x8] sm:$0xff]
  %v1089 = vld [vmem:[%s1086 + $0x10] sm:$0xff]
  %v1090 = vld [vmem:[%s1086 + $0x18] sm:$0xff]
  %v1091 = vpack.c.bf16 %v1081, %v1081
  %v1092 = vld [vmem:[%s2] sm:$0xff]
  %v1093 = vld [vmem:[%s2 + $0x8] sm:$0xff]
  %v1094 = vld [vmem:[%s2 + $0x10] sm:$0xff]
  %v1095 = vld [vmem:[%s2 + $0x18] sm:$0xff]
  %v1096 = vld [vmem:[%s2 + $0x20] sm:$0xff]
  %v1097 = vld [vmem:[%s2 + $0x28] sm:$0xff]
  %v1098 = vld [vmem:[%s2 + $0x30] sm:$0xff]
  %v1099 = vld [vmem:[%s2 + $0x38] sm:$0xff]
  %v1100 = vld [vmem:[%s2 + $0x40] sm:$0xff]
  %v1101 = vld [vmem:[%s2 + $0x48] sm:$0xff]
  %v1102 = vld [vmem:[%s2 + $0x50] sm:$0xff]
  %v1103 = vld [vmem:[%s2 + $0x58] sm:$0xff]
  %v1104 = vld [vmem:[%s2 + $0x60] sm:$0xff]
  %v1105 = vld [vmem:[%s2 + $0x68] sm:$0xff]
  %v1106 = vld [vmem:[%s2 + $0x70] sm:$0xff]
  %v1107 = vld [vmem:[%s2 + $0x78] sm:$0xff]
  %v1108 = vld [vmem:[%s2 + $0x80] sm:$0xff]
  %v1109 = vld [vmem:[%s2 + $0x88] sm:$0xff]
  %v1110 = vld [vmem:[%s2 + $0x90] sm:$0xff]
  %v1111 = vld [vmem:[%s2 + $0x98] sm:$0xff]
  %v1112 = vld [vmem:[%s2 + $0xa0] sm:$0xff]
  %v1113 = vld [vmem:[%s2 + $0xa8] sm:$0xff]
  %v1114 = vld [vmem:[%s2 + $0xb0] sm:$0xff]
  %v1115 = vld [vmem:[%s2 + $0xb8] sm:$0xff]
  %v1116 = vld [vmem:[%s2 + $0xc0] sm:$0xff]
  %v1117 = vld [vmem:[%s2 + $0xc8] sm:$0xff]
  %v1118 = vld [vmem:[%s2 + $0xd0] sm:$0xff]
  %v1119 = vld [vmem:[%s2 + $0xd8] sm:$0xff]
  %v1120 = vld [vmem:[%s2 + $0xe0] sm:$0xff]
  %v1121 = vld [vmem:[%s2 + $0xe8] sm:$0xff]
  %v1122 = vld [vmem:[%s2 + $0xf0] sm:$0xff]
  %v1123 = vld [vmem:[%s2 + $0xf8] sm:$0xff]
  %v1156 = vunpack.c.l.b16 %v1092
  %v1157 = vunpack.c.h.b16 %v1092
  %v1158 = vunpack.c.l.b16 %v1093
  %v1159 = vunpack.c.h.b16 %v1093
  %v1160 = vunpack.c.l.b16 %v1094
  %v1161 = vunpack.c.h.b16 %v1094
  %v1162 = vunpack.c.l.b16 %v1095
  %v1163 = vunpack.c.h.b16 %v1095
  %v1164 = vunpack.c.l.b16 %v1096
  %v1165 = vunpack.c.h.b16 %v1096
  %v1166 = vunpack.c.l.b16 %v1097
  %v1167 = vunpack.c.h.b16 %v1097
  %v1168 = vunpack.c.l.b16 %v1098
  %v1169 = vunpack.c.h.b16 %v1098
  %v1170 = vunpack.c.l.b16 %v1099
  %v1171 = vunpack.c.h.b16 %v1099
  %v1172 = vunpack.c.l.b16 %v1100
  %v1173 = vunpack.c.h.b16 %v1100
  %v1174 = vunpack.c.l.b16 %v1101
  %v1175 = vunpack.c.h.b16 %v1101
  %v1176 = vunpack.c.l.b16 %v1102
  %v1177 = vunpack.c.h.b16 %v1102
  %v1178 = vunpack.c.l.b16 %v1103
  %v1179 = vunpack.c.h.b16 %v1103
  %v1180 = vunpack.c.l.b16 %v1104
  %v1181 = vunpack.c.h.b16 %v1104
  %v1182 = vunpack.c.l.b16 %v1105
  %v1183 = vunpack.c.h.b16 %v1105
  %v1184 = vunpack.c.l.b16 %v1106
  %v1185 = vunpack.c.h.b16 %v1106
  %v1186 = vunpack.c.l.b16 %v1107
  %v1187 = vunpack.c.h.b16 %v1107
  %v1188 = vunpack.c.l.b16 %v1108
  %v1189 = vunpack.c.h.b16 %v1108
  %v1190 = vunpack.c.l.b16 %v1109
  %v1191 = vunpack.c.h.b16 %v1109
  %v1192 = vunpack.c.l.b16 %v1110
  %v1193 = vunpack.c.h.b16 %v1110
  %v1194 = vunpack.c.l.b16 %v1111
  %v1195 = vunpack.c.h.b16 %v1111
  %v1196 = vunpack.c.l.b16 %v1112
  %v1197 = vunpack.c.h.b16 %v1112
  %v1198 = vunpack.c.l.b16 %v1113
  %v1199 = vunpack.c.h.b16 %v1113
  %v1200 = vunpack.c.l.b16 %v1114
  %v1201 = vunpack.c.h.b16 %v1114
  %v1202 = vunpack.c.l.b16 %v1115
  %v1203 = vunpack.c.h.b16 %v1115
  %v1204 = vunpack.c.l.b16 %v1116
  %v1205 = vunpack.c.h.b16 %v1116
  %v1206 = vunpack.c.l.b16 %v1117
  %v1207 = vunpack.c.h.b16 %v1117
  %v1208 = vunpack.c.l.b16 %v1118
  %v1209 = vunpack.c.h.b16 %v1118
  %v1210 = vunpack.c.l.b16 %v1119
  %v1211 = vunpack.c.h.b16 %v1119
  %v1212 = vunpack.c.l.b16 %v1120
  %v1213 = vunpack.c.h.b16 %v1120
  %v1214 = vunpack.c.l.b16 %v1121
  %v1215 = vunpack.c.h.b16 %v1121
  %v1216 = vunpack.c.l.b16 %v1122
  %v1217 = vunpack.c.h.b16 %v1122
  %v1218 = vunpack.c.l.b16 %v1123
  %v1219 = vunpack.c.h.b16 %v1123
  %v1220 = vpack.c.b16 %v1160, %v1156
  %v1221 = vpack.c.b16 %v1161, %v1157
  %v1222 = vpack.c.b16 %v1162, %v1158
  %v1223 = vpack.c.b16 %v1163, %v1159
  %v1224 = vpack.c.b16 %v1168, %v1164
  %v1225 = vpack.c.b16 %v1169, %v1165
  %v1226 = vpack.c.b16 %v1170, %v1166
  %v1227 = vpack.c.b16 %v1171, %v1167
  %v1228 = vpack.c.b16 %v1176, %v1172
  %v1229 = vpack.c.b16 %v1177, %v1173
  %v1230 = vpack.c.b16 %v1178, %v1174
  %v1231 = vpack.c.b16 %v1179, %v1175
  %v1232 = vpack.c.b16 %v1184, %v1180
  %v1233 = vpack.c.b16 %v1185, %v1181
  %v1234 = vpack.c.b16 %v1186, %v1182
  %v1235 = vpack.c.b16 %v1187, %v1183
  %v1236 = vpack.c.b16 %v1192, %v1188
  %v1237 = vpack.c.b16 %v1193, %v1189
  %v1238 = vpack.c.b16 %v1194, %v1190
  %v1239 = vpack.c.b16 %v1195, %v1191
  %v1240 = vpack.c.b16 %v1200, %v1196
  %v1241 = vpack.c.b16 %v1201, %v1197
  %v1242 = vpack.c.b16 %v1202, %v1198
  %v1243 = vpack.c.b16 %v1203, %v1199
  %v1244 = vpack.c.b16 %v1208, %v1204
  %v1245 = vpack.c.b16 %v1209, %v1205
  %v1246 = vpack.c.b16 %v1210, %v1206
  %v1247 = vpack.c.b16 %v1211, %v1207
  %v1248 = vpack.c.b16 %v1216, %v1212
  %v1249 = vpack.c.b16 %v1217, %v1213
  %v1250 = vpack.c.b16 %v1218, %v1214
  %v1251 = vpack.c.b16 %v1219, %v1215
  %1284 = vmatprep.subr.bf16.mxu0 %v1221
  %1285 = vmatpush1.bf16.msra.mxu0 %v1220
  %1286 = vmatprep.subr.bf16.mxu0 %v1225
  %1287 = vmatpush1.bf16.msra.mxu0 %v1224
  %1288 = vmatprep.subr.bf16.mxu0 %v1229
  %1289 = vmatpush1.bf16.msra.mxu0 %v1228
  %1290 = vmatprep.subr.bf16.mxu0 %v1233
  %1291 = vmatpush1.bf16.msra.mxu0 %v1232
  %1292 = vmatprep.subr.bf16.mxu0 %v1237
  %1293 = vmatpush1.bf16.msra.mxu0 %v1236
  %1294 = vmatprep.subr.bf16.mxu0 %v1241
  %1295 = vmatpush1.bf16.msra.mxu0 %v1240
  %1296 = vmatprep.subr.bf16.mxu0 %v1245
  %1297 = vmatpush1.bf16.msra.mxu0 %v1244
  %1298 = vmatprep.subr.bf16.mxu0 %v1249
  %1299 = vmatpush1.bf16.msra.mxu0 %v1248
  %1300 = vmatprep.subr.bf16.mxu0 0
  %1301 = vmatpush1.bf16.msra.mxu0 0
  %1302 = vmatprep.subr.bf16.mxu0 0
  %1303 = vmatpush1.bf16.msra.mxu0 0
  %1304 = vmatprep.subr.bf16.mxu0 0
  %1305 = vmatpush1.bf16.msra.mxu0 0
  %1306 = vmatprep.subr.bf16.mxu0 0
  %1307 = vmatpush1.bf16.msra.mxu0 0
  %1308 = vmatprep.subr.bf16.mxu0 0
  %1309 = vmatpush1.bf16.msra.mxu0 0
  %1310 = vmatprep.subr.bf16.mxu0 0
  %1311 = vmatpush1.bf16.msra.mxu0 0
  %1312 = vmatprep.subr.bf16.mxu0 0
  %1313 = vmatpush1.bf16.msra.mxu0 0
  %1314 = vmatprep.subr.bf16.mxu0 0
  %1315 = vmatpush1.bf16.msra.mxu0 0
  %1316 = vmatprep.mubr.bf16.mxu0 0
  %1317 = vmatmul.mubr.bf16.gmra.mrb[0].mxu0 %v1091
  %v1318 = vpop.f32.mrb[0].mxu0
  %v1319 = vadd.f32 0.0, %v1318
  %v1320 = vpop.f32.mrb[0].mxu0
  %v1321 = vadd.f32 0.0, %v1320
  %v1322 = vpop.f32.mrb[0].mxu0
  %v1323 = vpop.f32.mrb[0].mxu0
  %1324 = vdwg.mxu0
  %1325 = vmatprep.subr.bf16.mxu0 %v1223
  %1326 = vmatpush1.bf16.msra.mxu0 %v1222
  %1327 = vmatprep.subr.bf16.mxu0 %v1227
  %1328 = vmatpush1.bf16.msra.mxu0 %v1226
  %1329 = vmatprep.subr.bf16.mxu0 %v1231
  %1330 = vmatpush1.bf16.msra.mxu0 %v1230
  %1331 = vmatprep.subr.bf16.mxu0 %v1235
  %1332 = vmatpush1.bf16.msra.mxu0 %v1234
  %1333 = vmatprep.subr.bf16.mxu0 %v1239
  %1334 = vmatpush1.bf16.msra.mxu0 %v1238
  %1335 = vmatprep.subr.bf16.mxu0 %v1243
  %1336 = vmatpush1.bf16.msra.mxu0 %v1242
  %1337 = vmatprep.subr.bf16.mxu0 %v1247
  %1338 = vmatpush1.bf16.msra.mxu0 %v1246
  %1339 = vmatprep.subr.bf16.mxu0 %v1251
  %1340 = vmatpush1.bf16.msra.mxu0 %v1250
  %1341 = vmatprep.subr.bf16.mxu0 0
  %1342 = vmatpush1.bf16.msra.mxu0 0
  %1343 = vmatprep.subr.bf16.mxu0 0
  %1344 = vmatpush1.bf16.msra.mxu0 0
  %1345 = vmatprep.subr.bf16.mxu0 0
  %1346 = vmatpush1.bf16.msra.mxu0 0
  %1347 = vmatprep.subr.bf16.mxu0 0
  %1348 = vmatpush1.bf16.msra.mxu0 0
  %1349 = vmatprep.subr.bf16.mxu0 0
  %1350 = vmatpush1.bf16.msra.mxu0 0
  %1351 = vmatprep.subr.bf16.mxu0 0
  %1352 = vmatpush1.bf16.msra.mxu0 0
  %1353 = vmatprep.subr.bf16.mxu0 0
  %1354 = vmatpush1.bf16.msra.mxu0 0
  %1355 = vmatprep.subr.bf16.mxu0 0
  %1356 = vmatpush1.bf16.msra.mxu0 0
  %1357 = vmatprep.mubr.bf16.mxu0 0
  %1358 = vmatmul.mubr.bf16.gmra.mrb[0].mxu0 %v1091
  %v1359 = vpop.f32.mrb[0].mxu0
  %v1360 = vadd.f32 0.0, %v1359
  %v1361 = vpop.f32.mrb[0].mxu0
  %v1362 = vadd.f32 0.0, %v1361
  %v1363 = vpop.f32.mrb[0].mxu0
  %v1364 = vpop.f32.mrb[0].mxu0
  %1365 = vdwg.mxu0
  %v1366 = vadd.f32 %v1087, %v1319
  %v1367 = vadd.f32 %v1088, %v1321
  %v1368 = vadd.f32 %v1089, %v1360
  %v1369 = vadd.f32 %v1090, %v1362
  %v1370 = vxor.u32 %v1366, 2147483648
  %v1371 = vmul.f32 %v1370, 1.442695
  %v1372 = vpow.pop %v1371
  %v1373 = vadd.f32 %v1372, 1.0
  %v1374 = vrcp.pop %v1373
  %v1375 = vmul.f32 1.0, %v1374
  %v1376 = vxor.u32 %v1367, 2147483648
  %v1377 = vmul.f32 %v1376, 1.442695
  %v1378 = vpow.pop %v1377
  %v1379 = vadd.f32 %v1378, 1.0
  %v1380 = vrcp.pop %v1379
  %v1381 = vmul.f32 1.0, %v1380
  %v1382 = vtanh.pop %v1368
  %v1383 = vxor.u32 %v1369, 2147483648
  %v1384 = vmul.f32 %v1383, 1.442695
  %v1385 = vpow.pop %v1384
  %v1386 = vadd.f32 %v1385, 1.0
  %v1387 = vrcp.pop %v1386
  %v1388 = vmul.f32 1.0, %v1387
  %v1389 = vmul.f32 %v1381, %v1079
  %v1390 = vmul.f32 %v1375, %v1382
  %v1391 = vadd.f32 %v1389, %v1390
  %v1392 = vtanh.pop %v1391
  %v1393 = vmul.f32 %v1388, %v1392
  %s1394 = scalar_lea.vmem [#allocation3], 16
  %1395 = vst [vmem:[%s1394] sm:$0xff] %v1393
  %s1396 = smul.u32 3, 4
  %s1397 = smul.addr %s1396, 8
  %s1398 = scalar_lea.vmem [#allocation2], %s1397
  %v1399 = vld [vmem:[%s1398] sm:$0xff]
  %v1400 = vld [vmem:[%s1398 + $0x8] sm:$0xff]
  %v1401 = vld [vmem:[%s1398 + $0x10] sm:$0xff]
  %v1402 = vld [vmem:[%s1398 + $0x18] sm:$0xff]
  %v1403 = vpack.c.bf16 %v1393, %v1393
  %v1404 = vld [vmem:[%s2] sm:$0xff]
  %v1405 = vld [vmem:[%s2 + $0x8] sm:$0xff]
  %v1406 = vld [vmem:[%s2 + $0x10] sm:$0xff]
  %v1407 = vld [vmem:[%s2 + $0x18] sm:$0xff]
  %v1408 = vld [vmem:[%s2 + $0x20] sm:$0xff]
  %v1409 = vld [vmem:[%s2 + $0x28] sm:$0xff]
  %v1410 = vld [vmem:[%s2 + $0x30] sm:$0xff]
  %v1411 = vld [vmem:[%s2 + $0x38] sm:$0xff]
  %v1412 = vld [vmem:[%s2 + $0x40] sm:$0xff]
  %v1413 = vld [vmem:[%s2 + $0x48] sm:$0xff]
  %v1414 = vld [vmem:[%s2 + $0x50] sm:$0xff]
  %v1415 = vld [vmem:[%s2 + $0x58] sm:$0xff]
  %v1416 = vld [vmem:[%s2 + $0x60] sm:$0xff]
  %v1417 = vld [vmem:[%s2 + $0x68] sm:$0xff]
  %v1418 = vld [vmem:[%s2 + $0x70] sm:$0xff]
  %v1419 = vld [vmem:[%s2 + $0x78] sm:$0xff]
  %v1420 = vld [vmem:[%s2 + $0x80] sm:$0xff]
  %v1421 = vld [vmem:[%s2 + $0x88] sm:$0xff]
  %v1422 = vld [vmem:[%s2 + $0x90] sm:$0xff]
  %v1423 = vld [vmem:[%s2 + $0x98] sm:$0xff]
  %v1424 = vld [vmem:[%s2 + $0xa0] sm:$0xff]
  %v1425 = vld [vmem:[%s2 + $0xa8] sm:$0xff]
  %v1426 = vld [vmem:[%s2 + $0xb0] sm:$0xff]
  %v1427 = vld [vmem:[%s2 + $0xb8] sm:$0xff]
  %v1428 = vld [vmem:[%s2 + $0xc0] sm:$0xff]
  %v1429 = vld [vmem:[%s2 + $0xc8] sm:$0xff]
  %v1430 = vld [vmem:[%s2 + $0xd0] sm:$0xff]
  %v1431 = vld [vmem:[%s2 + $0xd8] sm:$0xff]
  %v1432 = vld [vmem:[%s2 + $0xe0] sm:$0xff]
  %v1433 = vld [vmem:[%s2 + $0xe8] sm:$0xff]
  %v1434 = vld [vmem:[%s2 + $0xf0] sm:$0xff]
  %v1435 = vld [vmem:[%s2 + $0xf8] sm:$0xff]
  %v1468 = vunpack.c.l.b16 %v1404
  %v1469 = vunpack.c.h.b16 %v1404
  %v1470 = vunpack.c.l.b16 %v1405
  %v1471 = vunpack.c.h.b16 %v1405
  %v1472 = vunpack.c.l.b16 %v1406
  %v1473 = vunpack.c.h.b16 %v1406
  %v1474 = vunpack.c.l.b16 %v1407
  %v1475 = vunpack.c.h.b16 %v1407
  %v1476 = vunpack.c.l.b16 %v1408
  %v1477 = vunpack.c.h.b16 %v1408
  %v1478 = vunpack.c.l.b16 %v1409
  %v1479 = vunpack.c.h.b16 %v1409
  %v1480 = vunpack.c.l.b16 %v1410
  %v1481 = vunpack.c.h.b16 %v1410
  %v1482 = vunpack.c.l.b16 %v1411
  %v1483 = vunpack.c.h.b16 %v1411
  %v1484 = vunpack.c.l.b16 %v1412
  %v1485 = vunpack.c.h.b16 %v1412
  %v1486 = vunpack.c.l.b16 %v1413
  %v1487 = vunpack.c.h.b16 %v1413
  %v1488 = vunpack.c.l.b16 %v1414
  %v1489 = vunpack.c.h.b16 %v1414
  %v1490 = vunpack.c.l.b16 %v1415
  %v1491 = vunpack.c.h.b16 %v1415
  %v1492 = vunpack.c.l.b16 %v1416
  %v1493 = vunpack.c.h.b16 %v1416
  %v1494 = vunpack.c.l.b16 %v1417
  %v1495 = vunpack.c.h.b16 %v1417
  %v1496 = vunpack.c.l.b16 %v1418
  %v1497 = vunpack.c.h.b16 %v1418
  %v1498 = vunpack.c.l.b16 %v1419
  %v1499 = vunpack.c.h.b16 %v1419
  %v1500 = vunpack.c.l.b16 %v1420
  %v1501 = vunpack.c.h.b16 %v1420
  %v1502 = vunpack.c.l.b16 %v1421
  %v1503 = vunpack.c.h.b16 %v1421
  %v1504 = vunpack.c.l.b16 %v1422
  %v1505 = vunpack.c.h.b16 %v1422
  %v1506 = vunpack.c.l.b16 %v1423
  %v1507 = vunpack.c.h.b16 %v1423
  %v1508 = vunpack.c.l.b16 %v1424
  %v1509 = vunpack.c.h.b16 %v1424
  %v1510 = vunpack.c.l.b16 %v1425
  %v1511 = vunpack.c.h.b16 %v1425
  %v1512 = vunpack.c.l.b16 %v1426
  %v1513 = vunpack.c.h.b16 %v1426
  %v1514 = vunpack.c.l.b16 %v1427
  %v1515 = vunpack.c.h.b16 %v1427
  %v1516 = vunpack.c.l.b16 %v1428
  %v1517 = vunpack.c.h.b16 %v1428
  %v1518 = vunpack.c.l.b16 %v1429
  %v1519 = vunpack.c.h.b16 %v1429
  %v1520 = vunpack.c.l.b16 %v1430
  %v1521 = vunpack.c.h.b16 %v1430
  %v1522 = vunpack.c.l.b16 %v1431
  %v1523 = vunpack.c.h.b16 %v1431
  %v1524 = vunpack.c.l.b16 %v1432
  %v1525 = vunpack.c.h.b16 %v1432
  %v1526 = vunpack.c.l.b16 %v1433
  %v1527 = vunpack.c.h.b16 %v1433
  %v1528 = vunpack.c.l.b16 %v1434
  %v1529 = vunpack.c.h.b16 %v1434
  %v1530 = vunpack.c.l.b16 %v1435
  %v1531 = vunpack.c.h.b16 %v1435
  %v1532 = vpack.c.b16 %v1472, %v1468
  %v1533 = vpack.c.b16 %v1473, %v1469
  %v1534 = vpack.c.b16 %v1474, %v1470
  %v1535 = vpack.c.b16 %v1475, %v1471
  %v1536 = vpack.c.b16 %v1480, %v1476
  %v1537 = vpack.c.b16 %v1481, %v1477
  %v1538 = vpack.c.b16 %v1482, %v1478
  %v1539 = vpack.c.b16 %v1483, %v1479
  %v1540 = vpack.c.b16 %v1488, %v1484
  %v1541 = vpack.c.b16 %v1489, %v1485
  %v1542 = vpack.c.b16 %v1490, %v1486
  %v1543 = vpack.c.b16 %v1491, %v1487
  %v1544 = vpack.c.b16 %v1496, %v1492
  %v1545 = vpack.c.b16 %v1497, %v1493
  %v1546 = vpack.c.b16 %v1498, %v1494
  %v1547 = vpack.c.b16 %v1499, %v1495
  %v1548 = vpack.c.b16 %v1504, %v1500
  %v1549 = vpack.c.b16 %v1505, %v1501
  %v1550 = vpack.c.b16 %v1506, %v1502
  %v1551 = vpack.c.b16 %v1507, %v1503
  %v1552 = vpack.c.b16 %v1512, %v1508
  %v1553 = vpack.c.b16 %v1513, %v1509
  %v1554 = vpack.c.b16 %v1514, %v1510
  %v1555 = vpack.c.b16 %v1515, %v1511
  %v1556 = vpack.c.b16 %v1520, %v1516
  %v1557 = vpack.c.b16 %v1521, %v1517
  %v1558 = vpack.c.b16 %v1522, %v1518
  %v1559 = vpack.c.b16 %v1523, %v1519
  %v1560 = vpack.c.b16 %v1528, %v1524
  %v1561 = vpack.c.b16 %v1529, %v1525
  %v1562 = vpack.c.b16 %v1530, %v1526
  %v1563 = vpack.c.b16 %v1531, %v1527
  %1596 = vmatprep.subr.bf16.mxu0 %v1533
  %1597 = vmatpush1.bf16.msra.mxu0 %v1532
  %1598 = vmatprep.subr.bf16.mxu0 %v1537
  %1599 = vmatpush1.bf16.msra.mxu0 %v1536
  %1600 = vmatprep.subr.bf16.mxu0 %v1541
  %1601 = vmatpush1.bf16.msra.mxu0 %v1540
  %1602 = vmatprep.subr.bf16.mxu0 %v1545
  %1603 = vmatpush1.bf16.msra.mxu0 %v1544
  %1604 = vmatprep.subr.bf16.mxu0 %v1549
  %1605 = vmatpush1.bf16.msra.mxu0 %v1548
  %1606 = vmatprep.subr.bf16.mxu0 %v1553
  %1607 = vmatpush1.bf16.msra.mxu0 %v1552
  %1608 = vmatprep.subr.bf16.mxu0 %v1557
  %1609 = vmatpush1.bf16.msra.mxu0 %v1556
  %1610 = vmatprep.subr.bf16.mxu0 %v1561
  %1611 = vmatpush1.bf16.msra.mxu0 %v1560
  %1612 = vmatprep.subr.bf16.mxu0 0
  %1613 = vmatpush1.bf16.msra.mxu0 0
  %1614 = vmatprep.subr.bf16.mxu0 0
  %1615 = vmatpush1.bf16.msra.mxu0 0
  %1616 = vmatprep.subr.bf16.mxu0 0
  %1617 = vmatpush1.bf16.msra.mxu0 0
  %1618 = vmatprep.subr.bf16.mxu0 0
  %1619 = vmatpush1.bf16.msra.mxu0 0
  %1620 = vmatprep.subr.bf16.mxu0 0
  %1621 = vmatpush1.bf16.msra.mxu0 0
  %1622 = vmatprep.subr.bf16.mxu0 0
  %1623 = vmatpush1.bf16.msra.mxu0 0
  %1624 = vmatprep.subr.bf16.mxu0 0
  %1625 = vmatpush1.bf16.msra.mxu0 0
  %1626 = vmatprep.subr.bf16.mxu0 0
  %1627 = vmatpush1.bf16.msra.mxu0 0
  %1628 = vmatprep.mubr.bf16.mxu0 0
  %1629 = vmatmul.mubr.bf16.gmra.mrb[0].mxu0 %v1403
  %v1630 = vpop.f32.mrb[0].mxu0
  %v1631 = vadd.f32 0.0, %v1630
  %v1632 = vpop.f32.mrb[0].mxu0
  %v1633 = vadd.f32 0.0, %v1632
  %v1634 = vpop.f32.mrb[0].mxu0
  %v1635 = vpop.f32.mrb[0].mxu0
  %1636 = vdwg.mxu0
  %1637 = vmatprep.subr.bf16.mxu0 %v1535
  %1638 = vmatpush1.bf16.msra.mxu0 %v1534
  %1639 = vmatprep.subr.bf16.mxu0 %v1539
  %1640 = vmatpush1.bf16.msra.mxu0 %v1538
  %1641 = vmatprep.subr.bf16.mxu0 %v1543
  %1642 = vmatpush1.bf16.msra.mxu0 %v1542
  %1643 = vmatprep.subr.bf16.mxu0 %v1547
  %1644 = vmatpush1.bf16.msra.mxu0 %v1546
  %1645 = vmatprep.subr.bf16.mxu0 %v1551
  %1646 = vmatpush1.bf16.msra.mxu0 %v1550
  %1647 = vmatprep.subr.bf16.mxu0 %v1555
  %1648 = vmatpush1.bf16.msra.mxu0 %v1554
  %1649 = vmatprep.subr.bf16.mxu0 %v1559
  %1650 = vmatpush1.bf16.msra.mxu0 %v1558
  %1651 = vmatprep.subr.bf16.mxu0 %v1563
  %1652 = vmatpush1.bf16.msra.mxu0 %v1562
  %1653 = vmatprep.subr.bf16.mxu0 0
  %1654 = vmatpush1.bf16.msra.mxu0 0
  %1655 = vmatprep.subr.bf16.mxu0 0
  %1656 = vmatpush1.bf16.msra.mxu0 0
  %1657 = vmatprep.subr.bf16.mxu0 0
  %1658 = vmatpush1.bf16.msra.mxu0 0
  %1659 = vmatprep.subr.bf16.mxu0 0
  %1660 = vmatpush1.bf16.msra.mxu0 0
  %1661 = vmatprep.subr.bf16.mxu0 0
  %1662 = vmatpush1.bf16.msra.mxu0 0
  %1663 = vmatprep.subr.bf16.mxu0 0
  %1664 = vmatpush1.bf16.msra.mxu0 0
  %1665 = vmatprep.subr.bf16.mxu0 0
  %1666 = vmatpush1.bf16.msra.mxu0 0
  %1667 = vmatprep.subr.bf16.mxu0 0
  %1668 = vmatpush1.bf16.msra.mxu0 0
  %1669 = vmatprep.mubr.bf16.mxu0 0
  %1670 = vmatmul.mubr.bf16.gmra.mrb[0].mxu0 %v1403
  %v1671 = vpop.f32.mrb[0].mxu0
  %v1672 = vadd.f32 0.0, %v1671
  %v1673 = vpop.f32.mrb[0].mxu0
  %v1674 = vadd.f32 0.0, %v1673
  %v1675 = vpop.f32.mrb[0].mxu0
  %v1676 = vpop.f32.mrb[0].mxu0
  %1677 = vdwg.mxu0
  %v1678 = vadd.f32 %v1399, %v1631
  %v1679 = vadd.f32 %v1400, %v1633
  %v1680 = vadd.f32 %v1401, %v1672
  %v1681 = vadd.f32 %v1402, %v1674
  %v1682 = vxor.u32 %v1678, 2147483648
  %v1683 = vmul.f32 %v1682, 1.442695
  %v1684 = vpow.pop %v1683
  %v1685 = vadd.f32 %v1684, 1.0
  %v1686 = vrcp.pop %v1685
  %v1687 = vmul.f32 1.0, %v1686
  %v1688 = vxor.u32 %v1679, 2147483648
  %v1689 = vmul.f32 %v1688, 1.442695
  %v1690 = vpow.pop %v1689
  %v1691 = vadd.f32 %v1690, 1.0
  %v1692 = vrcp.pop %v1691
  %v1693 = vmul.f32 1.0, %v1692
  %v1694 = vtanh.pop %v1680
  %v1695 = vxor.u32 %v1681, 2147483648
  %v1696 = vmul.f32 %v1695, 1.442695
  %v1697 = vpow.pop %v1696
  %v1698 = vadd.f32 %v1697, 1.0
  %v1699 = vrcp.pop %v1698
  %v1700 = vmul.f32 1.0, %v1699
  %v1701 = vmul.f32 %v1693, %v1391
  %v1702 = vmul.f32 %v1687, %v1694
  %v1703 = vadd.f32 %v1701, %v1702
  %v1704 = vtanh.pop %v1703
  %v1705 = vmul.f32 %v1700, %v1704
  %s1706 = scalar_lea.vmem [#allocation3], 24
  %1707 = vst [vmem:[%s1706] sm:$0xff] %v1705
  %s1708 = smul.u32 4, 4
  %s1709 = smul.addr %s1708, 8
  %s1710 = scalar_lea.vmem [#allocation2], %s1709
  %v1711 = vld [vmem:[%s1710] sm:$0xff]
  %v1712 = vld [vmem:[%s1710 + $0x8] sm:$0xff]
  %v1713 = vld [vmem:[%s1710 + $0x10] sm:$0xff]
  %v1714 = vld [vmem:[%s1710 + $0x18] sm:$0xff]
  %v1715 = vpack.c.bf16 %v1705, %v1705
  %v1716 = vld [vmem:[%s2] sm:$0xff]
  %v1717 = vld [vmem:[%s2 + $0x8] sm:$0xff]
  %v1718 = vld [vmem:[%s2 + $0x10] sm:$0xff]
  %v1719 = vld [vmem:[%s2 + $0x18] sm:$0xff]
  %v1720 = vld [vmem:[%s2 + $0x20] sm:$0xff]
  %v1721 = vld [vmem:[%s2 + $0x28] sm:$0xff]
  %v1722 = vld [vmem:[%s2 + $0x30] sm:$0xff]
  %v1723 = vld [vmem:[%s2 + $0x38] sm:$0xff]
  %v1724 = vld [vmem:[%s2 + $0x40] sm:$0xff]
  %v1725 = vld [vmem:[%s2 + $0x48] sm:$0xff]
  %v1726 = vld [vmem:[%s2 + $0x50] sm:$0xff]
  %v1727 = vld [vmem:[%s2 + $0x58] sm:$0xff]
  %v1728 = vld [vmem:[%s2 + $0x60] sm:$0xff]
  %v1729 = vld [vmem:[%s2 + $0x68] sm:$0xff]
  %v1730 = vld [vmem:[%s2 + $0x70] sm:$0xff]
  %v1731 = vld [vmem:[%s2 + $0x78] sm:$0xff]
  %v1732 = vld [vmem:[%s2 + $0x80] sm:$0xff]
  %v1733 = vld [vmem:[%s2 + $0x88] sm:$0xff]
  %v1734 = vld [vmem:[%s2 + $0x90] sm:$0xff]
  %v1735 = vld [vmem:[%s2 + $0x98] sm:$0xff]
  %v1736 = vld [vmem:[%s2 + $0xa0] sm:$0xff]
  %v1737 = vld [vmem:[%s2 + $0xa8] sm:$0xff]
  %v1738 = vld [vmem:[%s2 + $0xb0] sm:$0xff]
  %v1739 = vld [vmem:[%s2 + $0xb8] sm:$0xff]
  %v1740 = vld [vmem:[%s2 + $0xc0] sm:$0xff]
  %v1741 = vld [vmem:[%s2 + $0xc8] sm:$0xff]
  %v1742 = vld [vmem:[%s2 + $0xd0] sm:$0xff]
  %v1743 = vld [vmem:[%s2 + $0xd8] sm:$0xff]
  %v1744 = vld [vmem:[%s2 + $0xe0] sm:$0xff]
  %v1745 = vld [vmem:[%s2 + $0xe8] sm:$0xff]
  %v1746 = vld [vmem:[%s2 + $0xf0] sm:$0xff]
  %v1747 = vld [vmem:[%s2 + $0xf8] sm:$0xff]
  %v1780 = vunpack.c.l.b16 %v1716
  %v1781 = vunpack.c.h.b16 %v1716
  %v1782 = vunpack.c.l.b16 %v1717
  %v1783 = vunpack.c.h.b16 %v1717
  %v1784 = vunpack.c.l.b16 %v1718
  %v1785 = vunpack.c.h.b16 %v1718
  %v1786 = vunpack.c.l.b16 %v1719
  %v1787 = vunpack.c.h.b16 %v1719
  %v1788 = vunpack.c.l.b16 %v1720
  %v1789 = vunpack.c.h.b16 %v1720
  %v1790 = vunpack.c.l.b16 %v1721
  %v1791 = vunpack.c.h.b16 %v1721
  %v1792 = vunpack.c.l.b16 %v1722
  %v1793 = vunpack.c.h.b16 %v1722
  %v1794 = vunpack.c.l.b16 %v1723
  %v1795 = vunpack.c.h.b16 %v1723
  %v1796 = vunpack.c.l.b16 %v1724
  %v1797 = vunpack.c.h.b16 %v1724
  %v1798 = vunpack.c.l.b16 %v1725
  %v1799 = vunpack.c.h.b16 %v1725
  %v1800 = vunpack.c.l.b16 %v1726
  %v1801 = vunpack.c.h.b16 %v1726
  %v1802 = vunpack.c.l.b16 %v1727
  %v1803 = vunpack.c.h.b16 %v1727
  %v1804 = vunpack.c.l.b16 %v1728
  %v1805 = vunpack.c.h.b16 %v1728
  %v1806 = vunpack.c.l.b16 %v1729
  %v1807 = vunpack.c.h.b16 %v1729
  %v1808 = vunpack.c.l.b16 %v1730
  %v1809 = vunpack.c.h.b16 %v1730
  %v1810 = vunpack.c.l.b16 %v1731
  %v1811 = vunpack.c.h.b16 %v1731
  %v1812 = vunpack.c.l.b16 %v1732
  %v1813 = vunpack.c.h.b16 %v1732
  %v1814 = vunpack.c.l.b16 %v1733
  %v1815 = vunpack.c.h.b16 %v1733
  %v1816 = vunpack.c.l.b16 %v1734
  %v1817 = vunpack.c.h.b16 %v1734
  %v1818 = vunpack.c.l.b16 %v1735
  %v1819 = vunpack.c.h.b16 %v1735
  %v1820 = vunpack.c.l.b16 %v1736
  %v1821 = vunpack.c.h.b16 %v1736
  %v1822 = vunpack.c.l.b16 %v1737
  %v1823 = vunpack.c.h.b16 %v1737
  %v1824 = vunpack.c.l.b16 %v1738
  %v1825 = vunpack.c.h.b16 %v1738
  %v1826 = vunpack.c.l.b16 %v1739
  %v1827 = vunpack.c.h.b16 %v1739
  %v1828 = vunpack.c.l.b16 %v1740
  %v1829 = vunpack.c.h.b16 %v1740
  %v1830 = vunpack.c.l.b16 %v1741
  %v1831 = vunpack.c.h.b16 %v1741
  %v1832 = vunpack.c.l.b16 %v1742
  %v1833 = vunpack.c.h.b16 %v1742
  %v1834 = vunpack.c.l.b16 %v1743
  %v1835 = vunpack.c.h.b16 %v1743
  %v1836 = vunpack.c.l.b16 %v1744
  %v1837 = vunpack.c.h.b16 %v1744
  %v1838 = vunpack.c.l.b16 %v1745
  %v1839 = vunpack.c.h.b16 %v1745
  %v1840 = vunpack.c.l.b16 %v1746
  %v1841 = vunpack.c.h.b16 %v1746
  %v1842 = vunpack.c.l.b16 %v1747
  %v1843 = vunpack.c.h.b16 %v1747
  %v1844 = vpack.c.b16 %v1784, %v1780
  %v1845 = vpack.c.b16 %v1785, %v1781
  %v1846 = vpack.c.b16 %v1786, %v1782
  %v1847 = vpack.c.b16 %v1787, %v1783
  %v1848 = vpack.c.b16 %v1792, %v1788
  %v1849 = vpack.c.b16 %v1793, %v1789
  %v1850 = vpack.c.b16 %v1794, %v1790
  %v1851 = vpack.c.b16 %v1795, %v1791
  %v1852 = vpack.c.b16 %v1800, %v1796
  %v1853 = vpack.c.b16 %v1801, %v1797
  %v1854 = vpack.c.b16 %v1802, %v1798
  %v1855 = vpack.c.b16 %v1803, %v1799
  %v1856 = vpack.c.b16 %v1808, %v1804
  %v1857 = vpack.c.b16 %v1809, %v1805
  %v1858 = vpack.c.b16 %v1810, %v1806
  %v1859 = vpack.c.b16 %v1811, %v1807
  %v1860 = vpack.c.b16 %v1816, %v1812
  %v1861 = vpack.c.b16 %v1817, %v1813
  %v1862 = vpack.c.b16 %v1818, %v1814
  %v1863 = vpack.c.b16 %v1819, %v1815
  %v1864 = vpack.c.b16 %v1824, %v1820
  %v1865 = vpack.c.b16 %v1825, %v1821
  %v1866 = vpack.c.b16 %v1826, %v1822
  %v1867 = vpack.c.b16 %v1827, %v1823
  %v1868 = vpack.c.b16 %v1832, %v1828
  %v1869 = vpack.c.b16 %v1833, %v1829
  %v1870 = vpack.c.b16 %v1834, %v1830
  %v1871 = vpack.c.b16 %v1835, %v1831
  %v1872 = vpack.c.b16 %v1840, %v1836
  %v1873 = vpack.c.b16 %v1841, %v1837
  %v1874 = vpack.c.b16 %v1842, %v1838
  %v1875 = vpack.c.b16 %v1843, %v1839
  %1908 = vmatprep.subr.bf16.mxu0 %v1845
  %1909 = vmatpush1.bf16.msra.mxu0 %v1844
  %1910 = vmatprep.subr.bf16.mxu0 %v1849
  %1911 = vmatpush1.bf16.msra.mxu0 %v1848
  %1912 = vmatprep.subr.bf16.mxu0 %v1853
  %1913 = vmatpush1.bf16.msra.mxu0 %v1852
  %1914 = vmatprep.subr.bf16.mxu0 %v1857
  %1915 = vmatpush1.bf16.msra.mxu0 %v1856
  %1916 = vmatprep.subr.bf16.mxu0 %v1861
  %1917 = vmatpush1.bf16.msra.mxu0 %v1860
  %1918 = vmatprep.subr.bf16.mxu0 %v1865
  %1919 = vmatpush1.bf16.msra.mxu0 %v1864
  %1920 = vmatprep.subr.bf16.mxu0 %v1869
  %1921 = vmatpush1.bf16.msra.mxu0 %v1868
  %1922 = vmatprep.subr.bf16.mxu0 %v1873
  %1923 = vmatpush1.bf16.msra.mxu0 %v1872
  %1924 = vmatprep.subr.bf16.mxu0 0
  %1925 = vmatpush1.bf16.msra.mxu0 0
  %1926 = vmatprep.subr.bf16.mxu0 0
  %1927 = vmatpush1.bf16.msra.mxu0 0
  %1928 = vmatprep.subr.bf16.mxu0 0
  %1929 = vmatpush1.bf16.msra.mxu0 0
  %1930 = vmatprep.subr.bf16.mxu0 0
  %1931 = vmatpush1.bf16.msra.mxu0 0
  %1932 = vmatprep.subr.bf16.mxu0 0
  %1933 = vmatpush1.bf16.msra.mxu0 0
  %1934 = vmatprep.subr.bf16.mxu0 0
  %1935 = vmatpush1.bf16.msra.mxu0 0
  %1936 = vmatprep.subr.bf16.mxu0 0
  %1937 = vmatpush1.bf16.msra.mxu0 0
  %1938 = vmatprep.subr.bf16.mxu0 0
  %1939 = vmatpush1.bf16.msra.mxu0 0
  %1940 = vmatprep.mubr.bf16.mxu0 0
  %1941 = vmatmul.mubr.bf16.gmra.mrb[0].mxu0 %v1715
  %v1942 = vpop.f32.mrb[0].mxu0
  %v1943 = vadd.f32 0.0, %v1942
  %v1944 = vpop.f32.mrb[0].mxu0
  %v1945 = vadd.f32 0.0, %v1944
  %v1946 = vpop.f32.mrb[0].mxu0
  %v1947 = vpop.f32.mrb[0].mxu0
  %1948 = vdwg.mxu0
  %1949 = vmatprep.subr.bf16.mxu0 %v1847
  %1950 = vmatpush1.bf16.msra.mxu0 %v1846
  %1951 = vmatprep.subr.bf16.mxu0 %v1851
  %1952 = vmatpush1.bf16.msra.mxu0 %v1850
  %1953 = vmatprep.subr.bf16.mxu0 %v1855
  %1954 = vmatpush1.bf16.msra.mxu0 %v1854
  %1955 = vmatprep.subr.bf16.mxu0 %v1859
  %1956 = vmatpush1.bf16.msra.mxu0 %v1858
  %1957 = vmatprep.subr.bf16.mxu0 %v1863
  %1958 = vmatpush1.bf16.msra.mxu0 %v1862
  %1959 = vmatprep.subr.bf16.mxu0 %v1867
  %1960 = vmatpush1.bf16.msra.mxu0 %v1866
  %1961 = vmatprep.subr.bf16.mxu0 %v1871
  %1962 = vmatpush1.bf16.msra.mxu0 %v1870
  %1963 = vmatprep.subr.bf16.mxu0 %v1875
  %1964 = vmatpush1.bf16.msra.mxu0 %v1874
  %1965 = vmatprep.subr.bf16.mxu0 0
  %1966 = vmatpush1.bf16.msra.mxu0 0
  %1967 = vmatprep.subr.bf16.mxu0 0
  %1968 = vmatpush1.bf16.msra.mxu0 0
  %1969 = vmatprep.subr.bf16.mxu0 0
  %1970 = vmatpush1.bf16.msra.mxu0 0
  %1971 = vmatprep.subr.bf16.mxu0 0
  %1972 = vmatpush1.bf16.msra.mxu0 0
  %1973 = vmatprep.subr.bf16.mxu0 0
  %1974 = vmatpush1.bf16.msra.mxu0 0
  %1975 = vmatprep.subr.bf16.mxu0 0
  %1976 = vmatpush1.bf16.msra.mxu0 0
  %1977 = vmatprep.subr.bf16.mxu0 0
  %1978 = vmatpush1.bf16.msra.mxu0 0
  %1979 = vmatprep.subr.bf16.mxu0 0
  %1980 = vmatpush1.bf16.msra.mxu0 0
  %1981 = vmatprep.mubr.bf16.mxu0 0
  %1982 = vmatmul.mubr.bf16.gmra.mrb[0].mxu0 %v1715
  %v1983 = vpop.f32.mrb[0].mxu0
  %v1984 = vadd.f32 0.0, %v1983
  %v1985 = vpop.f32.mrb[0].mxu0
  %v1986 = vadd.f32 0.0, %v1985
  %v1987 = vpop.f32.mrb[0].mxu0
  %v1988 = vpop.f32.mrb[0].mxu0
  %1989 = vdwg.mxu0
  %v1990 = vadd.f32 %v1711, %v1943
  %v1991 = vadd.f32 %v1712, %v1945
  %v1992 = vadd.f32 %v1713, %v1984
  %v1993 = vadd.f32 %v1714, %v1986
  %v1994 = vxor.u32 %v1990, 2147483648
  %v1995 = vmul.f32 %v1994, 1.442695
  %v1996 = vpow.pop %v1995
  %v1997 = vadd.f32 %v1996, 1.0
  %v1998 = vrcp.pop %v1997
  %v1999 = vmul.f32 1.0, %v1998
  %v2000 = vxor.u32 %v1991, 2147483648
  %v2001 = vmul.f32 %v2000, 1.442695
  %v2002 = vpow.pop %v2001
  %v2003 = vadd.f32 %v2002, 1.0
  %v2004 = vrcp.pop %v2003
  %v2005 = vmul.f32 1.0, %v2004
  %v2006 = vtanh.pop %v1992
  %v2007 = vxor.u32 %v1993, 2147483648
  %v2008 = vmul.f32 %v2007, 1.442695
  %v2009 = vpow.pop %v2008
  %v2010 = vadd.f32 %v2009, 1.0
  %v2011 = vrcp.pop %v2010
  %v2012 = vmul.f32 1.0, %v2011
  %v2013 = vmul.f32 %v2005, %v1703
  %v2014 = vmul.f32 %v1999, %v2006
  %v2015 = vadd.f32 %v2013, %v2014
  %v2016 = vtanh.pop %v2015
  %v2017 = vmul.f32 %v2012, %v2016
  %s2018 = scalar_lea.vmem [#allocation3], 32
  %2019 = vst [vmem:[%s2018] sm:$0xff] %v2017
  %s2020 = smul.u32 5, 4
  %s2021 = smul.addr %s2020, 8
  %s2022 = scalar_lea.vmem [#allocation2], %s2021
  %v2023 = vld [vmem:[%s2022] sm:$0xff]
  %v2024 = vld [vmem:[%s2022 + $0x8] sm:$0xff]
  %v2025 = vld [vmem:[%s2022 + $0x10] sm:$0xff]
  %v2026 = vld [vmem:[%s2022 + $0x18] sm:$0xff]
  %v2027 = vpack.c.bf16 %v2017, %v2017
  %v2028 = vld [vmem:[%s2] sm:$0xff]
  %v2029 = vld [vmem:[%s2 + $0x8] sm:$0xff]
  %v2030 = vld [vmem:[%s2 + $0x10] sm:$0xff]
  %v2031 = vld [vmem:[%s2 + $0x18] sm:$0xff]
  %v2032 = vld [vmem:[%s2 + $0x20] sm:$0xff]
  %v2033 = vld [vmem:[%s2 + $0x28] sm:$0xff]
  %v2034 = vld [vmem:[%s2 + $0x30] sm:$0xff]
  %v2035 = vld [vmem:[%s2 + $0x38] sm:$0xff]
  %v2036 = vld [vmem:[%s2 + $0x40] sm:$0xff]
  %v2037 = vld [vmem:[%s2 + $0x48] sm:$0xff]
  %v2038 = vld [vmem:[%s2 + $0x50] sm:$0xff]
  %v2039 = vld [vmem:[%s2 + $0x58] sm:$0xff]
  %v2040 = vld [vmem:[%s2 + $0x60] sm:$0xff]
  %v2041 = vld [vmem:[%s2 + $0x68] sm:$0xff]
  %v2042 = vld [vmem:[%s2 + $0x70] sm:$0xff]
  %v2043 = vld [vmem:[%s2 + $0x78] sm:$0xff]
  %v2044 = vld [vmem:[%s2 + $0x80] sm:$0xff]
  %v2045 = vld [vmem:[%s2 + $0x88] sm:$0xff]
  %v2046 = vld [vmem:[%s2 + $0x90] sm:$0xff]
  %v2047 = vld [vmem:[%s2 + $0x98] sm:$0xff]
  %v2048 = vld [vmem:[%s2 + $0xa0] sm:$0xff]
  %v2049 = vld [vmem:[%s2 + $0xa8] sm:$0xff]
  %v2050 = vld [vmem:[%s2 + $0xb0] sm:$0xff]
  %v2051 = vld [vmem:[%s2 + $0xb8] sm:$0xff]
  %v2052 = vld [vmem:[%s2 + $0xc0] sm:$0xff]
  %v2053 = vld [vmem:[%s2 + $0xc8] sm:$0xff]
  %v2054 = vld [vmem:[%s2 + $0xd0] sm:$0xff]
  %v2055 = vld [vmem:[%s2 + $0xd8] sm:$0xff]
  %v2056 = vld [vmem:[%s2 + $0xe0] sm:$0xff]
  %v2057 = vld [vmem:[%s2 + $0xe8] sm:$0xff]
  %v2058 = vld [vmem:[%s2 + $0xf0] sm:$0xff]
  %v2059 = vld [vmem:[%s2 + $0xf8] sm:$0xff]
  %v2092 = vunpack.c.l.b16 %v2028
  %v2093 = vunpack.c.h.b16 %v2028
  %v2094 = vunpack.c.l.b16 %v2029
  %v2095 = vunpack.c.h.b16 %v2029
  %v2096 = vunpack.c.l.b16 %v2030
  %v2097 = vunpack.c.h.b16 %v2030
  %v2098 = vunpack.c.l.b16 %v2031
  %v2099 = vunpack.c.h.b16 %v2031
  %v2100 = vunpack.c.l.b16 %v2032
  %v2101 = vunpack.c.h.b16 %v2032
  %v2102 = vunpack.c.l.b16 %v2033
  %v2103 = vunpack.c.h.b16 %v2033
  %v2104 = vunpack.c.l.b16 %v2034
  %v2105 = vunpack.c.h.b16 %v2034
  %v2106 = vunpack.c.l.b16 %v2035
  %v2107 = vunpack.c.h.b16 %v2035
  %v2108 = vunpack.c.l.b16 %v2036
  %v2109 = vunpack.c.h.b16 %v2036
  %v2110 = vunpack.c.l.b16 %v2037
  %v2111 = vunpack.c.h.b16 %v2037
  %v2112 = vunpack.c.l.b16 %v2038
  %v2113 = vunpack.c.h.b16 %v2038
  %v2114 = vunpack.c.l.b16 %v2039
  %v2115 = vunpack.c.h.b16 %v2039
  %v2116 = vunpack.c.l.b16 %v2040
  %v2117 = vunpack.c.h.b16 %v2040
  %v2118 = vunpack.c.l.b16 %v2041
  %v2119 = vunpack.c.h.b16 %v2041
  %v2120 = vunpack.c.l.b16 %v2042
  %v2121 = vunpack.c.h.b16 %v2042
  %v2122 = vunpack.c.l.b16 %v2043
  %v2123 = vunpack.c.h.b16 %v2043
  %v2124 = vunpack.c.l.b16 %v2044
  %v2125 = vunpack.c.h.b16 %v2044
  %v2126 = vunpack.c.l.b16 %v2045
  %v2127 = vunpack.c.h.b16 %v2045
  %v2128 = vunpack.c.l.b16 %v2046
  %v2129 = vunpack.c.h.b16 %v2046
  %v2130 = vunpack.c.l.b16 %v2047
  %v2131 = vunpack.c.h.b16 %v2047
  %v2132 = vunpack.c.l.b16 %v2048
  %v2133 = vunpack.c.h.b16 %v2048
  %v2134 = vunpack.c.l.b16 %v2049
  %v2135 = vunpack.c.h.b16 %v2049
  %v2136 = vunpack.c.l.b16 %v2050
  %v2137 = vunpack.c.h.b16 %v2050
  %v2138 = vunpack.c.l.b16 %v2051
  %v2139 = vunpack.c.h.b16 %v2051
  %v2140 = vunpack.c.l.b16 %v2052
  %v2141 = vunpack.c.h.b16 %v2052
  %v2142 = vunpack.c.l.b16 %v2053
  %v2143 = vunpack.c.h.b16 %v2053
  %v2144 = vunpack.c.l.b16 %v2054
  %v2145 = vunpack.c.h.b16 %v2054
  %v2146 = vunpack.c.l.b16 %v2055
  %v2147 = vunpack.c.h.b16 %v2055
  %v2148 = vunpack.c.l.b16 %v2056
  %v2149 = vunpack.c.h.b16 %v2056
  %v2150 = vunpack.c.l.b16 %v2057
  %v2151 = vunpack.c.h.b16 %v2057
  %v2152 = vunpack.c.l.b16 %v2058
  %v2153 = vunpack.c.h.b16 %v2058
  %v2154 = vunpack.c.l.b16 %v2059
  %v2155 = vunpack.c.h.b16 %v2059
  %v2156 = vpack.c.b16 %v2096, %v2092
  %v2157 = vpack.c.b16 %v2097, %v2093
  %v2158 = vpack.c.b16 %v2098, %v2094
  %v2159 = vpack.c.b16 %v2099, %v2095
  %v2160 = vpack.c.b16 %v2104, %v2100
  %v2161 = vpack.c.b16 %v2105, %v2101
  %v2162 = vpack.c.b16 %v2106, %v2102
  %v2163 = vpack.c.b16 %v2107, %v2103
  %v2164 = vpack.c.b16 %v2112, %v2108
  %v2165 = vpack.c.b16 %v2113, %v2109
  %v2166 = vpack.c.b16 %v2114, %v2110
  %v2167 = vpack.c.b16 %v2115, %v2111
  %v2168 = vpack.c.b16 %v2120, %v2116
  %v2169 = vpack.c.b16 %v2121, %v2117
  %v2170 = vpack.c.b16 %v2122, %v2118
  %v2171 = vpack.c.b16 %v2123, %v2119
  %v2172 = vpack.c.b16 %v2128, %v2124
  %v2173 = vpack.c.b16 %v2129, %v2125
  %v2174 = vpack.c.b16 %v2130, %v2126
  %v2175 = vpack.c.b16 %v2131, %v2127
  %v2176 = vpack.c.b16 %v2136, %v2132
  %v2177 = vpack.c.b16 %v2137, %v2133
  %v2178 = vpack.c.b16 %v2138, %v2134
  %v2179 = vpack.c.b16 %v2139, %v2135
  %v2180 = vpack.c.b16 %v2144, %v2140
  %v2181 = vpack.c.b16 %v2145, %v2141
  %v2182 = vpack.c.b16 %v2146, %v2142
  %v2183 = vpack.c.b16 %v2147, %v2143
  %v2184 = vpack.c.b16 %v2152, %v2148
  %v2185 = vpack.c.b16 %v2153, %v2149
  %v2186 = vpack.c.b16 %v2154, %v2150
  %v2187 = vpack.c.b16 %v2155, %v2151
  %2220 = vmatprep.subr.bf16.mxu0 %v2157
  %2221 = vmatpush1.bf16.msra.mxu0 %v2156
  %2222 = vmatprep.subr.bf16.mxu0 %v2161
  %2223 = vmatpush1.bf16.msra.mxu0 %v2160
  %2224 = vmatprep.subr.bf16.mxu0 %v2165
  %2225 = vmatpush1.bf16.msra.mxu0 %v2164
  %2226 = vmatprep.subr.bf16.mxu0 %v2169
  %2227 = vmatpush1.bf16.msra.mxu0 %v2168
  %2228 = vmatprep.subr.bf16.mxu0 %v2173
  %2229 = vmatpush1.bf16.msra.mxu0 %v2172
  %2230 = vmatprep.subr.bf16.mxu0 %v2177
  %2231 = vmatpush1.bf16.msra.mxu0 %v2176
  %2232 = vmatprep.subr.bf16.mxu0 %v2181
  %2233 = vmatpush1.bf16.msra.mxu0 %v2180
  %2234 = vmatprep.subr.bf16.mxu0 %v2185
  %2235 = vmatpush1.bf16.msra.mxu0 %v2184
  %2236 = vmatprep.subr.bf16.mxu0 0
  %2237 = vmatpush1.bf16.msra.mxu0 0
  %2238 = vmatprep.subr.bf16.mxu0 0
  %2239 = vmatpush1.bf16.msra.mxu0 0
  %2240 = vmatprep.subr.bf16.mxu0 0
  %2241 = vmatpush1.bf16.msra.mxu0 0
  %2242 = vmatprep.subr.bf16.mxu0 0
  %2243 = vmatpush1.bf16.msra.mxu0 0
  %2244 = vmatprep.subr.bf16.mxu0 0
  %2245 = vmatpush1.bf16.msra.mxu0 0
  %2246 = vmatprep.subr.bf16.mxu0 0
  %2247 = vmatpush1.bf16.msra.mxu0 0
  %2248 = vmatprep.subr.bf16.mxu0 0
  %2249 = vmatpush1.bf16.msra.mxu0 0
  %2250 = vmatprep.subr.bf16.mxu0 0
  %2251 = vmatpush1.bf16.msra.mxu0 0
  %2252 = vmatprep.mubr.bf16.mxu0 0
  %2253 = vmatmul.mubr.bf16.gmra.mrb[0].mxu0 %v2027
  %v2254 = vpop.f32.mrb[0].mxu0
  %v2255 = vadd.f32 0.0, %v2254
  %v2256 = vpop.f32.mrb[0].mxu0
  %v2257 = vadd.f32 0.0, %v2256
  %v2258 = vpop.f32.mrb[0].mxu0
  %v2259 = vpop.f32.mrb[0].mxu0
  %2260 = vdwg.mxu0
  %2261 = vmatprep.subr.bf16.mxu0 %v2159
  %2262 = vmatpush1.bf16.msra.mxu0 %v2158
  %2263 = vmatprep.subr.bf16.mxu0 %v2163
  %2264 = vmatpush1.bf16.msra.mxu0 %v2162
  %2265 = vmatprep.subr.bf16.mxu0 %v2167
  %2266 = vmatpush1.bf16.msra.mxu0 %v2166
  %2267 = vmatprep.subr.bf16.mxu0 %v2171
  %2268 = vmatpush1.bf16.msra.mxu0 %v2170
  %2269 = vmatprep.subr.bf16.mxu0 %v2175
  %2270 = vmatpush1.bf16.msra.mxu0 %v2174
  %2271 = vmatprep.subr.bf16.mxu0 %v2179
  %2272 = vmatpush1.bf16.msra.mxu0 %v2178
  %2273 = vmatprep.subr.bf16.mxu0 %v2183
  %2274 = vmatpush1.bf16.msra.mxu0 %v2182
  %2275 = vmatprep.subr.bf16.mxu0 %v2187
  %2276 = vmatpush1.bf16.msra.mxu0 %v2186
  %2277 = vmatprep.subr.bf16.mxu0 0
  %2278 = vmatpush1.bf16.msra.mxu0 0
  %2279 = vmatprep.subr.bf16.mxu0 0
  %2280 = vmatpush1.bf16.msra.mxu0 0
  %2281 = vmatprep.subr.bf16.mxu0 0
  %2282 = vmatpush1.bf16.msra.mxu0 0
  %2283 = vmatprep.subr.bf16.mxu0 0
  %2284 = vmatpush1.bf16.msra.mxu0 0
  %2285 = vmatprep.subr.bf16.mxu0 0
  %2286 = vmatpush1.bf16.msra.mxu0 0
  %2287 = vmatprep.subr.bf16.mxu0 0
  %2288 = vmatpush1.bf16.msra.mxu0 0
  %2289 = vmatprep.subr.bf16.mxu0 0
  %2290 = vmatpush1.bf16.msra.mxu0 0
  %2291 = vmatprep.subr.bf16.mxu0 0
  %2292 = vmatpush1.bf16.msra.mxu0 0
  %2293 = vmatprep.mubr.bf16.mxu0 0
  %2294 = vmatmul.mubr.bf16.gmra.mrb[0].mxu0 %v2027
  %v2295 = vpop.f32.mrb[0].mxu0
  %v2296 = vadd.f32 0.0, %v2295
  %v2297 = vpop.f32.mrb[0].mxu0
  %v2298 = vadd.f32 0.0, %v2297
  %v2299 = vpop.f32.mrb[0].mxu0
  %v2300 = vpop.f32.mrb[0].mxu0
  %2301 = vdwg.mxu0
  %v2302 = vadd.f32 %v2023, %v2255
  %v2303 = vadd.f32 %v2024, %v2257
  %v2304 = vadd.f32 %v2025, %v2296
  %v2305 = vadd.f32 %v2026, %v2298
  %v2306 = vxor.u32 %v2302, 2147483648
  %v2307 = vmul.f32 %v2306, 1.442695
  %v2308 = vpow.pop %v2307
  %v2309 = vadd.f32 %v2308, 1.0
  %v2310 = vrcp.pop %v2309
  %v2311 = vmul.f32 1.0, %v2310
  %v2312 = vxor.u32 %v2303, 2147483648
  %v2313 = vmul.f32 %v2312, 1.442695
  %v2314 = vpow.pop %v2313
  %v2315 = vadd.f32 %v2314, 1.0
  %v2316 = vrcp.pop %v2315
  %v2317 = vmul.f32 1.0, %v2316
  %v2318 = vtanh.pop %v2304
  %v2319 = vxor.u32 %v2305, 2147483648
  %v2320 = vmul.f32 %v2319, 1.442695
  %v2321 = vpow.pop %v2320
  %v2322 = vadd.f32 %v2321, 1.0
  %v2323 = vrcp.pop %v2322
  %v2324 = vmul.f32 1.0, %v2323
  %v2325 = vmul.f32 %v2317, %v2015
  %v2326 = vmul.f32 %v2311, %v2318
  %v2327 = vadd.f32 %v2325, %v2326
  %v2328 = vtanh.pop %v2327
  %v2329 = vmul.f32 %v2324, %v2328
  %s2330 = scalar_lea.vmem [#allocation3], 40
  %2331 = vst [vmem:[%s2330] sm:$0xff] %v2329
  %s2332 = smul.u32 6, 4
  %s2333 = smul.addr %s2332, 8
  %s2334 = scalar_lea.vmem [#allocation2], %s2333
  %v2335 = vld [vmem:[%s2334] sm:$0xff]
  %v2336 = vld [vmem:[%s2334 + $0x8] sm:$0xff]
  %v2337 = vld [vmem:[%s2334 + $0x10] sm:$0xff]
  %v2338 = vld [vmem:[%s2334 + $0x18] sm:$0xff]
  %v2339 = vpack.c.bf16 %v2329, %v2329
  %v2340 = vld [vmem:[%s2] sm:$0xff]
  %v2341 = vld [vmem:[%s2 + $0x8] sm:$0xff]
  %v2342 = vld [vmem:[%s2 + $0x10] sm:$0xff]
  %v2343 = vld [vmem:[%s2 + $0x18] sm:$0xff]
  %v2344 = vld [vmem:[%s2 + $0x20] sm:$0xff]
  %v2345 = vld [vmem:[%s2 + $0x28] sm:$0xff]
  %v2346 = vld [vmem:[%s2 + $0x30] sm:$0xff]
  %v2347 = vld [vmem:[%s2 + $0x38] sm:$0xff]
  %v2348 = vld [vmem:[%s2 + $0x40] sm:$0xff]
  %v2349 = vld [vmem:[%s2 + $0x48] sm:$0xff]
  %v2350 = vld [vmem:[%s2 + $0x50] sm:$0xff]
  %v2351 = vld [vmem:[%s2 + $0x58] sm:$0xff]
  %v2352 = vld [vmem:[%s2 + $0x60] sm:$0xff]
  %v2353 = vld [vmem:[%s2 + $0x68] sm:$0xff]
  %v2354 = vld [vmem:[%s2 + $0x70] sm:$0xff]
  %v2355 = vld [vmem:[%s2 + $0x78] sm:$0xff]
  %v2356 = vld [vmem:[%s2 + $0x80] sm:$0xff]
  %v2357 = vld [vmem:[%s2 + $0x88] sm:$0xff]
  %v2358 = vld [vmem:[%s2 + $0x90] sm:$0xff]
  %v2359 = vld [vmem:[%s2 + $0x98] sm:$0xff]
  %v2360 = vld [vmem:[%s2 + $0xa0] sm:$0xff]
  %v2361 = vld [vmem:[%s2 + $0xa8] sm:$0xff]
  %v2362 = vld [vmem:[%s2 + $0xb0] sm:$0xff]
  %v2363 = vld [vmem:[%s2 + $0xb8] sm:$0xff]
  %v2364 = vld [vmem:[%s2 + $0xc0] sm:$0xff]
  %v2365 = vld [vmem:[%s2 + $0xc8] sm:$0xff]
  %v2366 = vld [vmem:[%s2 + $0xd0] sm:$0xff]
  %v2367 = vld [vmem:[%s2 + $0xd8] sm:$0xff]
  %v2368 = vld [vmem:[%s2 + $0xe0] sm:$0xff]
  %v2369 = vld [vmem:[%s2 + $0xe8] sm:$0xff]
  %v2370 = vld [vmem:[%s2 + $0xf0] sm:$0xff]
  %v2371 = vld [vmem:[%s2 + $0xf8] sm:$0xff]
  %v2404 = vunpack.c.l.b16 %v2340
  %v2405 = vunpack.c.h.b16 %v2340
  %v2406 = vunpack.c.l.b16 %v2341
  %v2407 = vunpack.c.h.b16 %v2341
  %v2408 = vunpack.c.l.b16 %v2342
  %v2409 = vunpack.c.h.b16 %v2342
  %v2410 = vunpack.c.l.b16 %v2343
  %v2411 = vunpack.c.h.b16 %v2343
  %v2412 = vunpack.c.l.b16 %v2344
  %v2413 = vunpack.c.h.b16 %v2344
  %v2414 = vunpack.c.l.b16 %v2345
  %v2415 = vunpack.c.h.b16 %v2345
  %v2416 = vunpack.c.l.b16 %v2346
  %v2417 = vunpack.c.h.b16 %v2346
  %v2418 = vunpack.c.l.b16 %v2347
  %v2419 = vunpack.c.h.b16 %v2347
  %v2420 = vunpack.c.l.b16 %v2348
  %v2421 = vunpack.c.h.b16 %v2348
  %v2422 = vunpack.c.l.b16 %v2349
  %v2423 = vunpack.c.h.b16 %v2349
  %v2424 = vunpack.c.l.b16 %v2350
  %v2425 = vunpack.c.h.b16 %v2350
  %v2426 = vunpack.c.l.b16 %v2351
  %v2427 = vunpack.c.h.b16 %v2351
  %v2428 = vunpack.c.l.b16 %v2352
  %v2429 = vunpack.c.h.b16 %v2352
  %v2430 = vunpack.c.l.b16 %v2353
  %v2431 = vunpack.c.h.b16 %v2353
  %v2432 = vunpack.c.l.b16 %v2354
  %v2433 = vunpack.c.h.b16 %v2354
  %v2434 = vunpack.c.l.b16 %v2355
  %v2435 = vunpack.c.h.b16 %v2355
  %v2436 = vunpack.c.l.b16 %v2356
  %v2437 = vunpack.c.h.b16 %v2356
  %v2438 = vunpack.c.l.b16 %v2357
  %v2439 = vunpack.c.h.b16 %v2357
  %v2440 = vunpack.c.l.b16 %v2358
  %v2441 = vunpack.c.h.b16 %v2358
  %v2442 = vunpack.c.l.b16 %v2359
  %v2443 = vunpack.c.h.b16 %v2359
  %v2444 = vunpack.c.l.b16 %v2360
  %v2445 = vunpack.c.h.b16 %v2360
  %v2446 = vunpack.c.l.b16 %v2361
  %v2447 = vunpack.c.h.b16 %v2361
  %v2448 = vunpack.c.l.b16 %v2362
  %v2449 = vunpack.c.h.b16 %v2362
  %v2450 = vunpack.c.l.b16 %v2363
  %v2451 = vunpack.c.h.b16 %v2363
  %v2452 = vunpack.c.l.b16 %v2364
  %v2453 = vunpack.c.h.b16 %v2364
  %v2454 = vunpack.c.l.b16 %v2365
  %v2455 = vunpack.c.h.b16 %v2365
  %v2456 = vunpack.c.l.b16 %v2366
  %v2457 = vunpack.c.h.b16 %v2366
  %v2458 = vunpack.c.l.b16 %v2367
  %v2459 = vunpack.c.h.b16 %v2367
  %v2460 = vunpack.c.l.b16 %v2368
  %v2461 = vunpack.c.h.b16 %v2368
  %v2462 = vunpack.c.l.b16 %v2369
  %v2463 = vunpack.c.h.b16 %v2369
  %v2464 = vunpack.c.l.b16 %v2370
  %v2465 = vunpack.c.h.b16 %v2370
  %v2466 = vunpack.c.l.b16 %v2371
  %v2467 = vunpack.c.h.b16 %v2371
  %v2468 = vpack.c.b16 %v2408, %v2404
  %v2469 = vpack.c.b16 %v2409, %v2405
  %v2470 = vpack.c.b16 %v2410, %v2406
  %v2471 = vpack.c.b16 %v2411, %v2407
  %v2472 = vpack.c.b16 %v2416, %v2412
  %v2473 = vpack.c.b16 %v2417, %v2413
  %v2474 = vpack.c.b16 %v2418, %v2414
  %v2475 = vpack.c.b16 %v2419, %v2415
  %v2476 = vpack.c.b16 %v2424, %v2420
  %v2477 = vpack.c.b16 %v2425, %v2421
  %v2478 = vpack.c.b16 %v2426, %v2422
  %v2479 = vpack.c.b16 %v2427, %v2423
  %v2480 = vpack.c.b16 %v2432, %v2428
  %v2481 = vpack.c.b16 %v2433, %v2429
  %v2482 = vpack.c.b16 %v2434, %v2430
  %v2483 = vpack.c.b16 %v2435, %v2431
  %v2484 = vpack.c.b16 %v2440, %v2436
  %v2485 = vpack.c.b16 %v2441, %v2437
  %v2486 = vpack.c.b16 %v2442, %v2438
  %v2487 = vpack.c.b16 %v2443, %v2439
  %v2488 = vpack.c.b16 %v2448, %v2444
  %v2489 = vpack.c.b16 %v2449, %v2445
  %v2490 = vpack.c.b16 %v2450, %v2446
  %v2491 = vpack.c.b16 %v2451, %v2447
  %v2492 = vpack.c.b16 %v2456, %v2452
  %v2493 = vpack.c.b16 %v2457, %v2453
  %v2494 = vpack.c.b16 %v2458, %v2454
  %v2495 = vpack.c.b16 %v2459, %v2455
  %v2496 = vpack.c.b16 %v2464, %v2460
  %v2497 = vpack.c.b16 %v2465, %v2461
  %v2498 = vpack.c.b16 %v2466, %v2462
  %v2499 = vpack.c.b16 %v2467, %v2463
  %2532 = vmatprep.subr.bf16.mxu0 %v2469
  %2533 = vmatpush1.bf16.msra.mxu0 %v2468
  %2534 = vmatprep.subr.bf16.mxu0 %v2473
  %2535 = vmatpush1.bf16.msra.mxu0 %v2472
  %2536 = vmatprep.subr.bf16.mxu0 %v2477
  %2537 = vmatpush1.bf16.msra.mxu0 %v2476
  %2538 = vmatprep.subr.bf16.mxu0 %v2481
  %2539 = vmatpush1.bf16.msra.mxu0 %v2480
  %2540 = vmatprep.subr.bf16.mxu0 %v2485
  %2541 = vmatpush1.bf16.msra.mxu0 %v2484
  %2542 = vmatprep.subr.bf16.mxu0 %v2489
  %2543 = vmatpush1.bf16.msra.mxu0 %v2488
  %2544 = vmatprep.subr.bf16.mxu0 %v2493
  %2545 = vmatpush1.bf16.msra.mxu0 %v2492
  %2546 = vmatprep.subr.bf16.mxu0 %v2497
  %2547 = vmatpush1.bf16.msra.mxu0 %v2496
  %2548 = vmatprep.subr.bf16.mxu0 0
  %2549 = vmatpush1.bf16.msra.mxu0 0
  %2550 = vmatprep.subr.bf16.mxu0 0
  %2551 = vmatpush1.bf16.msra.mxu0 0
  %2552 = vmatprep.subr.bf16.mxu0 0
  %2553 = vmatpush1.bf16.msra.mxu0 0
  %2554 = vmatprep.subr.bf16.mxu0 0
  %2555 = vmatpush1.bf16.msra.mxu0 0
  %2556 = vmatprep.subr.bf16.mxu0 0
  %2557 = vmatpush1.bf16.msra.mxu0 0
  %2558 = vmatprep.subr.bf16.mxu0 0
  %2559 = vmatpush1.bf16.msra.mxu0 0
  %2560 = vmatprep.subr.bf16.mxu0 0
  %2561 = vmatpush1.bf16.msra.mxu0 0
  %2562 = vmatprep.subr.bf16.mxu0 0
  %2563 = vmatpush1.bf16.msra.mxu0 0
  %2564 = vmatprep.mubr.bf16.mxu0 0
  %2565 = vmatmul.mubr.bf16.gmra.mrb[0].mxu0 %v2339
  %v2566 = vpop.f32.mrb[0].mxu0
  %v2567 = vadd.f32 0.0, %v2566
  %v2568 = vpop.f32.mrb[0].mxu0
  %v2569 = vadd.f32 0.0, %v2568
  %v2570 = vpop.f32.mrb[0].mxu0
  %v2571 = vpop.f32.mrb[0].mxu0
  %2572 = vdwg.mxu0
  %2573 = vmatprep.subr.bf16.mxu0 %v2471
  %2574 = vmatpush1.bf16.msra.mxu0 %v2470
  %2575 = vmatprep.subr.bf16.mxu0 %v2475
  %2576 = vmatpush1.bf16.msra.mxu0 %v2474
  %2577 = vmatprep.subr.bf16.mxu0 %v2479
  %2578 = vmatpush1.bf16.msra.mxu0 %v2478
  %2579 = vmatprep.subr.bf16.mxu0 %v2483
  %2580 = vmatpush1.bf16.msra.mxu0 %v2482
  %2581 = vmatprep.subr.bf16.mxu0 %v2487
  %2582 = vmatpush1.bf16.msra.mxu0 %v2486
  %2583 = vmatprep.subr.bf16.mxu0 %v2491
  %2584 = vmatpush1.bf16.msra.mxu0 %v2490
  %2585 = vmatprep.subr.bf16.mxu0 %v2495
  %2586 = vmatpush1.bf16.msra.mxu0 %v2494
  %2587 = vmatprep.subr.bf16.mxu0 %v2499
  %2588 = vmatpush1.bf16.msra.mxu0 %v2498
  %2589 = vmatprep.subr.bf16.mxu0 0
  %2590 = vmatpush1.bf16.msra.mxu0 0
  %2591 = vmatprep.subr.bf16.mxu0 0
  %2592 = vmatpush1.bf16.msra.mxu0 0
  %2593 = vmatprep.subr.bf16.mxu0 0
  %2594 = vmatpush1.bf16.msra.mxu0 0
  %2595 = vmatprep.subr.bf16.mxu0 0
  %2596 = vmatpush1.bf16.msra.mxu0 0
  %2597 = vmatprep.subr.bf16.mxu0 0
  %2598 = vmatpush1.bf16.msra.mxu0 0
  %2599 = vmatprep.subr.bf16.mxu0 0
  %2600 = vmatpush1.bf16.msra.mxu0 0
  %2601 = vmatprep.subr.bf16.mxu0 0
  %2602 = vmatpush1.bf16.msra.mxu0 0
  %2603 = vmatprep.subr.bf16.mxu0 0
  %2604 = vmatpush1.bf16.msra.mxu0 0
  %2605 = vmatprep.mubr.bf16.mxu0 0
  %2606 = vmatmul.mubr.bf16.gmra.mrb[0].mxu0 %v2339
  %v2607 = vpop.f32.mrb[0].mxu0
  %v2608 = vadd.f32 0.0, %v2607
  %v2609 = vpop.f32.mrb[0].mxu0
  %v2610 = vadd.f32 0.0, %v2609
  %v2611 = vpop.f32.mrb[0].mxu0
  %v2612 = vpop.f32.mrb[0].mxu0
  %2613 = vdwg.mxu0
  %v2614 = vadd.f32 %v2335, %v2567
  %v2615 = vadd.f32 %v2336, %v2569
  %v2616 = vadd.f32 %v2337, %v2608
  %v2617 = vadd.f32 %v2338, %v2610
  %v2618 = vxor.u32 %v2614, 2147483648
  %v2619 = vmul.f32 %v2618, 1.442695
  %v2620 = vpow.pop %v2619
  %v2621 = vadd.f32 %v2620, 1.0
  %v2622 = vrcp.pop %v2621
  %v2623 = vmul.f32 1.0, %v2622
  %v2624 = vxor.u32 %v2615, 2147483648
  %v2625 = vmul.f32 %v2624, 1.442695
  %v2626 = vpow.pop %v2625
  %v2627 = vadd.f32 %v2626, 1.0
  %v2628 = vrcp.pop %v2627
  %v2629 = vmul.f32 1.0, %v2628
  %v2630 = vtanh.pop %v2616
  %v2631 = vxor.u32 %v2617, 2147483648
  %v2632 = vmul.f32 %v2631, 1.442695
  %v2633 = vpow.pop %v2632
  %v2634 = vadd.f32 %v2633, 1.0
  %v2635 = vrcp.pop %v2634
  %v2636 = vmul.f32 1.0, %v2635
  %v2637 = vmul.f32 %v2629, %v2327
  %v2638 = vmul.f32 %v2623, %v2630
  %v2639 = vadd.f32 %v2637, %v2638
  %v2640 = vtanh.pop %v2639
  %v2641 = vmul.f32 %v2636, %v2640
  %s2642 = scalar_lea.vmem [#allocation3], 48
  %2643 = vst [vmem:[%s2642] sm:$0xff] %v2641
  %s2644 = smul.u32 7, 4
  %s2645 = smul.addr %s2644, 8
  %s2646 = scalar_lea.vmem [#allocation2], %s2645
  %v2647 = vld [vmem:[%s2646] sm:$0xff]
  %v2648 = vld [vmem:[%s2646 + $0x8] sm:$0xff]
  %v2649 = vld [vmem:[%s2646 + $0x10] sm:$0xff]
  %v2650 = vld [vmem:[%s2646 + $0x18] sm:$0xff]
  %v2651 = vpack.c.bf16 %v2641, %v2641
  %v2652 = vld [vmem:[%s2] sm:$0xff]
  %v2653 = vld [vmem:[%s2 + $0x8] sm:$0xff]
  %v2654 = vld [vmem:[%s2 + $0x10] sm:$0xff]
  %v2655 = vld [vmem:[%s2 + $0x18] sm:$0xff]
  %v2656 = vld [vmem:[%s2 + $0x20] sm:$0xff]
  %v2657 = vld [vmem:[%s2 + $0x28] sm:$0xff]
  %v2658 = vld [vmem:[%s2 + $0x30] sm:$0xff]
  %v2659 = vld [vmem:[%s2 + $0x38] sm:$0xff]
  %v2660 = vld [vmem:[%s2 + $0x40] sm:$0xff]
  %v2661 = vld [vmem:[%s2 + $0x48] sm:$0xff]
  %v2662 = vld [vmem:[%s2 + $0x50] sm:$0xff]
  %v2663 = vld [vmem:[%s2 + $0x58] sm:$0xff]
  %v2664 = vld [vmem:[%s2 + $0x60] sm:$0xff]
  %v2665 = vld [vmem:[%s2 + $0x68] sm:$0xff]
  %v2666 = vld [vmem:[%s2 + $0x70] sm:$0xff]
  %v2667 = vld [vmem:[%s2 + $0x78] sm:$0xff]
  %v2668 = vld [vmem:[%s2 + $0x80] sm:$0xff]
  %v2669 = vld [vmem:[%s2 + $0x88] sm:$0xff]
  %v2670 = vld [vmem:[%s2 + $0x90] sm:$0xff]
  %v2671 = vld [vmem:[%s2 + $0x98] sm:$0xff]
  %v2672 = vld [vmem:[%s2 + $0xa0] sm:$0xff]
  %v2673 = vld [vmem:[%s2 + $0xa8] sm:$0xff]
  %v2674 = vld [vmem:[%s2 + $0xb0] sm:$0xff]
  %v2675 = vld [vmem:[%s2 + $0xb8] sm:$0xff]
  %v2676 = vld [vmem:[%s2 + $0xc0] sm:$0xff]
  %v2677 = vld [vmem:[%s2 + $0xc8] sm:$0xff]
  %v2678 = vld [vmem:[%s2 + $0xd0] sm:$0xff]
  %v2679 = vld [vmem:[%s2 + $0xd8] sm:$0xff]
  %v2680 = vld [vmem:[%s2 + $0xe0] sm:$0xff]
  %v2681 = vld [vmem:[%s2 + $0xe8] sm:$0xff]
  %v2682 = vld [vmem:[%s2 + $0xf0] sm:$0xff]
  %v2683 = vld [vmem:[%s2 + $0xf8] sm:$0xff]
  %v2716 = vunpack.c.l.b16 %v2652
  %v2717 = vunpack.c.h.b16 %v2652
  %v2718 = vunpack.c.l.b16 %v2653
  %v2719 = vunpack.c.h.b16 %v2653
  %v2720 = vunpack.c.l.b16 %v2654
  %v2721 = vunpack.c.h.b16 %v2654
  %v2722 = vunpack.c.l.b16 %v2655
  %v2723 = vunpack.c.h.b16 %v2655
  %v2724 = vunpack.c.l.b16 %v2656
  %v2725 = vunpack.c.h.b16 %v2656
  %v2726 = vunpack.c.l.b16 %v2657
  %v2727 = vunpack.c.h.b16 %v2657
  %v2728 = vunpack.c.l.b16 %v2658
  %v2729 = vunpack.c.h.b16 %v2658
  %v2730 = vunpack.c.l.b16 %v2659
  %v2731 = vunpack.c.h.b16 %v2659
  %v2732 = vunpack.c.l.b16 %v2660
  %v2733 = vunpack.c.h.b16 %v2660
  %v2734 = vunpack.c.l.b16 %v2661
  %v2735 = vunpack.c.h.b16 %v2661
  %v2736 = vunpack.c.l.b16 %v2662
  %v2737 = vunpack.c.h.b16 %v2662
  %v2738 = vunpack.c.l.b16 %v2663
  %v2739 = vunpack.c.h.b16 %v2663
  %v2740 = vunpack.c.l.b16 %v2664
  %v2741 = vunpack.c.h.b16 %v2664
  %v2742 = vunpack.c.l.b16 %v2665
  %v2743 = vunpack.c.h.b16 %v2665
  %v2744 = vunpack.c.l.b16 %v2666
  %v2745 = vunpack.c.h.b16 %v2666
  %v2746 = vunpack.c.l.b16 %v2667
  %v2747 = vunpack.c.h.b16 %v2667
  %v2748 = vunpack.c.l.b16 %v2668
  %v2749 = vunpack.c.h.b16 %v2668
  %v2750 = vunpack.c.l.b16 %v2669
  %v2751 = vunpack.c.h.b16 %v2669
  %v2752 = vunpack.c.l.b16 %v2670
  %v2753 = vunpack.c.h.b16 %v2670
  %v2754 = vunpack.c.l.b16 %v2671
  %v2755 = vunpack.c.h.b16 %v2671
  %v2756 = vunpack.c.l.b16 %v2672
  %v2757 = vunpack.c.h.b16 %v2672
  %v2758 = vunpack.c.l.b16 %v2673
  %v2759 = vunpack.c.h.b16 %v2673
  %v2760 = vunpack.c.l.b16 %v2674
  %v2761 = vunpack.c.h.b16 %v2674
  %v2762 = vunpack.c.l.b16 %v2675
  %v2763 = vunpack.c.h.b16 %v2675
  %v2764 = vunpack.c.l.b16 %v2676
  %v2765 = vunpack.c.h.b16 %v2676
  %v2766 = vunpack.c.l.b16 %v2677
  %v2767 = vunpack.c.h.b16 %v2677
  %v2768 = vunpack.c.l.b16 %v2678
  %v2769 = vunpack.c.h.b16 %v2678
  %v2770 = vunpack.c.l.b16 %v2679
  %v2771 = vunpack.c.h.b16 %v2679
  %v2772 = vunpack.c.l.b16 %v2680
  %v2773 = vunpack.c.h.b16 %v2680
  %v2774 = vunpack.c.l.b16 %v2681
  %v2775 = vunpack.c.h.b16 %v2681
  %v2776 = vunpack.c.l.b16 %v2682
  %v2777 = vunpack.c.h.b16 %v2682
  %v2778 = vunpack.c.l.b16 %v2683
  %v2779 = vunpack.c.h.b16 %v2683
  %v2780 = vpack.c.b16 %v2720, %v2716
  %v2781 = vpack.c.b16 %v2721, %v2717
  %v2782 = vpack.c.b16 %v2722, %v2718
  %v2783 = vpack.c.b16 %v2723, %v2719
  %v2784 = vpack.c.b16 %v2728, %v2724
  %v2785 = vpack.c.b16 %v2729, %v2725
  %v2786 = vpack.c.b16 %v2730, %v2726
  %v2787 = vpack.c.b16 %v2731, %v2727
  %v2788 = vpack.c.b16 %v2736, %v2732
  %v2789 = vpack.c.b16 %v2737, %v2733
  %v2790 = vpack.c.b16 %v2738, %v2734
  %v2791 = vpack.c.b16 %v2739, %v2735
  %v2792 = vpack.c.b16 %v2744, %v2740
  %v2793 = vpack.c.b16 %v2745, %v2741
  %v2794 = vpack.c.b16 %v2746, %v2742
  %v2795 = vpack.c.b16 %v2747, %v2743
  %v2796 = vpack.c.b16 %v2752, %v2748
  %v2797 = vpack.c.b16 %v2753, %v2749
  %v2798 = vpack.c.b16 %v2754, %v2750
  %v2799 = vpack.c.b16 %v2755, %v2751
  %v2800 = vpack.c.b16 %v2760, %v2756
  %v2801 = vpack.c.b16 %v2761, %v2757
  %v2802 = vpack.c.b16 %v2762, %v2758
  %v2803 = vpack.c.b16 %v2763, %v2759
  %v2804 = vpack.c.b16 %v2768, %v2764
  %v2805 = vpack.c.b16 %v2769, %v2765
  %v2806 = vpack.c.b16 %v2770, %v2766
  %v2807 = vpack.c.b16 %v2771, %v2767
  %v2808 = vpack.c.b16 %v2776, %v2772
  %v2809 = vpack.c.b16 %v2777, %v2773
  %v2810 = vpack.c.b16 %v2778, %v2774
  %v2811 = vpack.c.b16 %v2779, %v2775
  %2844 = vmatprep.subr.bf16.mxu0 %v2781
  %2845 = vmatpush1.bf16.msra.mxu0 %v2780
  %2846 = vmatprep.subr.bf16.mxu0 %v2785
  %2847 = vmatpush1.bf16.msra.mxu0 %v2784
  %2848 = vmatprep.subr.bf16.mxu0 %v2789
  %2849 = vmatpush1.bf16.msra.mxu0 %v2788
  %2850 = vmatprep.subr.bf16.mxu0 %v2793
  %2851 = vmatpush1.bf16.msra.mxu0 %v2792
  %2852 = vmatprep.subr.bf16.mxu0 %v2797
  %2853 = vmatpush1.bf16.msra.mxu0 %v2796
  %2854 = vmatprep.subr.bf16.mxu0 %v2801
  %2855 = vmatpush1.bf16.msra.mxu0 %v2800
  %2856 = vmatprep.subr.bf16.mxu0 %v2805
  %2857 = vmatpush1.bf16.msra.mxu0 %v2804
  %2858 = vmatprep.subr.bf16.mxu0 %v2809
  %2859 = vmatpush1.bf16.msra.mxu0 %v2808
  %2860 = vmatprep.subr.bf16.mxu0 0
  %2861 = vmatpush1.bf16.msra.mxu0 0
  %2862 = vmatprep.subr.bf16.mxu0 0
  %2863 = vmatpush1.bf16.msra.mxu0 0
  %2864 = vmatprep.subr.bf16.mxu0 0
  %2865 = vmatpush1.bf16.msra.mxu0 0
  %2866 = vmatprep.subr.bf16.mxu0 0
  %2867 = vmatpush1.bf16.msra.mxu0 0
  %2868 = vmatprep.subr.bf16.mxu0 0
  %2869 = vmatpush1.bf16.msra.mxu0 0
  %2870 = vmatprep.subr.bf16.mxu0 0
  %2871 = vmatpush1.bf16.msra.mxu0 0
  %2872 = vmatprep.subr.bf16.mxu0 0
  %2873 = vmatpush1.bf16.msra.mxu0 0
  %2874 = vmatprep.subr.bf16.mxu0 0
  %2875 = vmatpush1.bf16.msra.mxu0 0
  %2876 = vmatprep.mubr.bf16.mxu0 0
  %2877 = vmatmul.mubr.bf16.gmra.mrb[0].mxu0 %v2651
  %v2878 = vpop.f32.mrb[0].mxu0
  %v2879 = vadd.f32 0.0, %v2878
  %v2880 = vpop.f32.mrb[0].mxu0
  %v2881 = vadd.f32 0.0, %v2880
  %v2882 = vpop.f32.mrb[0].mxu0
  %v2883 = vpop.f32.mrb[0].mxu0
  %2884 = vdwg.mxu0
  %2885 = vmatprep.subr.bf16.mxu0 %v2783
  %2886 = vmatpush1.bf16.msra.mxu0 %v2782
  %2887 = vmatprep.subr.bf16.mxu0 %v2787
  %2888 = vmatpush1.bf16.msra.mxu0 %v2786
  %2889 = vmatprep.subr.bf16.mxu0 %v2791
  %2890 = vmatpush1.bf16.msra.mxu0 %v2790
  %2891 = vmatprep.subr.bf16.mxu0 %v2795
  %2892 = vmatpush1.bf16.msra.mxu0 %v2794
  %2893 = vmatprep.subr.bf16.mxu0 %v2799
  %2894 = vmatpush1.bf16.msra.mxu0 %v2798
  %2895 = vmatprep.subr.bf16.mxu0 %v2803
  %2896 = vmatpush1.bf16.msra.mxu0 %v2802
  %2897 = vmatprep.subr.bf16.mxu0 %v2807
  %2898 = vmatpush1.bf16.msra.mxu0 %v2806
  %2899 = vmatprep.subr.bf16.mxu0 %v2811
  %2900 = vmatpush1.bf16.msra.mxu0 %v2810
  %2901 = vmatprep.subr.bf16.mxu0 0
  %2902 = vmatpush1.bf16.msra.mxu0 0
  %2903 = vmatprep.subr.bf16.mxu0 0
  %2904 = vmatpush1.bf16.msra.mxu0 0
  %2905 = vmatprep.subr.bf16.mxu0 0
  %2906 = vmatpush1.bf16.msra.mxu0 0
  %2907 = vmatprep.subr.bf16.mxu0 0
  %2908 = vmatpush1.bf16.msra.mxu0 0
  %2909 = vmatprep.subr.bf16.mxu0 0
  %2910 = vmatpush1.bf16.msra.mxu0 0
  %2911 = vmatprep.subr.bf16.mxu0 0
  %2912 = vmatpush1.bf16.msra.mxu0 0
  %2913 = vmatprep.subr.bf16.mxu0 0
  %2914 = vmatpush1.bf16.msra.mxu0 0
  %2915 = vmatprep.subr.bf16.mxu0 0
  %2916 = vmatpush1.bf16.msra.mxu0 0
  %2917 = vmatprep.mubr.bf16.mxu0 0
  %2918 = vmatmul.mubr.bf16.gmra.mrb[0].mxu0 %v2651
  %v2919 = vpop.f32.mrb[0].mxu0
  %v2920 = vadd.f32 0.0, %v2919
  %v2921 = vpop.f32.mrb[0].mxu0
  %v2922 = vadd.f32 0.0, %v2921
  %v2923 = vpop.f32.mrb[0].mxu0
  %v2924 = vpop.f32.mrb[0].mxu0
  %2925 = vdwg.mxu0
  %v2926 = vadd.f32 %v2647, %v2879
  %v2927 = vadd.f32 %v2648, %v2881
  %v2928 = vadd.f32 %v2649, %v2920
  %v2929 = vadd.f32 %v2650, %v2922
  %v2930 = vxor.u32 %v2926, 2147483648
  %v2931 = vmul.f32 %v2930, 1.442695
  %v2932 = vpow.pop %v2931
  %v2933 = vadd.f32 %v2932, 1.0
  %v2934 = vrcp.pop %v2933
  %v2935 = vmul.f32 1.0, %v2934
  %v2936 = vxor.u32 %v2927, 2147483648
  %v2937 = vmul.f32 %v2936, 1.442695
  %v2938 = vpow.pop %v2937
  %v2939 = vadd.f32 %v2938, 1.0
  %v2940 = vrcp.pop %v2939
  %v2941 = vmul.f32 1.0, %v2940
  %v2942 = vtanh.pop %v2928
  %v2943 = vxor.u32 %v2929, 2147483648
  %v2944 = vmul.f32 %v2943, 1.442695
  %v2945 = vpow.pop %v2944
  %v2946 = vadd.f32 %v2945, 1.0
  %v2947 = vrcp.pop %v2946
  %v2948 = vmul.f32 1.0, %v2947
  %v2949 = vmul.f32 %v2941, %v2639
  %v2950 = vmul.f32 %v2935, %v2942
  %v2951 = vadd.f32 %v2949, %v2950
  %v2952 = vtanh.pop %v2951
  %v2953 = vmul.f32 %v2948, %v2952
  %s2954 = scalar_lea.vmem [#allocation3], 56
  %2955 = vst [vmem:[%s2954] sm:$0xff] %v2953
  %v2956 = vld [vmem:[#allocation3] sm:$0xff]
  %v2957 = vld [vmem:[#allocation3 + $0x8] sm:$0xff]
  %v2958 = vld [vmem:[#allocation3 + $0x10] sm:$0xff]
  %v2959 = vld [vmem:[#allocation3 + $0x18] sm:$0xff]
  %v2960 = vld [vmem:[#allocation3 + $0x20] sm:$0xff]
  %v2961 = vld [vmem:[#allocation3 + $0x28] sm:$0xff]
  %v2962 = vld [vmem:[#allocation3 + $0x30] sm:$0xff]
  %v2963 = vld [vmem:[#allocation3 + $0x38] sm:$0xff]
  %v2964 = vpack.c.bf16 %v2957, %v2956
  %v2965 = vpack.c.bf16 %v2959, %v2958
  %v2966 = vpack.c.bf16 %v2961, %v2960
  %v2967 = vpack.c.bf16 %v2963, %v2962
  %v2972 = vunpack.c.l.b16 %v2964
  %v2973 = vunpack.c.h.b16 %v2964
  %v2974 = vunpack.c.l.b16 %v2965
  %v2975 = vunpack.c.h.b16 %v2965
  %v2976 = vunpack.c.l.b16 %v2966
  %v2977 = vunpack.c.h.b16 %v2966
  %v2978 = vunpack.c.l.b16 %v2967
  %v2979 = vunpack.c.h.b16 %v2967
  %v2980 = vpack.c.b16 %v2972, %v2972
  %v2981 = vpack.c.b16 %v2973, %v2973
  %v2982 = vpack.c.b16 %v2974, %v2974
  %v2983 = vpack.c.b16 %v2975, %v2975
  %v2984 = vpack.c.b16 %v2976, %v2976
  %v2985 = vpack.c.b16 %v2977, %v2977
  %v2986 = vpack.c.b16 %v2978, %v2978
  %v2987 = vpack.c.b16 %v2979, %v2979
  %2996 = vst [vmem:[%s6] sm:$0xf] %v2980
  %2997 = vst [vmem:[%s6 + $0x4] sm:$0xf] %v2981
  %2998 = vst [vmem:[%s6 + $0x8] sm:$0xf] %v2982
  %2999 = vst [vmem:[%s6 + $0xc] sm:$0xf] %v2983
  %3000 = vst [vmem:[%s6 + $0x10] sm:$0xf] %v2984
  %3001 = vst [vmem:[%s6 + $0x14] sm:$0xf] %v2985
  %3002 = vst [vmem:[%s6 + $0x18] sm:$0xf] %v2986
  %3003 = vst [vmem:[%s6 + $0x1c] sm:$0xf] %v2987
  %3004 = vst [vmem:[%s7] sm:$0xff] %v2953
  %3005 = vst [vmem:[%s8] sm:$0xff] %v2951
  // Predicated region
  $region30: #{recurrent_network_forward.2} parent=0 // pred_check
    _
  $region31: #{recurrent_network_forward.2} parent=0 // pred_check_branch
    %3007 = sbr.rel (0) target = $region33
  $region32: #{recurrent_network_forward.2} parent=0 // pred_region
    _
  $region33: #{recurrent_network_forward.2} parent=0 // pred_fallthru
    _
  // Predicated region
  $region34: #{recurrent_network_forward.2} parent=0 // pred_check
    _
  $region35: #{recurrent_network_forward.2} parent=0 // pred_check_branch
    %3009 = sbr.rel (0) target = $region37
  $region36: #{recurrent_network_forward.2} parent=0 // pred_region
    _
  $region37: #{recurrent_network_forward.2} parent=0 // pred_fallthru
    _
  // Predicated region
  $region38: #{recurrent_network_forward.2} parent=0 // pred_check
    _
  $region39: #{recurrent_network_forward.2} parent=0 // pred_check_branch
    %3011 = sbr.rel (0) target = $region41
  $region40: #{recurrent_network_forward.2} parent=0 // pred_region
    _
  $region41: #{recurrent_network_forward.2} parent=0 // pred_fallthru
    _
  // Predicated region
  $region42: #{recurrent_network_forward.2} parent=0 // pred_check
    _
  $region43: #{recurrent_network_forward.2} parent=0 // pred_check_branch
    %3013 = sbr.rel (0) target = $region45
  $region44: #{recurrent_network_forward.2} parent=0 // pred_region
    _
  $region45: #{recurrent_network_forward.2} parent=0 // pred_fallthru
    _
  // Predicated region
  $region46: #{recurrent_network_forward.2} parent=0 // pred_check
    _
  $region47: #{recurrent_network_forward.2} parent=0 // pred_check_branch
    %3015 = sbr.rel (0) target = $region49
  $region48: #{recurrent_network_forward.2} parent=0 // pred_region
    _
  $region49: #{recurrent_network_forward.2} parent=0 // pred_fallthru
    _
  // Predicated region
  $region50: #{recurrent_network_forward.2} parent=0 // pred_check
    _
  $region51: #{recurrent_network_forward.2} parent=0 // pred_check_branch
    %3017 = sbr.rel (0) target = $region53
  $region52: #{recurrent_network_forward.2} parent=0 // pred_region
    _
  $region53: #{recurrent_network_forward.2} parent=0 // pred_fallthru
    _

</llo_original>
